<compile_context>
chip_gen: v6e
topology: v6e:2x2x1
jax: 0.10.0
libtpu: 0.0.40
codegen_flags: <defaults>
</compile_context>

<pallas_src>
import functools
import math

import jax
import jax.numpy as jnp
from jax import lax
from jax.experimental import pallas as pl
from jax.experimental.pallas import tpu as pltpu

_VMEM = pltpu.MemorySpace.VMEM
_SMEM = pltpu.MemorySpace.SMEM
_LANE = 128
_LOG_EPS = math.log(1e-8)          # the torch code's "+ 1e-8" inside the log


def _round_up(x, m):
    return (x + m - 1) // m * m


def _stable_softplus(x):
    # softplus(x) == -log(sigmoid(-x)), overflow-free form (no log1p needed).
    return jnp.maximum(x, 0.0) + jnp.log(1.0 + jnp.exp(-jnp.abs(x)))


# ----------------------------------------------------------------------------
# Fused kernel: l-layer propagation + in-kernel gathers + contrastive/BPR loss
# ----------------------------------------------------------------------------
def _fused_kernel(uids_ref, iids_ref,                         # SMEM int32 indices
                  adj_ref, ut_ref, vt_ref, umuls_ref, vmuls_ref,
                  eu0_ref, ei0_ref,                           # VMEM inputs
                  eu_out_ref, ei_out_ref, loss_s_ref, loss_r_ref,   # outputs
                  gu_ref, gi_ref, gu_sel_ref, eu_sel_ref, gi_sel_ref, ei_sel_ref,
                  *, l, temp, batch, mxu_dtype):
    f32 = jnp.float32
    adj = adj_ref[...]                # [n_u, n_i]  mxu_dtype (bf16 by default)
    ut = ut_ref[...]                  # [k, n_u]    f32
    vt = vt_ref[...]                  # [k, n_i]    f32
    u_mul_s = umuls_ref[...]          # [n_u, k]    f32
    v_mul_s = vmuls_ref[...]          # [n_i, k]    f32

    eu_prev = eu0_ref[...]            # [n_u, d_pad] f32
    ei_prev = ei0_ref[...]            # [n_i, d_pad] f32
    eu_sum, ei_sum = eu_prev, ei_prev
    gu_sum, gi_sum = eu_prev, ei_prev

    # l is a small static constant -> unrolled; all intermediates stay on-chip.
    # TODO(synk): sparse_dropout(adj_norm, dropout) is identity here (dropout == 0).
    for _ in range(l):
        eu_lp = eu_prev.astype(mxu_dtype)
        ei_lp = ei_prev.astype(mxu_dtype)
        # z_u = adj @ E_i^(t-1)
        z_u = lax.dot_general(adj, ei_lp, (((1,), (0,)), ((), ())),
                              preferred_element_type=f32)            # [n_u, d]
        # z_i = adj^T @ E_u^(t-1): same adj operand, transposed-lhs contraction,
        # so no adj_norm_t is ever materialized or streamed.
        z_i = lax.dot_general(adj, eu_lp, (((0,), (0,)), ((), ())),
                              preferred_element_type=f32)            # [n_i, d]
        vt_ei = jnp.dot(vt, ei_prev, preferred_element_type=f32)     # [k, d]
        g_u = jnp.dot(u_mul_s, vt_ei, preferred_element_type=f32)    # [n_u, d]
        ut_eu = jnp.dot(ut, eu_prev, preferred_element_type=f32)     # [k, d]
        g_i = jnp.dot(v_mul_s, ut_eu, preferred_element_type=f32)    # [n_i, d]

        eu_sum = eu_sum + z_u
        ei_sum = ei_sum + z_i
        gu_sum = gu_sum + g_u
        gi_sum = gi_sum + g_i
        eu_prev, ei_prev = z_u, z_i

    eu_out_ref[...] = eu_sum          # only E_u / E_i leave the kernel
    ei_out_ref[...] = ei_sum
    gu_ref[...] = gu_sum              # G_u / G_i stay VMEM-resident (scratch)
    gi_ref[...] = gi_sum

    # ---- in-kernel row gathers from SMEM index vectors (no XLA gathers) ----
    def gather_user(b, carry):
        r = uids_ref[b]
        gu_sel_ref[pl.ds(b, 1), :] = gu_ref[pl.ds(r, 1), :]
        eu_sel_ref[pl.ds(b, 1), :] = eu_out_ref[pl.ds(r, 1), :]
        return carry

    def gather_item(b, carry):
        r = iids_ref[b]
        gi_sel_ref[pl.ds(b, 1), :] = gi_ref[pl.ds(r, 1), :]
        ei_sel_ref[pl.ds(b, 1), :] = ei_out_ref[pl.ds(r, 1), :]
        return carry

    lax.fori_loop(0, batch, gather_user, 0, unroll=True)
    lax.fori_loop(0, 2 * batch, gather_item, 0, unroll=True)

    gu_sel = gu_sel_ref[...]          # G_u[uids]  [B,  d_pad]
    eu_sel = eu_sel_ref[...]          # E_u[uids]  [B,  d_pad]
    gi_sel = gi_sel_ref[...]          # G_i[iids]  [2B, d_pad]
    ei_sel = ei_sel_ref[...]          # E_i[iids]  [2B, d_pad]

    inv_temp = 1.0 / temp

    def info_nce(g_sel, e_sel, e_all, n_sel):
        # Fold 1/temp into the small [B, d] operand, not the [B, n] score matrix.
        g_scaled = g_sel * inv_temp
        # scores = g_scaled @ e_all^T (rhs-transposed contraction on the MXU).
        s = lax.dot_general(g_scaled, e_all, (((1,), (1,)), ((), ())),
                            preferred_element_type=jnp.float32)      # [B, n]
        m = jnp.max(s, axis=1, keepdims=True)
        lse = m + jnp.log(jnp.sum(jnp.exp(s - m), axis=1, keepdims=True))
        # exact but stabilized log(exp(s).sum(1) + 1e-8) == logaddexp(lse, log 1e-8)
        neg_row = (jnp.maximum(lse, _LOG_EPS)
                   + jnp.log(1.0 + jnp.exp(-jnp.abs(lse - _LOG_EPS))))
        pos_row = jnp.clip(jnp.sum(g_scaled * e_sel, axis=1, keepdims=True),
                           -5.0, 5.0)
        inv_n = 1.0 / n_sel
        return (jnp.sum(neg_row, axis=0, keepdims=True) * inv_n,
                jnp.sum(pos_row, axis=0, keepdims=True) * inv_n)

    neg_u, pos_u = info_nce(gu_sel, eu_sel, eu_sum, batch)
    neg_i, pos_i = info_nce(gi_sel, ei_sel, ei_sum, 2 * batch)
    loss_s_ref[...] = (neg_u + neg_i) - (pos_u + pos_i)

    # BPR: E_i[pos] / E_i[neg] are the two halves of the gathered E_i[iids].
    pos_s = jnp.sum(eu_sel * ei_sel[:batch], axis=1, keepdims=True)
    neg_s = jnp.sum(eu_sel * ei_sel[batch:], axis=1, keepdims=True)
    bpr_row = _stable_softplus(neg_s - pos_s)   # == -log(sigmoid(pos - neg))
    loss_r_ref[...] = jnp.sum(bpr_row, axis=0, keepdims=True) * (1.0 / batch)


def lightgcl_fused(uids, iids, adj_mxu, ut, vt, u_mul_s, v_mul_s,
                   eu0_pad, ei0_pad, *, l, temp):
    n_u, d_pad = eu0_pad.shape
    n_i = ei0_pad.shape[0]
    batch = uids.shape[0]

    kern = functools.partial(_fused_kernel, l=l, temp=float(temp), batch=batch,
                             mxu_dtype=adj_mxu.dtype)

    scratch_shapes = [
        pltpu.VMEM((n_u, d_pad), jnp.float32),        # G_u
        pltpu.VMEM((n_i, d_pad), jnp.float32),        # G_i
        pltpu.VMEM((batch, d_pad), jnp.float32),      # G_u[uids]
        pltpu.VMEM((batch, d_pad), jnp.float32),      # E_u[uids]
        pltpu.VMEM((2 * batch, d_pad), jnp.float32),  # G_i[iids]
        pltpu.VMEM((2 * batch, d_pad), jnp.float32),  # E_i[iids]
    ]
    out_shape = (
        jax.ShapeDtypeStruct((n_u, d_pad), jnp.float32),   # E_u (padded)
        jax.ShapeDtypeStruct((n_i, d_pad), jnp.float32),   # E_i (padded)
        jax.ShapeDtypeStruct((1, 1), jnp.float32),         # loss_s
        jax.ShapeDtypeStruct((1, 1), jnp.float32),         # loss_r
    )

    # vmem_limit sized from the actual resident working set, with headroom.
    operands = (adj_mxu, ut, vt, u_mul_s, v_mul_s, eu0_pad, ei0_pad)
    ws = sum(int(x.size) * jnp.dtype(x.dtype).itemsize for x in operands)
    ws += sum(math.prod(s.shape) * jnp.dtype(s.dtype).itemsize for s in out_shape)
    ws += (n_u + n_i + 6 * batch) * d_pad * 4            # scratch
    vmem_limit = int(min(2 * ws + (8 << 20), 64 << 20))

    return pl.pallas_call(
        kern,
        out_shape=out_shape,
        in_specs=[pl.BlockSpec(memory_space=_SMEM),      # uids
                  pl.BlockSpec(memory_space=_SMEM)]      # iids = [pos, neg]
                 + [pl.BlockSpec(memory_space=_VMEM)] * 7,
        out_specs=tuple(pl.BlockSpec(memory_space=_VMEM) for _ in range(4)),
        scratch_shapes=scratch_shapes,
        compiler_params=pltpu.CompilerParams(vmem_limit_bytes=vmem_limit),
    )(uids, iids, adj_mxu, ut, vt, u_mul_s, v_mul_s, eu0_pad, ei0_pad)


# ----------------------------------------------------------------------------
# LightGCL forward (training branch, test=False)
# ----------------------------------------------------------------------------
def lightgcl_forward(params, uids, pos, neg,
                     pos_api_emb, neg_api_emb, mashup_emb,
                     *, l, temp, lambda_1, lambda_2, lambda_3):
    d = params["E_u_0"].shape[1]
    iids = jnp.concatenate([pos, neg], axis=0)

    E_u_pad, E_i_pad, loss_s11, loss_r11 = lightgcl_fused(
        uids, iids,
        params["adj_norm_mxu"], params["ut"], params["vt"],
        params["u_mul_s"], params["v_mul_s"],
        params["E_u_0_pad"], params["E_i_0_pad"],
        l=l, temp=temp)

    E_u = E_u_pad[:, :d]                    # drop the exact-zero lane padding
    E_i = E_i_pad[:, :d]
    loss_s = loss_s11[0, 0]
    loss_r = loss_r11[0, 0]

    # L2 regularization over all nn.Parameters (param.norm(2)^2 == sum of squares).
    reg_params = [params["E_u_0"], params["E_i_0"],
                  params["api_w"], params["api_b"],
                  params["mashup_w"], params["mashup_b"]]
    loss_reg = sum(jnp.sum(p * p) for p in reg_params) * lambda_2

    # TODO(synk): the long-tail extra_loss depends on the undefined
    # generate_unique_list / mapping / long_tail host-side Python loop with
    # fresh randomness; it has no clean kernel equivalent, so it stays 0 here.
    extra_loss = jnp.float32(0.0)

    loss = loss_r + lambda_1 * loss_s + loss_reg + lambda_3 * extra_loss

    # process_input is a pass-through in the reference module.
    return (loss, loss_r, lambda_1 * loss_s,
            mashup_emb, pos_api_emb, neg_api_emb, E_u, E_i)


# ----------------------------------------------------------------------------
# Deterministic parameter / input construction
# ----------------------------------------------------------------------------
def xavier_uniform(key, shape):
    bound = math.sqrt(6.0 / (shape[0] + shape[1]))
    return jax.random.uniform(key, shape, jnp.float32, -bound, bound)


if __name__ == "__main__":
    # Small but MXU/lane-friendly shapes (n_u, n_i multiples of 128; d padded to 128).
    n_u, n_i, d, k = 128, 256, 32, 8
    l = 2
    B = 16
    temp, lambda_1, lambda_2, lambda_3 = 0.2, 0.2, 1e-7, 0.0
    input_dim = out_dim = 32
    d_pad = _round_up(d, _LANE)

    key = jax.random.PRNGKey(0)
    keys = jax.random.split(key, 16)

    E_u_0 = xavier_uniform(keys[0], (n_u, d))
    E_i_0 = xavier_uniform(keys[1], (n_i, d))
    adj_norm = jax.random.uniform(keys[2], (n_u, n_i), jnp.float32) / n_i

    params = {
        "E_u_0": E_u_0,
        "E_i_0": E_i_0,
        # Lane-dense (d -> 128) layouts built ONCE at setup; zero columns are exact.
        "E_u_0_pad": jnp.pad(E_u_0, ((0, 0), (0, d_pad - d))),
        "E_i_0_pad": jnp.pad(E_i_0, ((0, 0), (0, d_pad - d))),
        "adj_norm": adj_norm,
        # bf16 adjacency (dominant HBM stream); MXU accumulates in f32.
        "adj_norm_mxu": adj_norm.astype(jnp.bfloat16),
        "u_mul_s": 0.1 * jax.random.normal(keys[3], (n_u, k), jnp.float32),
        "v_mul_s": 0.1 * jax.random.normal(keys[4], (n_i, k), jnp.float32),
        "ut": 0.1 * jax.random.normal(keys[5], (k, n_u), jnp.float32),
        "vt": 0.1 * jax.random.normal(keys[6], (k, n_i), jnp.float32),
        "api_w": 0.1 * jax.random.normal(keys[7], (out_dim, input_dim), jnp.float32),
        "api_b": jnp.zeros((out_dim,), jnp.float32),
        "mashup_w": 0.1 * jax.random.normal(keys[8], (out_dim, input_dim), jnp.float32),
        "mashup_b": jnp.zeros((out_dim,), jnp.float32),
    }

    uids = jax.random.randint(keys[9], (B,), 0, n_u, dtype=jnp.int32)
    pos = jax.random.randint(keys[10], (B,), 0, n_i, dtype=jnp.int32)
    neg = jax.random.randint(keys[11], (B,), 0, n_i, dtype=jnp.int32)
    pos_api_emb = jax.random.normal(keys[12], (B, input_dim), jnp.float32)
    neg_api_emb = jax.random.normal(keys[13], (B, input_dim), jnp.float32)
    mashup_emb = jax.random.normal(keys[14], (B, input_dim), jnp.float32)

    fwd = jax.jit(functools.partial(
        lightgcl_forward, l=l, temp=temp,
        lambda_1=lambda_1, lambda_2=lambda_2, lambda_3=lambda_3))

    outs = fwd(params, uids, pos, neg, pos_api_emb, neg_api_emb, mashup_emb)
    outs = jax.block_until_ready(outs)

    loss, loss_r, loss_s_scaled, m_out, p_out, n_out, E_u, E_i = outs
    assert E_u.shape == (n_u, d) and E_i.shape == (n_i, d)
    assert bool(jnp.isfinite(loss))
    assert bool(jnp.isfinite(loss_r))
    assert bool(jnp.isfinite(loss_s_scaled))
    print("KERNEL_OK")
</pallas_src>

<mosaic_0001>
module attributes {stable_mosaic.version = 11 : i64} {
  func.func @_fused_kernel(%arg0: memref<16xi32, #tpu.memory_space<smem>>, %arg1: memref<32xi32, #tpu.memory_space<smem>>, %arg2: memref<128x256xbf16, #tpu.memory_space<vmem>>, %arg3: memref<8x128xf32, #tpu.memory_space<vmem>>, %arg4: memref<8x256xf32, #tpu.memory_space<vmem>>, %arg5: memref<128x8xf32, #tpu.memory_space<vmem>>, %arg6: memref<256x8xf32, #tpu.memory_space<vmem>>, %arg7: memref<128x128xf32, #tpu.memory_space<vmem>>, %arg8: memref<256x128xf32, #tpu.memory_space<vmem>>, %arg9: memref<128x128xf32, #tpu.memory_space<vmem>>, %arg10: memref<256x128xf32, #tpu.memory_space<vmem>>, %arg11: memref<1x1xf32, #tpu.memory_space<vmem>>, %arg12: memref<1x1xf32, #tpu.memory_space<vmem>>, %arg13: memref<128x128xf32, #tpu.memory_space<vmem>>, %arg14: memref<256x128xf32, #tpu.memory_space<vmem>>, %arg15: memref<16x128xf32, #tpu.memory_space<vmem>>, %arg16: memref<16x128xf32, #tpu.memory_space<vmem>>, %arg17: memref<32x128xf32, #tpu.memory_space<vmem>>, %arg18: memref<32x128xf32, #tpu.memory_space<vmem>>) attributes {dimension_semantics = [], scalar_prefetch = 0 : i64, scratch_operands = 6 : i64, tpu.core_type = #tpu.core_type<tc>} {
    %c0 = arith.constant 0 : index
    %c0_0 = arith.constant 0 : index
    %0 = vector.load %arg2[%c0, %c0_0] : memref<128x256xbf16, #tpu.memory_space<vmem>>, vector<128x256xbf16>
    %c0_1 = arith.constant 0 : index
    %c0_2 = arith.constant 0 : index
    %1 = vector.load %arg3[%c0_1, %c0_2] : memref<8x128xf32, #tpu.memory_space<vmem>>, vector<8x128xf32>
    %c0_3 = arith.constant 0 : index
    %c0_4 = arith.constant 0 : index
    %2 = vector.load %arg4[%c0_3, %c0_4] : memref<8x256xf32, #tpu.memory_space<vmem>>, vector<8x256xf32>
    %c0_5 = arith.constant 0 : index
    %c0_6 = arith.constant 0 : index
    %3 = vector.load %arg5[%c0_5, %c0_6] : memref<128x8xf32, #tpu.memory_space<vmem>>, vector<128x8xf32>
    %c0_7 = arith.constant 0 : index
    %c0_8 = arith.constant 0 : index
    %4 = vector.load %arg6[%c0_7, %c0_8] : memref<256x8xf32, #tpu.memory_space<vmem>>, vector<256x8xf32>
    %c0_9 = arith.constant 0 : index
    %c0_10 = arith.constant 0 : index
    %5 = vector.load %arg7[%c0_9, %c0_10] : memref<128x128xf32, #tpu.memory_space<vmem>>, vector<128x128xf32>
    %c0_11 = arith.constant 0 : index
    %c0_12 = arith.constant 0 : index
    %6 = vector.load %arg8[%c0_11, %c0_12] : memref<256x128xf32, #tpu.memory_space<vmem>>, vector<256x128xf32>
    %7 = arith.truncf %5 : vector<128x128xf32> to vector<128x128xbf16>
    %8 = arith.truncf %6 : vector<256x128xf32> to vector<256x128xbf16>
    %cst = arith.constant dense<0.000000e+00> : vector<128x128xf32>
    %9 = tpu.matmul %0, %8, %cst {dimension_numbers = #tpu.dot_dimension_numbers<[1], [0], [0], [1], [0, 0, 1, 1], [], []>} : vector<128x256xbf16>, vector<256x128xbf16>, vector<128x128xf32> -> vector<128x128xf32>
    %cst_13 = arith.constant dense<0.000000e+00> : vector<256x128xf32>
    %10 = tpu.matmul %0, %7, %cst_13 {dimension_numbers = #tpu.dot_dimension_numbers<[0], [0], [1], [1], [0, 1, 1, 1], [], []>} : vector<128x256xbf16>, vector<128x128xbf16>, vector<256x128xf32> -> vector<256x128xf32>
    %cst_14 = arith.constant dense<0.000000e+00> : vector<8x128xf32>
    %11 = tpu.matmul %2, %6, %cst_14 {dimension_numbers = #tpu.dot_dimension_numbers<[1], [0], [0], [1], [0, 0, 1, 1], [], []>} : vector<8x256xf32>, vector<256x128xf32>, vector<8x128xf32> -> vector<8x128xf32>
    %cst_15 = arith.constant dense<0.000000e+00> : vector<128x128xf32>
    %12 = tpu.matmul %3, %11, %cst_15 {dimension_numbers = #tpu.dot_dimension_numbers<[1], [0], [0], [1], [0, 0, 1, 1], [], []>} : vector<128x8xf32>, vector<8x128xf32>, vector<128x128xf32> -> vector<128x128xf32>
    %cst_16 = arith.constant dense<0.000000e+00> : vector<8x128xf32>
    %13 = tpu.matmul %1, %5, %cst_16 {dimension_numbers = #tpu.dot_dimension_numbers<[1], [0], [0], [1], [0, 0, 1, 1], [], []>} : vector<8x128xf32>, vector<128x128xf32>, vector<8x128xf32> -> vector<8x128xf32>
    %cst_17 = arith.constant dense<0.000000e+00> : vector<256x128xf32>
    %14 = tpu.matmul %4, %13, %cst_17 {dimension_numbers = #tpu.dot_dimension_numbers<[1], [0], [0], [1], [0, 0, 1, 1], [], []>} : vector<256x8xf32>, vector<8x128xf32>, vector<256x128xf32> -> vector<256x128xf32>
    %15 = arith.addf %5, %9 : vector<128x128xf32>
    %16 = arith.addf %6, %10 : vector<256x128xf32>
    %17 = arith.addf %5, %12 : vector<128x128xf32>
    %18 = arith.addf %6, %14 : vector<256x128xf32>
    %19 = arith.truncf %9 : vector<128x128xf32> to vector<128x128xbf16>
    %20 = arith.truncf %10 : vector<256x128xf32> to vector<256x128xbf16>
    %cst_18 = arith.constant dense<0.000000e+00> : vector<128x128xf32>
    %21 = tpu.matmul %0, %20, %cst_18 {dimension_numbers = #tpu.dot_dimension_numbers<[1], [0], [0], [1], [0, 0, 1, 1], [], []>} : vector<128x256xbf16>, vector<256x128xbf16>, vector<128x128xf32> -> vector<128x128xf32>
    %cst_19 = arith.constant dense<0.000000e+00> : vector<256x128xf32>
    %22 = tpu.matmul %0, %19, %cst_19 {dimension_numbers = #tpu.dot_dimension_numbers<[0], [0], [1], [1], [0, 1, 1, 1], [], []>} : vector<128x256xbf16>, vector<128x128xbf16>, vector<256x128xf32> -> vector<256x128xf32>
    %cst_20 = arith.constant dense<0.000000e+00> : vector<8x128xf32>
    %23 = tpu.matmul %2, %10, %cst_20 {dimension_numbers = #tpu.dot_dimension_numbers<[1], [0], [0], [1], [0, 0, 1, 1], [], []>} : vector<8x256xf32>, vector<256x128xf32>, vector<8x128xf32> -> vector<8x128xf32>
    %cst_21 = arith.constant dense<0.000000e+00> : vector<128x128xf32>
    %24 = tpu.matmul %3, %23, %cst_21 {dimension_numbers = #tpu.dot_dimension_numbers<[1], [0], [0], [1], [0, 0, 1, 1], [], []>} : vector<128x8xf32>, vector<8x128xf32>, vector<128x128xf32> -> vector<128x128xf32>
    %cst_22 = arith.constant dense<0.000000e+00> : vector<8x128xf32>
    %25 = tpu.matmul %1, %9, %cst_22 {dimension_numbers = #tpu.dot_dimension_numbers<[1], [0], [0], [1], [0, 0, 1, 1], [], []>} : vector<8x128xf32>, vector<128x128xf32>, vector<8x128xf32> -> vector<8x128xf32>
    %cst_23 = arith.constant dense<0.000000e+00> : vector<256x128xf32>
    %26 = tpu.matmul %4, %25, %cst_23 {dimension_numbers = #tpu.dot_dimension_numbers<[1], [0], [0], [1], [0, 0, 1, 1], [], []>} : vector<256x8xf32>, vector<8x128xf32>, vector<256x128xf32> -> vector<256x128xf32>
    %27 = arith.addf %15, %21 : vector<128x128xf32>
    %28 = arith.addf %16, %22 : vector<256x128xf32>
    %29 = arith.addf %17, %24 : vector<128x128xf32>
    %30 = arith.addf %18, %26 : vector<256x128xf32>
    %c0_24 = arith.constant 0 : index
    %c0_25 = arith.constant 0 : index
    %31 = vector.load %arg9[%c0_24, %c0_25] : memref<128x128xf32, #tpu.memory_space<vmem>>, vector<128x128xf32>
    tpu.vector_store %arg9[%c0_24, %c0_25], %27 {strides = array<i32>} : memref<128x128xf32, #tpu.memory_space<vmem>>, vector<128x128xf32>,
    %c0_26 = arith.constant 0 : index
    %c0_27 = arith.constant 0 : index
    %32 = vector.load %arg10[%c0_26, %c0_27] : memref<256x128xf32, #tpu.memory_space<vmem>>, vector<256x128xf32>
    tpu.vector_store %arg10[%c0_26, %c0_27], %28 {strides = array<i32>} : memref<256x128xf32, #tpu.memory_space<vmem>>, vector<256x128xf32>,
    %c0_28 = arith.constant 0 : index
    %c0_29 = arith.constant 0 : index
    %33 = vector.load %arg13[%c0_28, %c0_29] : memref<128x128xf32, #tpu.memory_space<vmem>>, vector<128x128xf32>
    tpu.vector_store %arg13[%c0_28, %c0_29], %29 {strides = array<i32>} : memref<128x128xf32, #tpu.memory_space<vmem>>, vector<128x128xf32>,
    %c0_30 = arith.constant 0 : index
    %c0_31 = arith.constant 0 : index
    %34 = vector.load %arg14[%c0_30, %c0_31] : memref<256x128xf32, #tpu.memory_space<vmem>>, vector<256x128xf32>
    tpu.vector_store %arg14[%c0_30, %c0_31], %30 {strides = array<i32>} : memref<256x128xf32, #tpu.memory_space<vmem>>, vector<256x128xf32>,
    %c0_i32 = arith.constant 0 : i32
    %35 = arith.index_cast %c0_i32 : i32 to index
    %36 = memref.load %arg0[%35] : memref<16xi32, #tpu.memory_space<smem>>
    %37 = arith.index_cast %36 : i32 to index
    %c0_32 = arith.constant 0 : index
    %38 = vector.load %arg13[%37, %c0_32] : memref<128x128xf32, #tpu.memory_space<vmem>>, vector<1x128xf32>
    %39 = arith.index_cast %c0_i32 : i32 to index
    %c0_33 = arith.constant 0 : index
    %40 = vector.load %arg15[%39, %c0_33] : memref<16x128xf32, #tpu.memory_space<vmem>>, vector<1x128xf32>
    tpu.vector_store %arg15[%39, %c0_33], %38 {strides = array<i32>} : memref<16x128xf32, #tpu.memory_space<vmem>>, vector<1x128xf32>,
    %41 = arith.index_cast %36 : i32 to index
    %c0_34 = arith.constant 0 : index
    %42 = vector.load %arg9[%41, %c0_34] : memref<128x128xf32, #tpu.memory_space<vmem>>, vector<1x128xf32>
    %43 = arith.index_cast %c0_i32 : i32 to index
    %c0_35 = arith.constant 0 : index
    %44 = vector.load %arg16[%43, %c0_35] : memref<16x128xf32, #tpu.memory_space<vmem>>, vector<1x128xf32>
    tpu.vector_store %arg16[%43, %c0_35], %42 {strides = array<i32>} : memref<16x128xf32, #tpu.memory_space<vmem>>, vector<1x128xf32>,
    %c1_i32 = arith.constant 1 : i32
    %45 = arith.index_cast %c1_i32 : i32 to index
    %46 = memref.load %arg0[%45] : memref<16xi32, #tpu.memory_space<smem>>
    %47 = arith.index_cast %46 : i32 to index
    %c0_36 = arith.constant 0 : index
    %48 = vector.load %arg13[%47, %c0_36] : memref<128x128xf32, #tpu.memory_space<vmem>>, vector<1x128xf32>
    %49 = arith.index_cast %c1_i32 : i32 to index
    %c0_37 = arith.constant 0 : index
    %50 = vector.load %arg15[%49, %c0_37] : memref<16x128xf32, #tpu.memory_space<vmem>>, vector<1x128xf32>
    tpu.vector_store %arg15[%49, %c0_37], %48 {strides = array<i32>} : memref<16x128xf32, #tpu.memory_space<vmem>>, vector<1x128xf32>,
    %51 = arith.index_cast %46 : i32 to index
    %c0_38 = arith.constant 0 : index
    %52 = vector.load %arg9[%51, %c0_38] : memref<128x128xf32, #tpu.memory_space<vmem>>, vector<1x128xf32>
    %53 = arith.index_cast %c1_i32 : i32 to index
    %c0_39 = arith.constant 0 : index
    %54 = vector.load %arg16[%53, %c0_39] : memref<16x128xf32, #tpu.memory_space<vmem>>, vector<1x128xf32>
    tpu.vector_store %arg16[%53, %c0_39], %52 {strides = array<i32>} : memref<16x128xf32, #tpu.memory_space<vmem>>, vector<1x128xf32>,
    %c2_i32 = arith.constant 2 : i32
    %55 = arith.index_cast %c2_i32 : i32 to index
    %56 = memref.load %arg0[%55] : memref<16xi32, #tpu.memory_space<smem>>
    %57 = arith.index_cast %56 : i32 to index
    %c0_40 = arith.constant 0 : index
    %58 = vector.load %arg13[%57, %c0_40] : memref<128x128xf32, #tpu.memory_space<vmem>>, vector<1x128xf32>
    %59 = arith.index_cast %c2_i32 : i32 to index
    %c0_41 = arith.constant 0 : index
    %60 = vector.load %arg15[%59, %c0_41] : memref<16x128xf32, #tpu.memory_space<vmem>>, vector<1x128xf32>
    tpu.vector_store %arg15[%59, %c0_41], %58 {strides = array<i32>} : memref<16x128xf32, #tpu.memory_space<vmem>>, vector<1x128xf32>,
    %61 = arith.index_cast %56 : i32 to index
    %c0_42 = arith.constant 0 : index
    %62 = vector.load %arg9[%61, %c0_42] : memref<128x128xf32, #tpu.memory_space<vmem>>, vector<1x128xf32>
    %63 = arith.index_cast %c2_i32 : i32 to index
    %c0_43 = arith.constant 0 : index
    %64 = vector.load %arg16[%63, %c0_43] : memref<16x128xf32, #tpu.memory_space<vmem>>, vector<1x128xf32>
    tpu.vector_store %arg16[%63, %c0_43], %62 {strides = array<i32>} : memref<16x128xf32, #tpu.memory_space<vmem>>, vector<1x128xf32>,
    %c3_i32 = arith.constant 3 : i32
    %65 = arith.index_cast %c3_i32 : i32 to index
    %66 = memref.load %arg0[%65] : memref<16xi32, #tpu.memory_space<smem>>
    %67 = arith.index_cast %66 : i32 to index
    %c0_44 = arith.constant 0 : index
    %68 = vector.load %arg13[%67, %c0_44] : memref<128x128xf32, #tpu.memory_space<vmem>>, vector<1x128xf32>
    %69 = arith.index_cast %c3_i32 : i32 to index
    %c0_45 = arith.constant 0 : index
    %70 = vector.load %arg15[%69, %c0_45] : memref<16x128xf32, #tpu.memory_space<vmem>>, vector<1x128xf32>
    tpu.vector_store %arg15[%69, %c0_45], %68 {strides = array<i32>} : memref<16x128xf32, #tpu.memory_space<vmem>>, vector<1x128xf32>,
    %71 = arith.index_cast %66 : i32 to index
    %c0_46 = arith.constant 0 : index
    %72 = vector.load %arg9[%71, %c0_46] : memref<128x128xf32, #tpu.memory_space<vmem>>, vector<1x128xf32>
    %73 = arith.index_cast %c3_i32 : i32 to index
    %c0_47 = arith.constant 0 : index
    %74 = vector.load %arg16[%73, %c0_47] : memref<16x128xf32, #tpu.memory_space<vmem>>, vector<1x128xf32>
    tpu.vector_store %arg16[%73, %c0_47], %72 {strides = array<i32>} : memref<16x128xf32, #tpu.memory_space<vmem>>, vector<1x128xf32>,
    %c4_i32 = arith.constant 4 : i32
    %75 = arith.index_cast %c4_i32 : i32 to index
    %76 = memref.load %arg0[%75] : memref<16xi32, #tpu.memory_space<smem>>
    %77 = arith.index_cast %76 : i32 to index
    %c0_48 = arith.constant 0 : index
    %78 = vector.load %arg13[%77, %c0_48] : memref<128x128xf32, #tpu.memory_space<vmem>>, vector<1x128xf32>
    %79 = arith.index_cast %c4_i32 : i32 to index
    %c0_49 = arith.constant 0 : index
    %80 = vector.load %arg15[%79, %c0_49] : memref<16x128xf32, #tpu.memory_space<vmem>>, vector<1x128xf32>
    tpu.vector_store %arg15[%79, %c0_49], %78 {strides = array<i32>} : memref<16x128xf32, #tpu.memory_space<vmem>>, vector<1x128xf32>,
    %81 = arith.index_cast %76 : i32 to index
    %c0_50 = arith.constant 0 : index
    %82 = vector.load %arg9[%81, %c0_50] : memref<128x128xf32, #tpu.memory_space<vmem>>, vector<1x128xf32>
    %83 = arith.index_cast %c4_i32 : i32 to index
    %c0_51 = arith.constant 0 : index
    %84 = vector.load %arg16[%83, %c0_51] : memref<16x128xf32, #tpu.memory_space<vmem>>, vector<1x128xf32>
    tpu.vector_store %arg16[%83, %c0_51], %82 {strides = array<i32>} : memref<16x128xf32, #tpu.memory_space<vmem>>, vector<1x128xf32>,
    %c5_i32 = arith.constant 5 : i32
    %85 = arith.index_cast %c5_i32 : i32 to index
    %86 = memref.load %arg0[%85] : memref<16xi32, #tpu.memory_space<smem>>
    %87 = arith.index_cast %86 : i32 to index
    %c0_52 = arith.constant 0 : index
    %88 = vector.load %arg13[%87, %c0_52] : memref<128x128xf32, #tpu.memory_space<vmem>>, vector<1x128xf32>
    %89 = arith.index_cast %c5_i32 : i32 to index
    %c0_53 = arith.constant 0 : index
    %90 = vector.load %arg15[%89, %c0_53] : memref<16x128xf32, #tpu.memory_space<vmem>>, vector<1x128xf32>
    tpu.vector_store %arg15[%89, %c0_53], %88 {strides = array<i32>} : memref<16x128xf32, #tpu.memory_space<vmem>>, vector<1x128xf32>,
    %91 = arith.index_cast %86 : i32 to index
    %c0_54 = arith.constant 0 : index
    %92 = vector.load %arg9[%91, %c0_54] : memref<128x128xf32, #tpu.memory_space<vmem>>, vector<1x128xf32>
    %93 = arith.index_cast %c5_i32 : i32 to index
    %c0_55 = arith.constant 0 : index
    %94 = vector.load %arg16[%93, %c0_55] : memref<16x128xf32, #tpu.memory_space<vmem>>, vector<1x128xf32>
    tpu.vector_store %arg16[%93, %c0_55], %92 {strides = array<i32>} : memref<16x128xf32, #tpu.memory_space<vmem>>, vector<1x128xf32>,
    %c6_i32 = arith.constant 6 : i32
    %95 = arith.index_cast %c6_i32 : i32 to index
    %96 = memref.load %arg0[%95] : memref<16xi32, #tpu.memory_space<smem>>
    %97 = arith.index_cast %96 : i32 to index
    %c0_56 = arith.constant 0 : index
    %98 = vector.load %arg13[%97, %c0_56] : memref<128x128xf32, #tpu.memory_space<vmem>>, vector<1x128xf32>
    %99 = arith.index_cast %c6_i32 : i32 to index
    %c0_57 = arith.constant 0 : index
    %100 = vector.load %arg15[%99, %c0_57] : memref<16x128xf32, #tpu.memory_space<vmem>>, vector<1x128xf32>
    tpu.vector_store %arg15[%99, %c0_57], %98 {strides = array<i32>} : memref<16x128xf32, #tpu.memory_space<vmem>>, vector<1x128xf32>,
    %101 = arith.index_cast %96 : i32 to index
    %c0_58 = arith.constant 0 : index
    %102 = vector.load %arg9[%101, %c0_58] : memref<128x128xf32, #tpu.memory_space<vmem>>, vector<1x128xf32>
    %103 = arith.index_cast %c6_i32 : i32 to index
    %c0_59 = arith.constant 0 : index
    %104 = vector.load %arg16[%103, %c0_59] : memref<16x128xf32, #tpu.memory_space<vmem>>, vector<1x128xf32>
    tpu.vector_store %arg16[%103, %c0_59], %102 {strides = array<i32>} : memref<16x128xf32, #tpu.memory_space<vmem>>, vector<1x128xf32>,
    %c7_i32 = arith.constant 7 : i32
    %105 = arith.index_cast %c7_i32 : i32 to index
    %106 = memref.load %arg0[%105] : memref<16xi32, #tpu.memory_space<smem>>
    %107 = arith.index_cast %106 : i32 to index
    %c0_60 = arith.constant 0 : index
    %108 = vector.load %arg13[%107, %c0_60] : memref<128x128xf32, #tpu.memory_space<vmem>>, vector<1x128xf32>
    %109 = arith.index_cast %c7_i32 : i32 to index
    %c0_61 = arith.constant 0 : index
    %110 = vector.load %arg15[%109, %c0_61] : memref<16x128xf32, #tpu.memory_space<vmem>>, vector<1x128xf32>
    tpu.vector_store %arg15[%109, %c0_61], %108 {strides = array<i32>} : memref<16x128xf32, #tpu.memory_space<vmem>>, vector<1x128xf32>,
    %111 = arith.index_cast %106 : i32 to index
    %c0_62 = arith.constant 0 : index
    %112 = vector.load %arg9[%111, %c0_62] : memref<128x128xf32, #tpu.memory_space<vmem>>, vector<1x128xf32>
    %113 = arith.index_cast %c7_i32 : i32 to index
    %c0_63 = arith.constant 0 : index
    %114 = vector.load %arg16[%113, %c0_63] : memref<16x128xf32, #tpu.memory_space<vmem>>, vector<1x128xf32>
    tpu.vector_store %arg16[%113, %c0_63], %112 {strides = array<i32>} : memref<16x128xf32, #tpu.memory_space<vmem>>, vector<1x128xf32>,
    %c8_i32 = arith.constant 8 : i32
    %115 = arith.index_cast %c8_i32 : i32 to index
    %116 = memref.load %arg0[%115] : memref<16xi32, #tpu.memory_space<smem>>
    %117 = arith.index_cast %116 : i32 to index
    %c0_64 = arith.constant 0 : index
    %118 = vector.load %arg13[%117, %c0_64] : memref<128x128xf32, #tpu.memory_space<vmem>>, vector<1x128xf32>
    %119 = arith.index_cast %c8_i32 : i32 to index
    %c0_65 = arith.constant 0 : index
    %120 = vector.load %arg15[%119, %c0_65] : memref<16x128xf32, #tpu.memory_space<vmem>>, vector<1x128xf32>
    tpu.vector_store %arg15[%119, %c0_65], %118 {strides = array<i32>} : memref<16x128xf32, #tpu.memory_space<vmem>>, vector<1x128xf32>,
    %121 = arith.index_cast %116 : i32 to index
    %c0_66 = arith.constant 0 : index
    %122 = vector.load %arg9[%121, %c0_66] : memref<128x128xf32, #tpu.memory_space<vmem>>, vector<1x128xf32>
    %123 = arith.index_cast %c8_i32 : i32 to index
    %c0_67 = arith.constant 0 : index
    %124 = vector.load %arg16[%123, %c0_67] : memref<16x128xf32, #tpu.memory_space<vmem>>, vector<1x128xf32>
    tpu.vector_store %arg16[%123, %c0_67], %122 {strides = array<i32>} : memref<16x128xf32, #tpu.memory_space<vmem>>, vector<1x128xf32>,
    %c9_i32 = arith.constant 9 : i32
    %125 = arith.index_cast %c9_i32 : i32 to index
    %126 = memref.load %arg0[%125] : memref<16xi32, #tpu.memory_space<smem>>
    %127 = arith.index_cast %126 : i32 to index
    %c0_68 = arith.constant 0 : index
    %128 = vector.load %arg13[%127, %c0_68] : memref<128x128xf32, #tpu.memory_space<vmem>>, vector<1x128xf32>
    %129 = arith.index_cast %c9_i32 : i32 to index
    %c0_69 = arith.constant 0 : index
    %130 = vector.load %arg15[%129, %c0_69] : memref<16x128xf32, #tpu.memory_space<vmem>>, vector<1x128xf32>
    tpu.vector_store %arg15[%129, %c0_69], %128 {strides = array<i32>} : memref<16x128xf32, #tpu.memory_space<vmem>>, vector<1x128xf32>,
    %131 = arith.index_cast %126 : i32 to index
    %c0_70 = arith.constant 0 : index
    %132 = vector.load %arg9[%131, %c0_70] : memref<128x128xf32, #tpu.memory_space<vmem>>, vector<1x128xf32>
    %133 = arith.index_cast %c9_i32 : i32 to index
    %c0_71 = arith.constant 0 : index
    %134 = vector.load %arg16[%133, %c0_71] : memref<16x128xf32, #tpu.memory_space<vmem>>, vector<1x128xf32>
    tpu.vector_store %arg16[%133, %c0_71], %132 {strides = array<i32>} : memref<16x128xf32, #tpu.memory_space<vmem>>, vector<1x128xf32>,
    %c10_i32 = arith.constant 10 : i32
    %135 = arith.index_cast %c10_i32 : i32 to index
    %136 = memref.load %arg0[%135] : memref<16xi32, #tpu.memory_space<smem>>
    %137 = arith.index_cast %136 : i32 to index
    %c0_72 = arith.constant 0 : index
    %138 = vector.load %arg13[%137, %c0_72] : memref<128x128xf32, #tpu.memory_space<vmem>>, vector<1x128xf32>
    %139 = arith.index_cast %c10_i32 : i32 to index
    %c0_73 = arith.constant 0 : index
    %140 = vector.load %arg15[%139, %c0_73] : memref<16x128xf32, #tpu.memory_space<vmem>>, vector<1x128xf32>
    tpu.vector_store %arg15[%139, %c0_73], %138 {strides = array<i32>} : memref<16x128xf32, #tpu.memory_space<vmem>>, vector<1x128xf32>,
    %141 = arith.index_cast %136 : i32 to index
    %c0_74 = arith.constant 0 : index
    %142 = vector.load %arg9[%141, %c0_74] : memref<128x128xf32, #tpu.memory_space<vmem>>, vector<1x128xf32>
    %143 = arith.index_cast %c10_i32 : i32 to index
    %c0_75 = arith.constant 0 : index
    %144 = vector.load %arg16[%143, %c0_75] : memref<16x128xf32, #tpu.memory_space<vmem>>, vector<1x128xf32>
    tpu.vector_store %arg16[%143, %c0_75], %142 {strides = array<i32>} : memref<16x128xf32, #tpu.memory_space<vmem>>, vector<1x128xf32>,
    %c11_i32 = arith.constant 11 : i32
    %145 = arith.index_cast %c11_i32 : i32 to index
    %146 = memref.load %arg0[%145] : memref<16xi32, #tpu.memory_space<smem>>
    %147 = arith.index_cast %146 : i32 to index
    %c0_76 = arith.constant 0 : index
    %148 = vector.load %arg13[%147, %c0_76] : memref<128x128xf32, #tpu.memory_space<vmem>>, vector<1x128xf32>
    %149 = arith.index_cast %c11_i32 : i32 to index
    %c0_77 = arith.constant 0 : index
    %150 = vector.load %arg15[%149, %c0_77] : memref<16x128xf32, #tpu.memory_space<vmem>>, vector<1x128xf32>
    tpu.vector_store %arg15[%149, %c0_77], %148 {strides = array<i32>} : memref<16x128xf32, #tpu.memory_space<vmem>>, vector<1x128xf32>,
    %151 = arith.index_cast %146 : i32 to index
    %c0_78 = arith.constant 0 : index
    %152 = vector.load %arg9[%151, %c0_78] : memref<128x128xf32, #tpu.memory_space<vmem>>, vector<1x128xf32>
    %153 = arith.index_cast %c11_i32 : i32 to index
    %c0_79 = arith.constant 0 : index
    %154 = vector.load %arg16[%153, %c0_79] : memref<16x128xf32, #tpu.memory_space<vmem>>, vector<1x128xf32>
    tpu.vector_store %arg16[%153, %c0_79], %152 {strides = array<i32>} : memref<16x128xf32, #tpu.memory_space<vmem>>, vector<1x128xf32>,
    %c12_i32 = arith.constant 12 : i32
    %155 = arith.index_cast %c12_i32 : i32 to index
    %156 = memref.load %arg0[%155] : memref<16xi32, #tpu.memory_space<smem>>
    %157 = arith.index_cast %156 : i32 to index
    %c0_80 = arith.constant 0 : index
    %158 = vector.load %arg13[%157, %c0_80] : memref<128x128xf32, #tpu.memory_space<vmem>>, vector<1x128xf32>
    %159 = arith.index_cast %c12_i32 : i32 to index
    %c0_81 = arith.constant 0 : index
    %160 = vector.load %arg15[%159, %c0_81] : memref<16x128xf32, #tpu.memory_space<vmem>>, vector<1x128xf32>
    tpu.vector_store %arg15[%159, %c0_81], %158 {strides = array<i32>} : memref<16x128xf32, #tpu.memory_space<vmem>>, vector<1x128xf32>,
    %161 = arith.index_cast %156 : i32 to index
    %c0_82 = arith.constant 0 : index
    %162 = vector.load %arg9[%161, %c0_82] : memref<128x128xf32, #tpu.memory_space<vmem>>, vector<1x128xf32>
    %163 = arith.index_cast %c12_i32 : i32 to index
    %c0_83 = arith.constant 0 : index
    %164 = vector.load %arg16[%163, %c0_83] : memref<16x128xf32, #tpu.memory_space<vmem>>, vector<1x128xf32>
    tpu.vector_store %arg16[%163, %c0_83], %162 {strides = array<i32>} : memref<16x128xf32, #tpu.memory_space<vmem>>, vector<1x128xf32>,
    %c13_i32 = arith.constant 13 : i32
    %165 = arith.index_cast %c13_i32 : i32 to index
    %166 = memref.load %arg0[%165] : memref<16xi32, #tpu.memory_space<smem>>
    %167 = arith.index_cast %166 : i32 to index
    %c0_84 = arith.constant 0 : index
    %168 = vector.load %arg13[%167, %c0_84] : memref<128x128xf32, #tpu.memory_space<vmem>>, vector<1x128xf32>
    %169 = arith.index_cast %c13_i32 : i32 to index
    %c0_85 = arith.constant 0 : index
    %170 = vector.load %arg15[%169, %c0_85] : memref<16x128xf32, #tpu.memory_space<vmem>>, vector<1x128xf32>
    tpu.vector_store %arg15[%169, %c0_85], %168 {strides = array<i32>} : memref<16x128xf32, #tpu.memory_space<vmem>>, vector<1x128xf32>,
    %171 = arith.index_cast %166 : i32 to index
    %c0_86 = arith.constant 0 : index
    %172 = vector.load %arg9[%171, %c0_86] : memref<128x128xf32, #tpu.memory_space<vmem>>, vector<1x128xf32>
    %173 = arith.index_cast %c13_i32 : i32 to index
    %c0_87 = arith.constant 0 : index
    %174 = vector.load %arg16[%173, %c0_87] : memref<16x128xf32, #tpu.memory_space<vmem>>, vector<1x128xf32>
    tpu.vector_store %arg16[%173, %c0_87], %172 {strides = array<i32>} : memref<16x128xf32, #tpu.memory_space<vmem>>, vector<1x128xf32>,
    %c14_i32 = arith.constant 14 : i32
    %175 = arith.index_cast %c14_i32 : i32 to index
    %176 = memref.load %arg0[%175] : memref<16xi32, #tpu.memory_space<smem>>
    %177 = arith.index_cast %176 : i32 to index
    %c0_88 = arith.constant 0 : index
    %178 = vector.load %arg13[%177, %c0_88] : memref<128x128xf32, #tpu.memory_space<vmem>>, vector<1x128xf32>
    %179 = arith.index_cast %c14_i32 : i32 to index
    %c0_89 = arith.constant 0 : index
    %180 = vector.load %arg15[%179, %c0_89] : memref<16x128xf32, #tpu.memory_space<vmem>>, vector<1x128xf32>
    tpu.vector_store %arg15[%179, %c0_89], %178 {strides = array<i32>} : memref<16x128xf32, #tpu.memory_space<vmem>>, vector<1x128xf32>,
    %181 = arith.index_cast %176 : i32 to index
    %c0_90 = arith.constant 0 : index
    %182 = vector.load %arg9[%181, %c0_90] : memref<128x128xf32, #tpu.memory_space<vmem>>, vector<1x128xf32>
    %183 = arith.index_cast %c14_i32 : i32 to index
    %c0_91 = arith.constant 0 : index
    %184 = vector.load %arg16[%183, %c0_91] : memref<16x128xf32, #tpu.memory_space<vmem>>, vector<1x128xf32>
    tpu.vector_store %arg16[%183, %c0_91], %182 {strides = array<i32>} : memref<16x128xf32, #tpu.memory_space<vmem>>, vector<1x128xf32>,
    %c15_i32 = arith.constant 15 : i32
    %185 = arith.index_cast %c15_i32 : i32 to index
    %186 = memref.load %arg0[%185] : memref<16xi32, #tpu.memory_space<smem>>
    %187 = arith.index_cast %186 : i32 to index
    %c0_92 = arith.constant 0 : index
    %188 = vector.load %arg13[%187, %c0_92] : memref<128x128xf32, #tpu.memory_space<vmem>>, vector<1x128xf32>
    %189 = arith.index_cast %c15_i32 : i32 to index
    %c0_93 = arith.constant 0 : index
    %190 = vector.load %arg15[%189, %c0_93] : memref<16x128xf32, #tpu.memory_space<vmem>>, vector<1x128xf32>
    tpu.vector_store %arg15[%189, %c0_93], %188 {strides = array<i32>} : memref<16x128xf32, #tpu.memory_space<vmem>>, vector<1x128xf32>,
    %191 = arith.index_cast %186 : i32 to index
    %c0_94 = arith.constant 0 : index
    %192 = vector.load %arg9[%191, %c0_94] : memref<128x128xf32, #tpu.memory_space<vmem>>, vector<1x128xf32>
    %193 = arith.index_cast %c15_i32 : i32 to index
    %c0_95 = arith.constant 0 : index
    %194 = vector.load %arg16[%193, %c0_95] : memref<16x128xf32, #tpu.memory_space<vmem>>, vector<1x128xf32>
    tpu.vector_store %arg16[%193, %c0_95], %192 {strides = array<i32>} : memref<16x128xf32, #tpu.memory_space<vmem>>, vector<1x128xf32>,
    %c16_i32 = arith.constant 16 : i32
    %c0_i32_96 = arith.constant 0 : i32
    %195 = arith.index_cast %c0_i32_96 : i32 to index
    %196 = memref.load %arg1[%195] : memref<32xi32, #tpu.memory_space<smem>>
    %197 = arith.index_cast %196 : i32 to index
    %c0_97 = arith.constant 0 : index
    %198 = vector.load %arg14[%197, %c0_97] : memref<256x128xf32, #tpu.memory_space<vmem>>, vector<1x128xf32>
    %199 = arith.index_cast %c0_i32_96 : i32 to index
    %c0_98 = arith.constant 0 : index
    %200 = vector.load %arg17[%199, %c0_98] : memref<32x128xf32, #tpu.memory_space<vmem>>, vector<1x128xf32>
    tpu.vector_store %arg17[%199, %c0_98], %198 {strides = array<i32>} : memref<32x128xf32, #tpu.memory_space<vmem>>, vector<1x128xf32>,
    %201 = arith.index_cast %196 : i32 to index
    %c0_99 = arith.constant 0 : index
    %202 = vector.load %arg10[%201, %c0_99] : memref<256x128xf32, #tpu.memory_space<vmem>>, vector<1x128xf32>
    %203 = arith.index_cast %c0_i32_96 : i32 to index
    %c0_100 = arith.constant 0 : index
    %204 = vector.load %arg18[%203, %c0_100] : memref<32x128xf32, #tpu.memory_space<vmem>>, vector<1x128xf32>
    tpu.vector_store %arg18[%203, %c0_100], %202 {strides = array<i32>} : memref<32x128xf32, #tpu.memory_space<vmem>>, vector<1x128xf32>,
    %c1_i32_101 = arith.constant 1 : i32
    %205 = arith.index_cast %c1_i32_101 : i32 to index
    %206 = memref.load %arg1[%205] : memref<32xi32, #tpu.memory_space<smem>>
    %207 = arith.index_cast %206 : i32 to index
    %c0_102 = arith.constant 0 : index
    %208 = vector.load %arg14[%207, %c0_102] : memref<256x128xf32, #tpu.memory_space<vmem>>, vector<1x128xf32>
    %209 = arith.index_cast %c1_i32_101 : i32 to index
    %c0_103 = arith.constant 0 : index
    %210 = vector.load %arg17[%209, %c0_103] : memref<32x128xf32, #tpu.memory_space<vmem>>, vector<1x128xf32>
    tpu.vector_store %arg17[%209, %c0_103], %208 {strides = array<i32>} : memref<32x128xf32, #tpu.memory_space<vmem>>, vector<1x128xf32>,
    %211 = arith.index_cast %206 : i32 to index
    %c0_104 = arith.constant 0 : index
    %212 = vector.load %arg10[%211, %c0_104] : memref<256x128xf32, #tpu.memory_space<vmem>>, vector<1x128xf32>
    %213 = arith.index_cast %c1_i32_101 : i32 to index
    %c0_105 = arith.constant 0 : index
    %214 = vector.load %arg18[%213, %c0_105] : memref<32x128xf32, #tpu.memory_space<vmem>>, vector<1x128xf32>
    tpu.vector_store %arg18[%213, %c0_105], %212 {strides = array<i32>} : memref<32x128xf32, #tpu.memory_space<vmem>>, vector<1x128xf32>,
    %c2_i32_106 = arith.constant 2 : i32
    %215 = arith.index_cast %c2_i32_106 : i32 to index
    %216 = memref.load %arg1[%215] : memref<32xi32, #tpu.memory_space<smem>>
    %217 = arith.index_cast %216 : i32 to index
    %c0_107 = arith.constant 0 : index
    %218 = vector.load %arg14[%217, %c0_107] : memref<256x128xf32, #tpu.memory_space<vmem>>, vector<1x128xf32>
    %219 = arith.index_cast %c2_i32_106 : i32 to index
    %c0_108 = arith.constant 0 : index
    %220 = vector.load %arg17[%219, %c0_108] : memref<32x128xf32, #tpu.memory_space<vmem>>, vector<1x128xf32>
    tpu.vector_store %arg17[%219, %c0_108], %218 {strides = array<i32>} : memref<32x128xf32, #tpu.memory_space<vmem>>, vector<1x128xf32>,
    %221 = arith.index_cast %216 : i32 to index
    %c0_109 = arith.constant 0 : index
    %222 = vector.load %arg10[%221, %c0_109] : memref<256x128xf32, #tpu.memory_space<vmem>>, vector<1x128xf32>
    %223 = arith.index_cast %c2_i32_106 : i32 to index
    %c0_110 = arith.constant 0 : index
    %224 = vector.load %arg18[%223, %c0_110] : memref<32x128xf32, #tpu.memory_space<vmem>>, vector<1x128xf32>
    tpu.vector_store %arg18[%223, %c0_110], %222 {strides = array<i32>} : memref<32x128xf32, #tpu.memory_space<vmem>>, vector<1x128xf32>,
    %c3_i32_111 = arith.constant 3 : i32
    %225 = arith.index_cast %c3_i32_111 : i32 to index
    %226 = memref.load %arg1[%225] : memref<32xi32, #tpu.memory_space<smem>>
    %227 = arith.index_cast %226 : i32 to index
    %c0_112 = arith.constant 0 : index
    %228 = vector.load %arg14[%227, %c0_112] : memref<256x128xf32, #tpu.memory_space<vmem>>, vector<1x128xf32>
    %229 = arith.index_cast %c3_i32_111 : i32 to index
    %c0_113 = arith.constant 0 : index
    %230 = vector.load %arg17[%229, %c0_113] : memref<32x128xf32, #tpu.memory_space<vmem>>, vector<1x128xf32>
    tpu.vector_store %arg17[%229, %c0_113], %228 {strides = array<i32>} : memref<32x128xf32, #tpu.memory_space<vmem>>, vector<1x128xf32>,
    %231 = arith.index_cast %226 : i32 to index
    %c0_114 = arith.constant 0 : index
    %232 = vector.load %arg10[%231, %c0_114] : memref<256x128xf32, #tpu.memory_space<vmem>>, vector<1x128xf32>
    %233 = arith.index_cast %c3_i32_111 : i32 to index
    %c0_115 = arith.constant 0 : index
    %234 = vector.load %arg18[%233, %c0_115] : memref<32x128xf32, #tpu.memory_space<vmem>>, vector<1x128xf32>
    tpu.vector_store %arg18[%233, %c0_115], %232 {strides = array<i32>} : memref<32x128xf32, #tpu.memory_space<vmem>>, vector<1x128xf32>,
    %c4_i32_116 = arith.constant 4 : i32
    %235 = arith.index_cast %c4_i32_116 : i32 to index
    %236 = memref.load %arg1[%235] : memref<32xi32, #tpu.memory_space<smem>>
    %237 = arith.index_cast %236 : i32 to index
    %c0_117 = arith.constant 0 : index
    %238 = vector.load %arg14[%237, %c0_117] : memref<256x128xf32, #tpu.memory_space<vmem>>, vector<1x128xf32>
    %239 = arith.index_cast %c4_i32_116 : i32 to index
    %c0_118 = arith.constant 0 : index
    %240 = vector.load %arg17[%239, %c0_118] : memref<32x128xf32, #tpu.memory_space<vmem>>, vector<1x128xf32>
    tpu.vector_store %arg17[%239, %c0_118], %238 {strides = array<i32>} : memref<32x128xf32, #tpu.memory_space<vmem>>, vector<1x128xf32>,
    %241 = arith.index_cast %236 : i32 to index
    %c0_119 = arith.constant 0 : index
    %242 = vector.load %arg10[%241, %c0_119] : memref<256x128xf32, #tpu.memory_space<vmem>>, vector<1x128xf32>
    %243 = arith.index_cast %c4_i32_116 : i32 to index
    %c0_120 = arith.constant 0 : index
    %244 = vector.load %arg18[%243, %c0_120] : memref<32x128xf32, #tpu.memory_space<vmem>>, vector<1x128xf32>
    tpu.vector_store %arg18[%243, %c0_120], %242 {strides = array<i32>} : memref<32x128xf32, #tpu.memory_space<vmem>>, vector<1x128xf32>,
    %c5_i32_121 = arith.constant 5 : i32
    %245 = arith.index_cast %c5_i32_121 : i32 to index
    %246 = memref.load %arg1[%245] : memref<32xi32, #tpu.memory_space<smem>>
    %247 = arith.index_cast %246 : i32 to index
    %c0_122 = arith.constant 0 : index
    %248 = vector.load %arg14[%247, %c0_122] : memref<256x128xf32, #tpu.memory_space<vmem>>, vector<1x128xf32>
    %249 = arith.index_cast %c5_i32_121 : i32 to index
    %c0_123 = arith.constant 0 : index
    %250 = vector.load %arg17[%249, %c0_123] : memref<32x128xf32, #tpu.memory_space<vmem>>, vector<1x128xf32>
    tpu.vector_store %arg17[%249, %c0_123], %248 {strides = array<i32>} : memref<32x128xf32, #tpu.memory_space<vmem>>, vector<1x128xf32>,
    %251 = arith.index_cast %246 : i32 to index
    %c0_124 = arith.constant 0 : index
    %252 = vector.load %arg10[%251, %c0_124] : memref<256x128xf32, #tpu.memory_space<vmem>>, vector<1x128xf32>
    %253 = arith.index_cast %c5_i32_121 : i32 to index
    %c0_125 = arith.constant 0 : index
    %254 = vector.load %arg18[%253, %c0_125] : memref<32x128xf32, #tpu.memory_space<vmem>>, vector<1x128xf32>
    tpu.vector_store %arg18[%253, %c0_125], %252 {strides = array<i32>} : memref<32x128xf32, #tpu.memory_space<vmem>>, vector<1x128xf32>,
    %c6_i32_126 = arith.constant 6 : i32
    %255 = arith.index_cast %c6_i32_126 : i32 to index
    %256 = memref.load %arg1[%255] : memref<32xi32, #tpu.memory_space<smem>>
    %257 = arith.index_cast %256 : i32 to index
    %c0_127 = arith.constant 0 : index
    %258 = vector.load %arg14[%257, %c0_127] : memref<256x128xf32, #tpu.memory_space<vmem>>, vector<1x128xf32>
    %259 = arith.index_cast %c6_i32_126 : i32 to index
    %c0_128 = arith.constant 0 : index
    %260 = vector.load %arg17[%259, %c0_128] : memref<32x128xf32, #tpu.memory_space<vmem>>, vector<1x128xf32>
    tpu.vector_store %arg17[%259, %c0_128], %258 {strides = array<i32>} : memref<32x128xf32, #tpu.memory_space<vmem>>, vector<1x128xf32>,
    %261 = arith.index_cast %256 : i32 to index
    %c0_129 = arith.constant 0 : index
    %262 = vector.load %arg10[%261, %c0_129] : memref<256x128xf32, #tpu.memory_space<vmem>>, vector<1x128xf32>
    %263 = arith.index_cast %c6_i32_126 : i32 to index
    %c0_130 = arith.constant 0 : index
    %264 = vector.load %arg18[%263, %c0_130] : memref<32x128xf32, #tpu.memory_space<vmem>>, vector<1x128xf32>
    tpu.vector_store %arg18[%263, %c0_130], %262 {strides = array<i32>} : memref<32x128xf32, #tpu.memory_space<vmem>>, vector<1x128xf32>,
    %c7_i32_131 = arith.constant 7 : i32
    %265 = arith.index_cast %c7_i32_131 : i32 to index
    %266 = memref.load %arg1[%265] : memref<32xi32, #tpu.memory_space<smem>>
    %267 = arith.index_cast %266 : i32 to index
    %c0_132 = arith.constant 0 : index
    %268 = vector.load %arg14[%267, %c0_132] : memref<256x128xf32, #tpu.memory_space<vmem>>, vector<1x128xf32>
    %269 = arith.index_cast %c7_i32_131 : i32 to index
    %c0_133 = arith.constant 0 : index
    %270 = vector.load %arg17[%269, %c0_133] : memref<32x128xf32, #tpu.memory_space<vmem>>, vector<1x128xf32>
    tpu.vector_store %arg17[%269, %c0_133], %268 {strides = array<i32>} : memref<32x128xf32, #tpu.memory_space<vmem>>, vector<1x128xf32>,
    %271 = arith.index_cast %266 : i32 to index
    %c0_134 = arith.constant 0 : index
    %272 = vector.load %arg10[%271, %c0_134] : memref<256x128xf32, #tpu.memory_space<vmem>>, vector<1x128xf32>
    %273 = arith.index_cast %c7_i32_131 : i32 to index
    %c0_135 = arith.constant 0 : index
    %274 = vector.load %arg18[%273, %c0_135] : memref<32x128xf32, #tpu.memory_space<vmem>>, vector<1x128xf32>
    tpu.vector_store %arg18[%273, %c0_135], %272 {strides = array<i32>} : memref<32x128xf32, #tpu.memory_space<vmem>>, vector<1x128xf32>,
    %c8_i32_136 = arith.constant 8 : i32
    %275 = arith.index_cast %c8_i32_136 : i32 to index
    %276 = memref.load %arg1[%275] : memref<32xi32, #tpu.memory_space<smem>>
    %277 = arith.index_cast %276 : i32 to index
    %c0_137 = arith.constant 0 : index
    %278 = vector.load %arg14[%277, %c0_137] : memref<256x128xf32, #tpu.memory_space<vmem>>, vector<1x128xf32>
    %279 = arith.index_cast %c8_i32_136 : i32 to index
    %c0_138 = arith.constant 0 : index
    %280 = vector.load %arg17[%279, %c0_138] : memref<32x128xf32, #tpu.memory_space<vmem>>, vector<1x128xf32>
    tpu.vector_store %arg17[%279, %c0_138], %278 {strides = array<i32>} : memref<32x128xf32, #tpu.memory_space<vmem>>, vector<1x128xf32>,
    %281 = arith.index_cast %276 : i32 to index
    %c0_139 = arith.constant 0 : index
    %282 = vector.load %arg10[%281, %c0_139] : memref<256x128xf32, #tpu.memory_space<vmem>>, vector<1x128xf32>
    %283 = arith.index_cast %c8_i32_136 : i32 to index
    %c0_140 = arith.constant 0 : index
    %284 = vector.load %arg18[%283, %c0_140] : memref<32x128xf32, #tpu.memory_space<vmem>>, vector<1x128xf32>
    tpu.vector_store %arg18[%283, %c0_140], %282 {strides = array<i32>} : memref<32x128xf32, #tpu.memory_space<vmem>>, vector<1x128xf32>,
    %c9_i32_141 = arith.constant 9 : i32
    %285 = arith.index_cast %c9_i32_141 : i32 to index
    %286 = memref.load %arg1[%285] : memref<32xi32, #tpu.memory_space<smem>>
    %287 = arith.index_cast %286 : i32 to index
    %c0_142 = arith.constant 0 : index
    %288 = vector.load %arg14[%287, %c0_142] : memref<256x128xf32, #tpu.memory_space<vmem>>, vector<1x128xf32>
    %289 = arith.index_cast %c9_i32_141 : i32 to index
    %c0_143 = arith.constant 0 : index
    %290 = vector.load %arg17[%289, %c0_143] : memref<32x128xf32, #tpu.memory_space<vmem>>, vector<1x128xf32>
    tpu.vector_store %arg17[%289, %c0_143], %288 {strides = array<i32>} : memref<32x128xf32, #tpu.memory_space<vmem>>, vector<1x128xf32>,
    %291 = arith.index_cast %286 : i32 to index
    %c0_144 = arith.constant 0 : index
    %292 = vector.load %arg10[%291, %c0_144] : memref<256x128xf32, #tpu.memory_space<vmem>>, vector<1x128xf32>
    %293 = arith.index_cast %c9_i32_141 : i32 to index
    %c0_145 = arith.constant 0 : index
    %294 = vector.load %arg18[%293, %c0_145] : memref<32x128xf32, #tpu.memory_space<vmem>>, vector<1x128xf32>
    tpu.vector_store %arg18[%293, %c0_145], %292 {strides = array<i32>} : memref<32x128xf32, #tpu.memory_space<vmem>>, vector<1x128xf32>,
    %c10_i32_146 = arith.constant 10 : i32
    %295 = arith.index_cast %c10_i32_146 : i32 to index
    %296 = memref.load %arg1[%295] : memref<32xi32, #tpu.memory_space<smem>>
    %297 = arith.index_cast %296 : i32 to index
    %c0_147 = arith.constant 0 : index
    %298 = vector.load %arg14[%297, %c0_147] : memref<256x128xf32, #tpu.memory_space<vmem>>, vector<1x128xf32>
    %299 = arith.index_cast %c10_i32_146 : i32 to index
    %c0_148 = arith.constant 0 : index
    %300 = vector.load %arg17[%299, %c0_148] : memref<32x128xf32, #tpu.memory_space<vmem>>, vector<1x128xf32>
    tpu.vector_store %arg17[%299, %c0_148], %298 {strides = array<i32>} : memref<32x128xf32, #tpu.memory_space<vmem>>, vector<1x128xf32>,
    %301 = arith.index_cast %296 : i32 to index
    %c0_149 = arith.constant 0 : index
    %302 = vector.load %arg10[%301, %c0_149] : memref<256x128xf32, #tpu.memory_space<vmem>>, vector<1x128xf32>
    %303 = arith.index_cast %c10_i32_146 : i32 to index
    %c0_150 = arith.constant 0 : index
    %304 = vector.load %arg18[%303, %c0_150] : memref<32x128xf32, #tpu.memory_space<vmem>>, vector<1x128xf32>
    tpu.vector_store %arg18[%303, %c0_150], %302 {strides = array<i32>} : memref<32x128xf32, #tpu.memory_space<vmem>>, vector<1x128xf32>,
    %c11_i32_151 = arith.constant 11 : i32
    %305 = arith.index_cast %c11_i32_151 : i32 to index
    %306 = memref.load %arg1[%305] : memref<32xi32, #tpu.memory_space<smem>>
    %307 = arith.index_cast %306 : i32 to index
    %c0_152 = arith.constant 0 : index
    %308 = vector.load %arg14[%307, %c0_152] : memref<256x128xf32, #tpu.memory_space<vmem>>, vector<1x128xf32>
    %309 = arith.index_cast %c11_i32_151 : i32 to index
    %c0_153 = arith.constant 0 : index
    %310 = vector.load %arg17[%309, %c0_153] : memref<32x128xf32, #tpu.memory_space<vmem>>, vector<1x128xf32>
    tpu.vector_store %arg17[%309, %c0_153], %308 {strides = array<i32>} : memref<32x128xf32, #tpu.memory_space<vmem>>, vector<1x128xf32>,
    %311 = arith.index_cast %306 : i32 to index
    %c0_154 = arith.constant 0 : index
    %312 = vector.load %arg10[%311, %c0_154] : memref<256x128xf32, #tpu.memory_space<vmem>>, vector<1x128xf32>
    %313 = arith.index_cast %c11_i32_151 : i32 to index
    %c0_155 = arith.constant 0 : index
    %314 = vector.load %arg18[%313, %c0_155] : memref<32x128xf32, #tpu.memory_space<vmem>>, vector<1x128xf32>
    tpu.vector_store %arg18[%313, %c0_155], %312 {strides = array<i32>} : memref<32x128xf32, #tpu.memory_space<vmem>>, vector<1x128xf32>,
    %c12_i32_156 = arith.constant 12 : i32
    %315 = arith.index_cast %c12_i32_156 : i32 to index
    %316 = memref.load %arg1[%315] : memref<32xi32, #tpu.memory_space<smem>>
    %317 = arith.index_cast %316 : i32 to index
    %c0_157 = arith.constant 0 : index
    %318 = vector.load %arg14[%317, %c0_157] : memref<256x128xf32, #tpu.memory_space<vmem>>, vector<1x128xf32>
    %319 = arith.index_cast %c12_i32_156 : i32 to index
    %c0_158 = arith.constant 0 : index
    %320 = vector.load %arg17[%319, %c0_158] : memref<32x128xf32, #tpu.memory_space<vmem>>, vector<1x128xf32>
    tpu.vector_store %arg17[%319, %c0_158], %318 {strides = array<i32>} : memref<32x128xf32, #tpu.memory_space<vmem>>, vector<1x128xf32>,
    %321 = arith.index_cast %316 : i32 to index
    %c0_159 = arith.constant 0 : index
    %322 = vector.load %arg10[%321, %c0_159] : memref<256x128xf32, #tpu.memory_space<vmem>>, vector<1x128xf32>
    %323 = arith.index_cast %c12_i32_156 : i32 to index
    %c0_160 = arith.constant 0 : index
    %324 = vector.load %arg18[%323, %c0_160] : memref<32x128xf32, #tpu.memory_space<vmem>>, vector<1x128xf32>
    tpu.vector_store %arg18[%323, %c0_160], %322 {strides = array<i32>} : memref<32x128xf32, #tpu.memory_space<vmem>>, vector<1x128xf32>,
    %c13_i32_161 = arith.constant 13 : i32
    %325 = arith.index_cast %c13_i32_161 : i32 to index
    %326 = memref.load %arg1[%325] : memref<32xi32, #tpu.memory_space<smem>>
    %327 = arith.index_cast %326 : i32 to index
    %c0_162 = arith.constant 0 : index
    %328 = vector.load %arg14[%327, %c0_162] : memref<256x128xf32, #tpu.memory_space<vmem>>, vector<1x128xf32>
    %329 = arith.index_cast %c13_i32_161 : i32 to index
    %c0_163 = arith.constant 0 : index
    %330 = vector.load %arg17[%329, %c0_163] : memref<32x128xf32, #tpu.memory_space<vmem>>, vector<1x128xf32>
    tpu.vector_store %arg17[%329, %c0_163], %328 {strides = array<i32>} : memref<32x128xf32, #tpu.memory_space<vmem>>, vector<1x128xf32>,
    %331 = arith.index_cast %326 : i32 to index
    %c0_164 = arith.constant 0 : index
    %332 = vector.load %arg10[%331, %c0_164] : memref<256x128xf32, #tpu.memory_space<vmem>>, vector<1x128xf32>
    %333 = arith.index_cast %c13_i32_161 : i32 to index
    %c0_165 = arith.constant 0 : index
    %334 = vector.load %arg18[%333, %c0_165] : memref<32x128xf32, #tpu.memory_space<vmem>>, vector<1x128xf32>
    tpu.vector_store %arg18[%333, %c0_165], %332 {strides = array<i32>} : memref<32x128xf32, #tpu.memory_space<vmem>>, vector<1x128xf32>,
    %c14_i32_166 = arith.constant 14 : i32
    %335 = arith.index_cast %c14_i32_166 : i32 to index
    %336 = memref.load %arg1[%335] : memref<32xi32, #tpu.memory_space<smem>>
    %337 = arith.index_cast %336 : i32 to index
    %c0_167 = arith.constant 0 : index
    %338 = vector.load %arg14[%337, %c0_167] : memref<256x128xf32, #tpu.memory_space<vmem>>, vector<1x128xf32>
    %339 = arith.index_cast %c14_i32_166 : i32 to index
    %c0_168 = arith.constant 0 : index
    %340 = vector.load %arg17[%339, %c0_168] : memref<32x128xf32, #tpu.memory_space<vmem>>, vector<1x128xf32>
    tpu.vector_store %arg17[%339, %c0_168], %338 {strides = array<i32>} : memref<32x128xf32, #tpu.memory_space<vmem>>, vector<1x128xf32>,
    %341 = arith.index_cast %336 : i32 to index
    %c0_169 = arith.constant 0 : index
    %342 = vector.load %arg10[%341, %c0_169] : memref<256x128xf32, #tpu.memory_space<vmem>>, vector<1x128xf32>
    %343 = arith.index_cast %c14_i32_166 : i32 to index
    %c0_170 = arith.constant 0 : index
    %344 = vector.load %arg18[%343, %c0_170] : memref<32x128xf32, #tpu.memory_space<vmem>>, vector<1x128xf32>
    tpu.vector_store %arg18[%343, %c0_170], %342 {strides = array<i32>} : memref<32x128xf32, #tpu.memory_space<vmem>>, vector<1x128xf32>,
    %c15_i32_171 = arith.constant 15 : i32
    %345 = arith.index_cast %c15_i32_171 : i32 to index
    %346 = memref.load %arg1[%345] : memref<32xi32, #tpu.memory_space<smem>>
    %347 = arith.index_cast %346 : i32 to index
    %c0_172 = arith.constant 0 : index
    %348 = vector.load %arg14[%347, %c0_172] : memref<256x128xf32, #tpu.memory_space<vmem>>, vector<1x128xf32>
    %349 = arith.index_cast %c15_i32_171 : i32 to index
    %c0_173 = arith.constant 0 : index
    %350 = vector.load %arg17[%349, %c0_173] : memref<32x128xf32, #tpu.memory_space<vmem>>, vector<1x128xf32>
    tpu.vector_store %arg17[%349, %c0_173], %348 {strides = array<i32>} : memref<32x128xf32, #tpu.memory_space<vmem>>, vector<1x128xf32>,
    %351 = arith.index_cast %346 : i32 to index
    %c0_174 = arith.constant 0 : index
    %352 = vector.load %arg10[%351, %c0_174] : memref<256x128xf32, #tpu.memory_space<vmem>>, vector<1x128xf32>
    %353 = arith.index_cast %c15_i32_171 : i32 to index
    %c0_175 = arith.constant 0 : index
    %354 = vector.load %arg18[%353, %c0_175] : memref<32x128xf32, #tpu.memory_space<vmem>>, vector<1x128xf32>
    tpu.vector_store %arg18[%353, %c0_175], %352 {strides = array<i32>} : memref<32x128xf32, #tpu.memory_space<vmem>>, vector<1x128xf32>,
    %c16_i32_176 = arith.constant 16 : i32
    %355 = arith.index_cast %c16_i32_176 : i32 to index
    %356 = memref.load %arg1[%355] : memref<32xi32, #tpu.memory_space<smem>>
    %357 = arith.index_cast %356 : i32 to index
    %c0_177 = arith.constant 0 : index
    %358 = vector.load %arg14[%357, %c0_177] : memref<256x128xf32, #tpu.memory_space<vmem>>, vector<1x128xf32>
    %359 = arith.index_cast %c16_i32_176 : i32 to index
    %c0_178 = arith.constant 0 : index
    %360 = vector.load %arg17[%359, %c0_178] : memref<32x128xf32, #tpu.memory_space<vmem>>, vector<1x128xf32>
    tpu.vector_store %arg17[%359, %c0_178], %358 {strides = array<i32>} : memref<32x128xf32, #tpu.memory_space<vmem>>, vector<1x128xf32>,
    %361 = arith.index_cast %356 : i32 to index
    %c0_179 = arith.constant 0 : index
    %362 = vector.load %arg10[%361, %c0_179] : memref<256x128xf32, #tpu.memory_space<vmem>>, vector<1x128xf32>
    %363 = arith.index_cast %c16_i32_176 : i32 to index
    %c0_180 = arith.constant 0 : index
    %364 = vector.load %arg18[%363, %c0_180] : memref<32x128xf32, #tpu.memory_space<vmem>>, vector<1x128xf32>
    tpu.vector_store %arg18[%363, %c0_180], %362 {strides = array<i32>} : memref<32x128xf32, #tpu.memory_space<vmem>>, vector<1x128xf32>,
    %c17_i32 = arith.constant 17 : i32
    %365 = arith.index_cast %c17_i32 : i32 to index
    %366 = memref.load %arg1[%365] : memref<32xi32, #tpu.memory_space<smem>>
    %367 = arith.index_cast %366 : i32 to index
    %c0_181 = arith.constant 0 : index
    %368 = vector.load %arg14[%367, %c0_181] : memref<256x128xf32, #tpu.memory_space<vmem>>, vector<1x128xf32>
    %369 = arith.index_cast %c17_i32 : i32 to index
    %c0_182 = arith.constant 0 : index
    %370 = vector.load %arg17[%369, %c0_182] : memref<32x128xf32, #tpu.memory_space<vmem>>, vector<1x128xf32>
    tpu.vector_store %arg17[%369, %c0_182], %368 {strides = array<i32>} : memref<32x128xf32, #tpu.memory_space<vmem>>, vector<1x128xf32>,
    %371 = arith.index_cast %366 : i32 to index
    %c0_183 = arith.constant 0 : index
    %372 = vector.load %arg10[%371, %c0_183] : memref<256x128xf32, #tpu.memory_space<vmem>>, vector<1x128xf32>
    %373 = arith.index_cast %c17_i32 : i32 to index
    %c0_184 = arith.constant 0 : index
    %374 = vector.load %arg18[%373, %c0_184] : memref<32x128xf32, #tpu.memory_space<vmem>>, vector<1x128xf32>
    tpu.vector_store %arg18[%373, %c0_184], %372 {strides = array<i32>} : memref<32x128xf32, #tpu.memory_space<vmem>>, vector<1x128xf32>,
    %c18_i32 = arith.constant 18 : i32
    %375 = arith.index_cast %c18_i32 : i32 to index
    %376 = memref.load %arg1[%375] : memref<32xi32, #tpu.memory_space<smem>>
    %377 = arith.index_cast %376 : i32 to index
    %c0_185 = arith.constant 0 : index
    %378 = vector.load %arg14[%377, %c0_185] : memref<256x128xf32, #tpu.memory_space<vmem>>, vector<1x128xf32>
    %379 = arith.index_cast %c18_i32 : i32 to index
    %c0_186 = arith.constant 0 : index
    %380 = vector.load %arg17[%379, %c0_186] : memref<32x128xf32, #tpu.memory_space<vmem>>, vector<1x128xf32>
    tpu.vector_store %arg17[%379, %c0_186], %378 {strides = array<i32>} : memref<32x128xf32, #tpu.memory_space<vmem>>, vector<1x128xf32>,
    %381 = arith.index_cast %376 : i32 to index
    %c0_187 = arith.constant 0 : index
    %382 = vector.load %arg10[%381, %c0_187] : memref<256x128xf32, #tpu.memory_space<vmem>>, vector<1x128xf32>
    %383 = arith.index_cast %c18_i32 : i32 to index
    %c0_188 = arith.constant 0 : index
    %384 = vector.load %arg18[%383, %c0_188] : memref<32x128xf32, #tpu.memory_space<vmem>>, vector<1x128xf32>
    tpu.vector_store %arg18[%383, %c0_188], %382 {strides = array<i32>} : memref<32x128xf32, #tpu.memory_space<vmem>>, vector<1x128xf32>,
    %c19_i32 = arith.constant 19 : i32
    %385 = arith.index_cast %c19_i32 : i32 to index
    %386 = memref.load %arg1[%385] : memref<32xi32, #tpu.memory_space<smem>>
    %387 = arith.index_cast %386 : i32 to index
    %c0_189 = arith.constant 0 : index
    %388 = vector.load %arg14[%387, %c0_189] : memref<256x128xf32, #tpu.memory_space<vmem>>, vector<1x128xf32>
    %389 = arith.index_cast %c19_i32 : i32 to index
    %c0_190 = arith.constant 0 : index
    %390 = vector.load %arg17[%389, %c0_190] : memref<32x128xf32, #tpu.memory_space<vmem>>, vector<1x128xf32>
    tpu.vector_store %arg17[%389, %c0_190], %388 {strides = array<i32>} : memref<32x128xf32, #tpu.memory_space<vmem>>, vector<1x128xf32>,
    %391 = arith.index_cast %386 : i32 to index
    %c0_191 = arith.constant 0 : index
    %392 = vector.load %arg10[%391, %c0_191] : memref<256x128xf32, #tpu.memory_space<vmem>>, vector<1x128xf32>
    %393 = arith.index_cast %c19_i32 : i32 to index
    %c0_192 = arith.constant 0 : index
    %394 = vector.load %arg18[%393, %c0_192] : memref<32x128xf32, #tpu.memory_space<vmem>>, vector<1x128xf32>
    tpu.vector_store %arg18[%393, %c0_192], %392 {strides = array<i32>} : memref<32x128xf32, #tpu.memory_space<vmem>>, vector<1x128xf32>,
    %c20_i32 = arith.constant 20 : i32
    %395 = arith.index_cast %c20_i32 : i32 to index
    %396 = memref.load %arg1[%395] : memref<32xi32, #tpu.memory_space<smem>>
    %397 = arith.index_cast %396 : i32 to index
    %c0_193 = arith.constant 0 : index
    %398 = vector.load %arg14[%397, %c0_193] : memref<256x128xf32, #tpu.memory_space<vmem>>, vector<1x128xf32>
    %399 = arith.index_cast %c20_i32 : i32 to index
    %c0_194 = arith.constant 0 : index
    %400 = vector.load %arg17[%399, %c0_194] : memref<32x128xf32, #tpu.memory_space<vmem>>, vector<1x128xf32>
    tpu.vector_store %arg17[%399, %c0_194], %398 {strides = array<i32>} : memref<32x128xf32, #tpu.memory_space<vmem>>, vector<1x128xf32>,
    %401 = arith.index_cast %396 : i32 to index
    %c0_195 = arith.constant 0 : index
    %402 = vector.load %arg10[%401, %c0_195] : memref<256x128xf32, #tpu.memory_space<vmem>>, vector<1x128xf32>
    %403 = arith.index_cast %c20_i32 : i32 to index
    %c0_196 = arith.constant 0 : index
    %404 = vector.load %arg18[%403, %c0_196] : memref<32x128xf32, #tpu.memory_space<vmem>>, vector<1x128xf32>
    tpu.vector_store %arg18[%403, %c0_196], %402 {strides = array<i32>} : memref<32x128xf32, #tpu.memory_space<vmem>>, vector<1x128xf32>,
    %c21_i32 = arith.constant 21 : i32
    %405 = arith.index_cast %c21_i32 : i32 to index
    %406 = memref.load %arg1[%405] : memref<32xi32, #tpu.memory_space<smem>>
    %407 = arith.index_cast %406 : i32 to index
    %c0_197 = arith.constant 0 : index
    %408 = vector.load %arg14[%407, %c0_197] : memref<256x128xf32, #tpu.memory_space<vmem>>, vector<1x128xf32>
    %409 = arith.index_cast %c21_i32 : i32 to index
    %c0_198 = arith.constant 0 : index
    %410 = vector.load %arg17[%409, %c0_198] : memref<32x128xf32, #tpu.memory_space<vmem>>, vector<1x128xf32>
    tpu.vector_store %arg17[%409, %c0_198], %408 {strides = array<i32>} : memref<32x128xf32, #tpu.memory_space<vmem>>, vector<1x128xf32>,
    %411 = arith.index_cast %406 : i32 to index
    %c0_199 = arith.constant 0 : index
    %412 = vector.load %arg10[%411, %c0_199] : memref<256x128xf32, #tpu.memory_space<vmem>>, vector<1x128xf32>
    %413 = arith.index_cast %c21_i32 : i32 to index
    %c0_200 = arith.constant 0 : index
    %414 = vector.load %arg18[%413, %c0_200] : memref<32x128xf32, #tpu.memory_space<vmem>>, vector<1x128xf32>
    tpu.vector_store %arg18[%413, %c0_200], %412 {strides = array<i32>} : memref<32x128xf32, #tpu.memory_space<vmem>>, vector<1x128xf32>,
    %c22_i32 = arith.constant 22 : i32
    %415 = arith.index_cast %c22_i32 : i32 to index
    %416 = memref.load %arg1[%415] : memref<32xi32, #tpu.memory_space<smem>>
    %417 = arith.index_cast %416 : i32 to index
    %c0_201 = arith.constant 0 : index
    %418 = vector.load %arg14[%417, %c0_201] : memref<256x128xf32, #tpu.memory_space<vmem>>, vector<1x128xf32>
    %419 = arith.index_cast %c22_i32 : i32 to index
    %c0_202 = arith.constant 0 : index
    %420 = vector.load %arg17[%419, %c0_202] : memref<32x128xf32, #tpu.memory_space<vmem>>, vector<1x128xf32>
    tpu.vector_store %arg17[%419, %c0_202], %418 {strides = array<i32>} : memref<32x128xf32, #tpu.memory_space<vmem>>, vector<1x128xf32>,
    %421 = arith.index_cast %416 : i32 to index
    %c0_203 = arith.constant 0 : index
    %422 = vector.load %arg10[%421, %c0_203] : memref<256x128xf32, #tpu.memory_space<vmem>>, vector<1x128xf32>
    %423 = arith.index_cast %c22_i32 : i32 to index
    %c0_204 = arith.constant 0 : index
    %424 = vector.load %arg18[%423, %c0_204] : memref<32x128xf32, #tpu.memory_space<vmem>>, vector<1x128xf32>
    tpu.vector_store %arg18[%423, %c0_204], %422 {strides = array<i32>} : memref<32x128xf32, #tpu.memory_space<vmem>>, vector<1x128xf32>,
    %c23_i32 = arith.constant 23 : i32
    %425 = arith.index_cast %c23_i32 : i32 to index
    %426 = memref.load %arg1[%425] : memref<32xi32, #tpu.memory_space<smem>>
    %427 = arith.index_cast %426 : i32 to index
    %c0_205 = arith.constant 0 : index
    %428 = vector.load %arg14[%427, %c0_205] : memref<256x128xf32, #tpu.memory_space<vmem>>, vector<1x128xf32>
    %429 = arith.index_cast %c23_i32 : i32 to index
    %c0_206 = arith.constant 0 : index
    %430 = vector.load %arg17[%429, %c0_206] : memref<32x128xf32, #tpu.memory_space<vmem>>, vector<1x128xf32>
    tpu.vector_store %arg17[%429, %c0_206], %428 {strides = array<i32>} : memref<32x128xf32, #tpu.memory_space<vmem>>, vector<1x128xf32>,
    %431 = arith.index_cast %426 : i32 to index
    %c0_207 = arith.constant 0 : index
    %432 = vector.load %arg10[%431, %c0_207] : memref<256x128xf32, #tpu.memory_space<vmem>>, vector<1x128xf32>
    %433 = arith.index_cast %c23_i32 : i32 to index
    %c0_208 = arith.constant 0 : index
    %434 = vector.load %arg18[%433, %c0_208] : memref<32x128xf32, #tpu.memory_space<vmem>>, vector<1x128xf32>
    tpu.vector_store %arg18[%433, %c0_208], %432 {strides = array<i32>} : memref<32x128xf32, #tpu.memory_space<vmem>>, vector<1x128xf32>,
    %c24_i32 = arith.constant 24 : i32
    %435 = arith.index_cast %c24_i32 : i32 to index
    %436 = memref.load %arg1[%435] : memref<32xi32, #tpu.memory_space<smem>>
    %437 = arith.index_cast %436 : i32 to index
    %c0_209 = arith.constant 0 : index
    %438 = vector.load %arg14[%437, %c0_209] : memref<256x128xf32, #tpu.memory_space<vmem>>, vector<1x128xf32>
    %439 = arith.index_cast %c24_i32 : i32 to index
    %c0_210 = arith.constant 0 : index
    %440 = vector.load %arg17[%439, %c0_210] : memref<32x128xf32, #tpu.memory_space<vmem>>, vector<1x128xf32>
    tpu.vector_store %arg17[%439, %c0_210], %438 {strides = array<i32>} : memref<32x128xf32, #tpu.memory_space<vmem>>, vector<1x128xf32>,
    %441 = arith.index_cast %436 : i32 to index
    %c0_211 = arith.constant 0 : index
    %442 = vector.load %arg10[%441, %c0_211] : memref<256x128xf32, #tpu.memory_space<vmem>>, vector<1x128xf32>
    %443 = arith.index_cast %c24_i32 : i32 to index
    %c0_212 = arith.constant 0 : index
    %444 = vector.load %arg18[%443, %c0_212] : memref<32x128xf32, #tpu.memory_space<vmem>>, vector<1x128xf32>
    tpu.vector_store %arg18[%443, %c0_212], %442 {strides = array<i32>} : memref<32x128xf32, #tpu.memory_space<vmem>>, vector<1x128xf32>,
    %c25_i32 = arith.constant 25 : i32
    %445 = arith.index_cast %c25_i32 : i32 to index
    %446 = memref.load %arg1[%445] : memref<32xi32, #tpu.memory_space<smem>>
    %447 = arith.index_cast %446 : i32 to index
    %c0_213 = arith.constant 0 : index
    %448 = vector.load %arg14[%447, %c0_213] : memref<256x128xf32, #tpu.memory_space<vmem>>, vector<1x128xf32>
    %449 = arith.index_cast %c25_i32 : i32 to index
    %c0_214 = arith.constant 0 : index
    %450 = vector.load %arg17[%449, %c0_214] : memref<32x128xf32, #tpu.memory_space<vmem>>, vector<1x128xf32>
    tpu.vector_store %arg17[%449, %c0_214], %448 {strides = array<i32>} : memref<32x128xf32, #tpu.memory_space<vmem>>, vector<1x128xf32>,
    %451 = arith.index_cast %446 : i32 to index
    %c0_215 = arith.constant 0 : index
    %452 = vector.load %arg10[%451, %c0_215] : memref<256x128xf32, #tpu.memory_space<vmem>>, vector<1x128xf32>
    %453 = arith.index_cast %c25_i32 : i32 to index
    %c0_216 = arith.constant 0 : index
    %454 = vector.load %arg18[%453, %c0_216] : memref<32x128xf32, #tpu.memory_space<vmem>>, vector<1x128xf32>
    tpu.vector_store %arg18[%453, %c0_216], %452 {strides = array<i32>} : memref<32x128xf32, #tpu.memory_space<vmem>>, vector<1x128xf32>,
    %c26_i32 = arith.constant 26 : i32
    %455 = arith.index_cast %c26_i32 : i32 to index
    %456 = memref.load %arg1[%455] : memref<32xi32, #tpu.memory_space<smem>>
    %457 = arith.index_cast %456 : i32 to index
    %c0_217 = arith.constant 0 : index
    %458 = vector.load %arg14[%457, %c0_217] : memref<256x128xf32, #tpu.memory_space<vmem>>, vector<1x128xf32>
    %459 = arith.index_cast %c26_i32 : i32 to index
    %c0_218 = arith.constant 0 : index
    %460 = vector.load %arg17[%459, %c0_218] : memref<32x128xf32, #tpu.memory_space<vmem>>, vector<1x128xf32>
    tpu.vector_store %arg17[%459, %c0_218], %458 {strides = array<i32>} : memref<32x128xf32, #tpu.memory_space<vmem>>, vector<1x128xf32>,
    %461 = arith.index_cast %456 : i32 to index
    %c0_219 = arith.constant 0 : index
    %462 = vector.load %arg10[%461, %c0_219] : memref<256x128xf32, #tpu.memory_space<vmem>>, vector<1x128xf32>
    %463 = arith.index_cast %c26_i32 : i32 to index
    %c0_220 = arith.constant 0 : index
    %464 = vector.load %arg18[%463, %c0_220] : memref<32x128xf32, #tpu.memory_space<vmem>>, vector<1x128xf32>
    tpu.vector_store %arg18[%463, %c0_220], %462 {strides = array<i32>} : memref<32x128xf32, #tpu.memory_space<vmem>>, vector<1x128xf32>,
    %c27_i32 = arith.constant 27 : i32
    %465 = arith.index_cast %c27_i32 : i32 to index
    %466 = memref.load %arg1[%465] : memref<32xi32, #tpu.memory_space<smem>>
    %467 = arith.index_cast %466 : i32 to index
    %c0_221 = arith.constant 0 : index
    %468 = vector.load %arg14[%467, %c0_221] : memref<256x128xf32, #tpu.memory_space<vmem>>, vector<1x128xf32>
    %469 = arith.index_cast %c27_i32 : i32 to index
    %c0_222 = arith.constant 0 : index
    %470 = vector.load %arg17[%469, %c0_222] : memref<32x128xf32, #tpu.memory_space<vmem>>, vector<1x128xf32>
    tpu.vector_store %arg17[%469, %c0_222], %468 {strides = array<i32>} : memref<32x128xf32, #tpu.memory_space<vmem>>, vector<1x128xf32>,
    %471 = arith.index_cast %466 : i32 to index
    %c0_223 = arith.constant 0 : index
    %472 = vector.load %arg10[%471, %c0_223] : memref<256x128xf32, #tpu.memory_space<vmem>>, vector<1x128xf32>
    %473 = arith.index_cast %c27_i32 : i32 to index
    %c0_224 = arith.constant 0 : index
    %474 = vector.load %arg18[%473, %c0_224] : memref<32x128xf32, #tpu.memory_space<vmem>>, vector<1x128xf32>
    tpu.vector_store %arg18[%473, %c0_224], %472 {strides = array<i32>} : memref<32x128xf32, #tpu.memory_space<vmem>>, vector<1x128xf32>,
    %c28_i32 = arith.constant 28 : i32
    %475 = arith.index_cast %c28_i32 : i32 to index
    %476 = memref.load %arg1[%475] : memref<32xi32, #tpu.memory_space<smem>>
    %477 = arith.index_cast %476 : i32 to index
    %c0_225 = arith.constant 0 : index
    %478 = vector.load %arg14[%477, %c0_225] : memref<256x128xf32, #tpu.memory_space<vmem>>, vector<1x128xf32>
    %479 = arith.index_cast %c28_i32 : i32 to index
    %c0_226 = arith.constant 0 : index
    %480 = vector.load %arg17[%479, %c0_226] : memref<32x128xf32, #tpu.memory_space<vmem>>, vector<1x128xf32>
    tpu.vector_store %arg17[%479, %c0_226], %478 {strides = array<i32>} : memref<32x128xf32, #tpu.memory_space<vmem>>, vector<1x128xf32>,
    %481 = arith.index_cast %476 : i32 to index
    %c0_227 = arith.constant 0 : index
    %482 = vector.load %arg10[%481, %c0_227] : memref<256x128xf32, #tpu.memory_space<vmem>>, vector<1x128xf32>
    %483 = arith.index_cast %c28_i32 : i32 to index
    %c0_228 = arith.constant 0 : index
    %484 = vector.load %arg18[%483, %c0_228] : memref<32x128xf32, #tpu.memory_space<vmem>>, vector<1x128xf32>
    tpu.vector_store %arg18[%483, %c0_228], %482 {strides = array<i32>} : memref<32x128xf32, #tpu.memory_space<vmem>>, vector<1x128xf32>,
    %c29_i32 = arith.constant 29 : i32
    %485 = arith.index_cast %c29_i32 : i32 to index
    %486 = memref.load %arg1[%485] : memref<32xi32, #tpu.memory_space<smem>>
    %487 = arith.index_cast %486 : i32 to index
    %c0_229 = arith.constant 0 : index
    %488 = vector.load %arg14[%487, %c0_229] : memref<256x128xf32, #tpu.memory_space<vmem>>, vector<1x128xf32>
    %489 = arith.index_cast %c29_i32 : i32 to index
    %c0_230 = arith.constant 0 : index
    %490 = vector.load %arg17[%489, %c0_230] : memref<32x128xf32, #tpu.memory_space<vmem>>, vector<1x128xf32>
    tpu.vector_store %arg17[%489, %c0_230], %488 {strides = array<i32>} : memref<32x128xf32, #tpu.memory_space<vmem>>, vector<1x128xf32>,
    %491 = arith.index_cast %486 : i32 to index
    %c0_231 = arith.constant 0 : index
    %492 = vector.load %arg10[%491, %c0_231] : memref<256x128xf32, #tpu.memory_space<vmem>>, vector<1x128xf32>
    %493 = arith.index_cast %c29_i32 : i32 to index
    %c0_232 = arith.constant 0 : index
    %494 = vector.load %arg18[%493, %c0_232] : memref<32x128xf32, #tpu.memory_space<vmem>>, vector<1x128xf32>
    tpu.vector_store %arg18[%493, %c0_232], %492 {strides = array<i32>} : memref<32x128xf32, #tpu.memory_space<vmem>>, vector<1x128xf32>,
    %c30_i32 = arith.constant 30 : i32
    %495 = arith.index_cast %c30_i32 : i32 to index
    %496 = memref.load %arg1[%495] : memref<32xi32, #tpu.memory_space<smem>>
    %497 = arith.index_cast %496 : i32 to index
    %c0_233 = arith.constant 0 : index
    %498 = vector.load %arg14[%497, %c0_233] : memref<256x128xf32, #tpu.memory_space<vmem>>, vector<1x128xf32>
    %499 = arith.index_cast %c30_i32 : i32 to index
    %c0_234 = arith.constant 0 : index
    %500 = vector.load %arg17[%499, %c0_234] : memref<32x128xf32, #tpu.memory_space<vmem>>, vector<1x128xf32>
    tpu.vector_store %arg17[%499, %c0_234], %498 {strides = array<i32>} : memref<32x128xf32, #tpu.memory_space<vmem>>, vector<1x128xf32>,
    %501 = arith.index_cast %496 : i32 to index
    %c0_235 = arith.constant 0 : index
    %502 = vector.load %arg10[%501, %c0_235] : memref<256x128xf32, #tpu.memory_space<vmem>>, vector<1x128xf32>
    %503 = arith.index_cast %c30_i32 : i32 to index
    %c0_236 = arith.constant 0 : index
    %504 = vector.load %arg18[%503, %c0_236] : memref<32x128xf32, #tpu.memory_space<vmem>>, vector<1x128xf32>
    tpu.vector_store %arg18[%503, %c0_236], %502 {strides = array<i32>} : memref<32x128xf32, #tpu.memory_space<vmem>>, vector<1x128xf32>,
    %c31_i32 = arith.constant 31 : i32
    %505 = arith.index_cast %c31_i32 : i32 to index
    %506 = memref.load %arg1[%505] : memref<32xi32, #tpu.memory_space<smem>>
    %507 = arith.index_cast %506 : i32 to index
    %c0_237 = arith.constant 0 : index
    %508 = vector.load %arg14[%507, %c0_237] : memref<256x128xf32, #tpu.memory_space<vmem>>, vector<1x128xf32>
    %509 = arith.index_cast %c31_i32 : i32 to index
    %c0_238 = arith.constant 0 : index
    %510 = vector.load %arg17[%509, %c0_238] : memref<32x128xf32, #tpu.memory_space<vmem>>, vector<1x128xf32>
    tpu.vector_store %arg17[%509, %c0_238], %508 {strides = array<i32>} : memref<32x128xf32, #tpu.memory_space<vmem>>, vector<1x128xf32>,
    %511 = arith.index_cast %506 : i32 to index
    %c0_239 = arith.constant 0 : index
    %512 = vector.load %arg10[%511, %c0_239] : memref<256x128xf32, #tpu.memory_space<vmem>>, vector<1x128xf32>
    %513 = arith.index_cast %c31_i32 : i32 to index
    %c0_240 = arith.constant 0 : index
    %514 = vector.load %arg18[%513, %c0_240] : memref<32x128xf32, #tpu.memory_space<vmem>>, vector<1x128xf32>
    tpu.vector_store %arg18[%513, %c0_240], %512 {strides = array<i32>} : memref<32x128xf32, #tpu.memory_space<vmem>>, vector<1x128xf32>,
    %c32_i32 = arith.constant 32 : i32
    %c0_241 = arith.constant 0 : index
    %c0_242 = arith.constant 0 : index
    %515 = vector.load %arg15[%c0_241, %c0_242] : memref<16x128xf32, #tpu.memory_space<vmem>>, vector<16x128xf32>
    %c0_243 = arith.constant 0 : index
    %c0_244 = arith.constant 0 : index
    %516 = vector.load %arg16[%c0_243, %c0_244] : memref<16x128xf32, #tpu.memory_space<vmem>>, vector<16x128xf32>
    %c0_245 = arith.constant 0 : index
    %c0_246 = arith.constant 0 : index
    %517 = vector.load %arg17[%c0_245, %c0_246] : memref<32x128xf32, #tpu.memory_space<vmem>>, vector<32x128xf32>
    %c0_247 = arith.constant 0 : index
    %c0_248 = arith.constant 0 : index
    %518 = vector.load %arg18[%c0_247, %c0_248] : memref<32x128xf32, #tpu.memory_space<vmem>>, vector<32x128xf32>
    %cst_249 = arith.constant 5.000000e+00 : f32
    %519 = vector.broadcast %cst_249 : f32 to vector<16x128xf32>
    %520 = arith.mulf %515, %519 : vector<16x128xf32>
    %cst_250 = arith.constant dense<0.000000e+00> : vector<16x128xf32>
    %521 = tpu.matmul %520, %27, %cst_250 {dimension_numbers = #tpu.dot_dimension_numbers<[1], [1], [0], [0], [0, 0, 1, 0], [], []>} : vector<16x128xf32>, vector<128x128xf32>, vector<16x128xf32> -> vector<16x128xf32>
    %cst_251 = arith.constant dense<0xFF800000> : vector<16xf32>
    %522 = vector.multi_reduction <maximumf>, %521, %cst_251 [1] : vector<16x128xf32> to vector<16xf32>
    %523 = vector.shape_cast %522 : vector<16xf32> to vector<16x1xf32>
    %524 = vector.broadcast %523 : vector<16x1xf32> to vector<16x128xf32>
    %525 = arith.subf %521, %524 : vector<16x128xf32>
    %526 = math.exp %525 : vector<16x128xf32>
    %cst_252 = arith.constant dense<0.000000e+00> : vector<16xf32>
    %527 = vector.multi_reduction <add>, %526, %cst_252 [1] : vector<16x128xf32> to vector<16xf32>
    %528 = vector.shape_cast %527 : vector<16xf32> to vector<16x1xf32>
    %529 = math.log %528 : vector<16x1xf32>
    %530 = arith.addf %523, %529 : vector<16x1xf32>
    %cst_253 = arith.constant -18.420681 : f32
    %531 = vector.broadcast %cst_253 : f32 to vector<16x1xf32>
    %532 = arith.maximumf %530, %531 : vector<16x1xf32>
    %cst_254 = arith.constant -18.420681 : f32
    %533 = vector.broadcast %cst_254 : f32 to vector<16x1xf32>
    %534 = arith.subf %530, %533 : vector<16x1xf32>
    %535 = math.absf %534 : vector<16x1xf32>
    %cst_255 = arith.constant 0.000000e+00 : f32
    %536 = vector.broadcast %cst_255 : f32 to vector<16x1xf32>
    %537 = arith.subf %536, %535 : vector<16x1xf32>
    %538 = math.exp %537 : vector<16x1xf32>
    %cst_256 = arith.constant 1.000000e+00 : f32
    %539 = vector.broadcast %cst_256 : f32 to vector<16x1xf32>
    %540 = arith.addf %539, %538 : vector<16x1xf32>
    %541 = math.log %540 : vector<16x1xf32>
    %542 = arith.addf %532, %541 : vector<16x1xf32>
    %543 = arith.mulf %520, %516 : vector<16x128xf32>
    %cst_257 = arith.constant dense<0.000000e+00> : vector<16xf32>
    %544 = vector.multi_reduction <add>, %543, %cst_257 [1] : vector<16x128xf32> to vector<16xf32>
    %545 = vector.shape_cast %544 : vector<16xf32> to vector<16x1xf32>
    %cst_258 = arith.constant -5.000000e+00 : f32
    %cst_259 = arith.constant 5.000000e+00 : f32
    %546 = vector.broadcast %cst_258 : f32 to vector<16x1xf32>
    %547 = arith.maximumf %546, %545 : vector<16x1xf32>
    %548 = vector.broadcast %cst_259 : f32 to vector<16x1xf32>
    %549 = arith.minimumf %548, %547 : vector<16x1xf32>
    %cst_260 = arith.constant dense<0.000000e+00> : vector<1xf32>
    %550 = vector.multi_reduction <add>, %542, %cst_260 [0] : vector<16x1xf32> to vector<1xf32>
    %551 = vector.shape_cast %550 : vector<1xf32> to vector<1x1xf32>
    %cst_261 = arith.constant 6.250000e-02 : f32
    %552 = vector.broadcast %cst_261 : f32 to vector<1x1xf32>
    %553 = arith.mulf %551, %552 : vector<1x1xf32>
    %cst_262 = arith.constant dense<0.000000e+00> : vector<1xf32>
    %554 = vector.multi_reduction <add>, %549, %cst_262 [0] : vector<16x1xf32> to vector<1xf32>
    %555 = vector.shape_cast %554 : vector<1xf32> to vector<1x1xf32>
    %cst_263 = arith.constant 6.250000e-02 : f32
    %556 = vector.broadcast %cst_263 : f32 to vector<1x1xf32>
    %557 = arith.mulf %555, %556 : vector<1x1xf32>
    %cst_264 = arith.constant 5.000000e+00 : f32
    %558 = vector.broadcast %cst_264 : f32 to vector<32x128xf32>
    %559 = arith.mulf %517, %558 : vector<32x128xf32>
    %cst_265 = arith.constant dense<0.000000e+00> : vector<32x256xf32>
    %560 = tpu.matmul %559, %28, %cst_265 {dimension_numbers = #tpu.dot_dimension_numbers<[1], [1], [0], [0], [0, 0, 1, 0], [], []>} : vector<32x128xf32>, vector<256x128xf32>, vector<32x256xf32> -> vector<32x256xf32>
    %cst_266 = arith.constant dense<0xFF800000> : vector<32xf32>
    %561 = vector.multi_reduction <maximumf>, %560, %cst_266 [1] : vector<32x256xf32> to vector<32xf32>
    %562 = vector.shape_cast %561 : vector<32xf32> to vector<32x1xf32>
    %563 = vector.broadcast %562 : vector<32x1xf32> to vector<32x256xf32>
    %564 = arith.subf %560, %563 : vector<32x256xf32>
    %565 = math.exp %564 : vector<32x256xf32>
    %cst_267 = arith.constant dense<0.000000e+00> : vector<32xf32>
    %566 = vector.multi_reduction <add>, %565, %cst_267 [1] : vector<32x256xf32> to vector<32xf32>
    %567 = vector.shape_cast %566 : vector<32xf32> to vector<32x1xf32>
    %568 = math.log %567 : vector<32x1xf32>
    %569 = arith.addf %562, %568 : vector<32x1xf32>
    %cst_268 = arith.constant -18.420681 : f32
    %570 = vector.broadcast %cst_268 : f32 to vector<32x1xf32>
    %571 = arith.maximumf %569, %570 : vector<32x1xf32>
    %cst_269 = arith.constant -18.420681 : f32
    %572 = vector.broadcast %cst_269 : f32 to vector<32x1xf32>
    %573 = arith.subf %569, %572 : vector<32x1xf32>
    %574 = math.absf %573 : vector<32x1xf32>
    %cst_270 = arith.constant 0.000000e+00 : f32
    %575 = vector.broadcast %cst_270 : f32 to vector<32x1xf32>
    %576 = arith.subf %575, %574 : vector<32x1xf32>
    %577 = math.exp %576 : vector<32x1xf32>
    %cst_271 = arith.constant 1.000000e+00 : f32
    %578 = vector.broadcast %cst_271 : f32 to vector<32x1xf32>
    %579 = arith.addf %578, %577 : vector<32x1xf32>
    %580 = math.log %579 : vector<32x1xf32>
    %581 = arith.addf %571, %580 : vector<32x1xf32>
    %582 = arith.mulf %559, %518 : vector<32x128xf32>
    %cst_272 = arith.constant dense<0.000000e+00> : vector<32xf32>
    %583 = vector.multi_reduction <add>, %582, %cst_272 [1] : vector<32x128xf32> to vector<32xf32>
    %584 = vector.shape_cast %583 : vector<32xf32> to vector<32x1xf32>
    %cst_273 = arith.constant -5.000000e+00 : f32
    %cst_274 = arith.constant 5.000000e+00 : f32
    %585 = vector.broadcast %cst_273 : f32 to vector<32x1xf32>
    %586 = arith.maximumf %585, %584 : vector<32x1xf32>
    %587 = vector.broadcast %cst_274 : f32 to vector<32x1xf32>
    %588 = arith.minimumf %587, %586 : vector<32x1xf32>
    %cst_275 = arith.constant dense<0.000000e+00> : vector<1xf32>
    %589 = vector.multi_reduction <add>, %581, %cst_275 [0] : vector<32x1xf32> to vector<1xf32>
    %590 = vector.shape_cast %589 : vector<1xf32> to vector<1x1xf32>
    %cst_276 = arith.constant 3.125000e-02 : f32
    %591 = vector.broadcast %cst_276 : f32 to vector<1x1xf32>
    %592 = arith.mulf %590, %591 : vector<1x1xf32>
    %cst_277 = arith.constant dense<0.000000e+00> : vector<1xf32>
    %593 = vector.multi_reduction <add>, %588, %cst_277 [0] : vector<32x1xf32> to vector<1xf32>
    %594 = vector.shape_cast %593 : vector<1xf32> to vector<1x1xf32>
    %cst_278 = arith.constant 3.125000e-02 : f32
    %595 = vector.broadcast %cst_278 : f32 to vector<1x1xf32>
    %596 = arith.mulf %594, %595 : vector<1x1xf32>
    %597 = arith.addf %553, %592 : vector<1x1xf32>
    %598 = arith.addf %557, %596 : vector<1x1xf32>
    %599 = arith.subf %597, %598 : vector<1x1xf32>
    %c0_279 = arith.constant 0 : index
    %c0_280 = arith.constant 0 : index
    %600 = vector.load %arg11[%c0_279, %c0_280] : memref<1x1xf32, #tpu.memory_space<vmem>>, vector<1x1xf32>
    tpu.vector_store %arg11[%c0_279, %c0_280], %599 {strides = array<i32>} : memref<1x1xf32, #tpu.memory_space<vmem>>, vector<1x1xf32>,
    %601 = vector.extract_strided_slice %518 {offsets = [0, 0], sizes = [16, 128], strides = [1, 1]} : vector<32x128xf32> to vector<16x128xf32>
    %602 = arith.mulf %516, %601 : vector<16x128xf32>
    %cst_281 = arith.constant dense<0.000000e+00> : vector<16xf32>
    %603 = vector.multi_reduction <add>, %602, %cst_281 [1] : vector<16x128xf32> to vector<16xf32>
    %604 = vector.shape_cast %603 : vector<16xf32> to vector<16x1xf32>
    %605 = vector.extract_strided_slice %518 {offsets = [16, 0], sizes = [16, 128], strides = [1, 1]} : vector<32x128xf32> to vector<16x128xf32>
    %606 = arith.mulf %516, %605 : vector<16x128xf32>
    %cst_282 = arith.constant dense<0.000000e+00> : vector<16xf32>
    %607 = vector.multi_reduction <add>, %606, %cst_282 [1] : vector<16x128xf32> to vector<16xf32>
    %608 = vector.shape_cast %607 : vector<16xf32> to vector<16x1xf32>
    %609 = arith.subf %608, %604 : vector<16x1xf32>
    %cst_283 = arith.constant 0.000000e+00 : f32
    %610 = vector.broadcast %cst_283 : f32 to vector<16x1xf32>
    %611 = arith.maximumf %609, %610 : vector<16x1xf32>
    %612 = math.absf %609 : vector<16x1xf32>
    %cst_284 = arith.constant 0.000000e+00 : f32
    %613 = vector.broadcast %cst_284 : f32 to vector<16x1xf32>
    %614 = arith.subf %613, %612 : vector<16x1xf32>
    %615 = math.exp %614 : vector<16x1xf32>
    %cst_285 = arith.constant 1.000000e+00 : f32
    %616 = vector.broadcast %cst_285 : f32 to vector<16x1xf32>
    %617 = arith.addf %616, %615 : vector<16x1xf32>
    %618 = math.log %617 : vector<16x1xf32>
    %619 = arith.addf %611, %618 : vector<16x1xf32>
    %cst_286 = arith.constant dense<0.000000e+00> : vector<1xf32>
    %620 = vector.multi_reduction <add>, %619, %cst_286 [0] : vector<16x1xf32> to vector<1xf32>
    %621 = vector.shape_cast %620 : vector<1xf32> to vector<1x1xf32>
    %cst_287 = arith.constant 6.250000e-02 : f32
    %622 = vector.broadcast %cst_287 : f32 to vector<1x1xf32>
    %623 = arith.mulf %621, %622 : vector<1x1xf32>
    %c0_288 = arith.constant 0 : index
    %c0_289 = arith.constant 0 : index
    %624 = vector.load %arg12[%c0_288, %c0_289] : memref<1x1xf32, #tpu.memory_space<vmem>>, vector<1x1xf32>
    tpu.vector_store %arg12[%c0_288, %c0_289], %623 {strides = array<i32>} : memref<1x1xf32, #tpu.memory_space<vmem>>, vector<1x1xf32>,
    return
  }
}

</mosaic_0001>

<llo_original>
// kernel: lightgcl_forward.1
$region0: #{lightgcl_forward.1}
  #allocation0 [shape = 'u32[]', space=smem, size = 0x4, offset = 0x4, fixed_abs, tag = 'smem constant byte address 0x4 - core index']
  #allocation1 [shape = 'u32[144,128]{1,0:T(1,128)}', space=vmem, size = 0x12000, scoped, tag = 'internal scratch']
  #allocation2 [shape = 'f32[128,128]{1,0:T(8,128)}', space=vmem, size = 0x10000, scoped, tag = 'scratch operand']
  #allocation3 [shape = 'f32[256,128]{1,0:T(8,128)}', space=vmem, size = 0x20000, scoped, tag = 'scratch operand']
  #allocation4 [shape = 'f32[16,128]{1,0:T(8,128)}', space=vmem, size = 0x2000, scoped, tag = 'scratch operand']
  #allocation5 [shape = 'f32[16,128]{1,0:T(8,128)}', space=vmem, size = 0x2000, scoped, tag = 'scratch operand']
  #allocation6 [shape = 'f32[32,128]{1,0:T(8,128)}', space=vmem, size = 0x4000, scoped, tag = 'scratch operand']
  #allocation7 [shape = 'f32[32,128]{1,0:T(8,128)}', space=vmem, size = 0x4000, scoped, tag = 'scratch operand']
  %s0 = inlined_call_operand.vmem [shape: s32[16], index: 0, kind: input, shape index: {}]
  %s1 = inlined_call_operand.vmem [shape: s32[32], index: 1, kind: input, shape index: {}]
  %s2 = inlined_call_operand.vmem [shape: bf16[128,256], index: 2, kind: input, shape index: {}]
  %s3 = inlined_call_operand.vmem [shape: f32[8,128], index: 3, kind: input, shape index: {}]
  %s4 = inlined_call_operand.vmem [shape: f32[8,256], index: 4, kind: input, shape index: {}]
  %s5 = inlined_call_operand.vmem [shape: f32[128,8], index: 5, kind: input, shape index: {}]
  %s6 = inlined_call_operand.vmem [shape: f32[256,8], index: 6, kind: input, shape index: {}]
  %s7 = inlined_call_operand.hbm [shape: f32[128,128], index: 7, kind: input, shape index: {}]
  %s8 = inlined_call_operand.vmem [shape: f32[256,128], index: 8, kind: input, shape index: {}]
  %s9 = inlined_call_operand.vmem [shape: f32[128,128], index: 9, kind: output, shape index: {0}]
  %s10 = inlined_call_operand.vmem [shape: f32[256,128], index: 10, kind: output, shape index: {1}]
  %s11 = inlined_call_operand.hbm [shape: f32[1,1], index: 11, kind: output, shape index: {2}]
  %s12 = inlined_call_operand.hbm [shape: f32[1,1], index: 12, kind: output, shape index: {3}]
  %13 = xla_tuple %s9, %s10, %s11, %s12
  %s14 = sld [smem:[#allocation0]]
  $region82: #{lightgcl_forward.1} parent=0
    _
  %s16 = ssub.s32 1, %s14
  %s17 = scalar_select 0, %s16, %s14
  $region1: #{lightgcl_forward.1} parent=0
    #allocation8 [shape = 'u8[512]{0}', space=smem, size = 0x200, scoped, tag = 'input window, operand 0, single buffered']
    #allocation9 [shape = 's32[1]{0}', space=sflag, size = 0x4, scoped, tag = 'scoped memory for lightgcl_forward.1']
    #allocation10 [shape = 's32[1]{0}', space=sflag, size = 0x4, scoped, tag = 'scoped memory for lightgcl_forward.1']
    #allocation11 [shape = 's32[1]{0}', space=sflag, size = 0x4, scoped, tag = 'scoped memory for lightgcl_forward.1']
    #allocation12 [shape = 'u8[512]{0}', space=smem, size = 0x200, scoped, tag = 'input window, operand 1, single buffered']
    #allocation13 [shape = 's32[1]{0}', space=sflag, size = 0x4, scoped, tag = 'scoped memory for lightgcl_forward.1']
    #allocation14 [shape = 'u8[65536]{0}', space=vmem, size = 0x10000, scoped, tag = 'input window, operand 7, single buffered']
    #allocation15 [shape = 'u8[512]{0}', space=vmem, size = 0x400, scoped, tag = 'output window, operand 2, single buffered']
    #allocation16 [shape = 'u8[512]{0}', space=vmem, size = 0x400, scoped, tag = 'output window, operand 3, single buffered']
    #allocation17 [shape = 's32[1]{0}', space=sflag, size = 0x4, scoped, tag = 'scoped memory for lightgcl_forward.1']
    %18 = vsyncpa [#allocation11], 0
    %19 = vsyncpa [#allocation13], 0
    %20 = vsyncpa [#allocation9], 0
    %21 = vsyncpa [#allocation10], 0
    %22 = vsyncpa [#allocation17], 0
    // Predicated region
    $region2: #{lightgcl_forward.1} parent=1 // pred_check
      _
    $region3: #{lightgcl_forward.1} parent=1 // pred_check_branch
      %24 = sbr.rel (0) target = $region5
    $region4: #{lightgcl_forward.1} parent=1 // pred_region
      %s26 = ssub.s32 16, 16
      %27 = vsyncadd [#allocation11], %s26
      %s29 = sshll.u32 %s0, 4
      %s30 = int_to_ptr.vmem [resolvable:$true] %s29
      %32 = dma.vmem_to_smem %s30, 16, [#allocation8], [#allocation11]
    $region5: #{lightgcl_forward.1} parent=1 // pred_fallthru
      _
    // Predicated region
    $region6: #{lightgcl_forward.1} parent=1 // pred_check
      _
    $region7: #{lightgcl_forward.1} parent=1 // pred_check_branch
      %34 = sbr.rel (0) target = $region9
    $region8: #{lightgcl_forward.1} parent=1 // pred_region
      %s36 = ssub.s32 16, 16
      %37 = vsyncadd [#allocation13], %s36
      %s39 = sshll.u32 %s1, 4
      %s40 = int_to_ptr.vmem [resolvable:$true] %s39
      %42 = dma.vmem_to_smem %s40, 16, [#allocation12], [#allocation13]
    $region9: #{lightgcl_forward.1} parent=1 // pred_fallthru
      _
    // Predicated region
    $region10: #{lightgcl_forward.1} parent=1 // pred_check
      _
    $region11: #{lightgcl_forward.1} parent=1 // pred_check_branch
      %44 = sbr.rel (0) target = $region13
    $region12: #{lightgcl_forward.1} parent=1 // pred_region
      _
    $region13: #{lightgcl_forward.1} parent=1 // pred_fallthru
      _
    // Predicated region
    $region14: #{lightgcl_forward.1} parent=1 // pred_check
      _
    $region15: #{lightgcl_forward.1} parent=1 // pred_check_branch
      %46 = sbr.rel (0) target = $region17
    $region16: #{lightgcl_forward.1} parent=1 // pred_region
      _
    $region17: #{lightgcl_forward.1} parent=1 // pred_fallthru
      _
    // Predicated region
    $region18: #{lightgcl_forward.1} parent=1 // pred_check
      _
    $region19: #{lightgcl_forward.1} parent=1 // pred_check_branch
      %48 = sbr.rel (0) target = $region21
    $region20: #{lightgcl_forward.1} parent=1 // pred_region
      _
    $region21: #{lightgcl_forward.1} parent=1 // pred_fallthru
      _
    // Predicated region
    $region22: #{lightgcl_forward.1} parent=1 // pred_check
      _
    $region23: #{lightgcl_forward.1} parent=1 // pred_check_branch
      %50 = sbr.rel (0) target = $region25
    $region24: #{lightgcl_forward.1} parent=1 // pred_region
      _
    $region25: #{lightgcl_forward.1} parent=1 // pred_fallthru
      _
    // Predicated region
    $region26: #{lightgcl_forward.1} parent=1 // pred_check
      _
    $region27: #{lightgcl_forward.1} parent=1 // pred_check_branch
      %52 = sbr.rel (0) target = $region29
    $region28: #{lightgcl_forward.1} parent=1 // pred_region
      _
    $region29: #{lightgcl_forward.1} parent=1 // pred_fallthru
      _
    // Predicated region
    $region30: #{lightgcl_forward.1} parent=1 // pred_check
      _
    $region31: #{lightgcl_forward.1} parent=1 // pred_check_branch
      %54 = sbr.rel (0) target = $region33
    $region32: #{lightgcl_forward.1} parent=1 // pred_region
      %s56 = ssub.s32 2048, 2048
      %57 = vsyncadd [#allocation9], %s56
      %s58 = sshll.u32 [#allocation14], 4
      %s59 = int_to_ptr.vmem [resolvable:$true] %s58
      %64 = dma.hbm_to_vmem [thread:$0]  %s7, 2048, %s59, [#allocation9], 128, 128, 8
    $region33: #{lightgcl_forward.1} parent=1 // pred_fallthru
      _
    // Predicated region
    $region34: #{lightgcl_forward.1} parent=1 // pred_check
      _
    $region35: #{lightgcl_forward.1} parent=1 // pred_check_branch
      %66 = sbr.rel (0) target = $region37
    $region36: #{lightgcl_forward.1} parent=1 // pred_region
      _
    $region37: #{lightgcl_forward.1} parent=1 // pred_fallthru
      _
    // Predicated region
    $region38: #{lightgcl_forward.1} parent=1 // pred_check
      _
    $region39: #{lightgcl_forward.1} parent=1 // pred_check_branch
      %68 = sbr.rel (0) target = $region41
    $region40: #{lightgcl_forward.1} parent=1 // pred_region
      %69 = dma.done [#allocation11], 16
    $region41: #{lightgcl_forward.1} parent=1 // pred_fallthru
      _
    // Predicated region
    $region42: #{lightgcl_forward.1} parent=1 // pred_check
      _
    $region43: #{lightgcl_forward.1} parent=1 // pred_check_branch
      %71 = sbr.rel (0) target = $region45
    $region44: #{lightgcl_forward.1} parent=1 // pred_region
      %72 = dma.done [#allocation13], 16
    $region45: #{lightgcl_forward.1} parent=1 // pred_fallthru
      _
    // Predicated region
    $region46: #{lightgcl_forward.1} parent=1 // pred_check
      _
    $region47: #{lightgcl_forward.1} parent=1 // pred_check_branch
      %74 = sbr.rel (0) target = $region49
    $region48: #{lightgcl_forward.1} parent=1 // pred_region
      %75 = dma.done [#allocation9], 2048
    $region49: #{lightgcl_forward.1} parent=1 // pred_fallthru
      _
    %76 = sfence
    %v78 = vld [vmem:[%s2] sm:$0xff]
    %v79 = vld [vmem:[%s2 + $0x8] sm:$0xff]
    %v80 = vld [vmem:[%s2 + $0x10] sm:$0xff]
    %v81 = vld [vmem:[%s2 + $0x18] sm:$0xff]
    %v82 = vld [vmem:[%s2 + $0x20] sm:$0xff]
    %v83 = vld [vmem:[%s2 + $0x28] sm:$0xff]
    %v84 = vld [vmem:[%s2 + $0x30] sm:$0xff]
    %v85 = vld [vmem:[%s2 + $0x38] sm:$0xff]
    %v86 = vld [vmem:[%s2 + $0x40] sm:$0xff]
    %v87 = vld [vmem:[%s2 + $0x48] sm:$0xff]
    %v88 = vld [vmem:[%s2 + $0x50] sm:$0xff]
    %v89 = vld [vmem:[%s2 + $0x58] sm:$0xff]
    %v90 = vld [vmem:[%s2 + $0x60] sm:$0xff]
    %v91 = vld [vmem:[%s2 + $0x68] sm:$0xff]
    %v92 = vld [vmem:[%s2 + $0x70] sm:$0xff]
    %v93 = vld [vmem:[%s2 + $0x78] sm:$0xff]
    %v94 = vld [vmem:[%s3] sm:$0xff]
    %v95 = vld [vmem:[%s4] sm:$0xff]
    %v96 = vld [vmem:[%s4 + $0x8] sm:$0xff]
    %v97 = vld [vmem:[%s5] sm:$0xff]
    %v98 = vld [vmem:[%s5 + $0x8] sm:$0xff]
    %v99 = vld [vmem:[%s5 + $0x10] sm:$0xff]
    %v100 = vld [vmem:[%s5 + $0x18] sm:$0xff]
    %v101 = vld [vmem:[%s5 + $0x20] sm:$0xff]
    %v102 = vld [vmem:[%s5 + $0x28] sm:$0xff]
    %v103 = vld [vmem:[%s5 + $0x30] sm:$0xff]
    %v104 = vld [vmem:[%s5 + $0x38] sm:$0xff]
    %v105 = vld [vmem:[%s5 + $0x40] sm:$0xff]
    %v106 = vld [vmem:[%s5 + $0x48] sm:$0xff]
    %v107 = vld [vmem:[%s5 + $0x50] sm:$0xff]
    %v108 = vld [vmem:[%s5 + $0x58] sm:$0xff]
    %v109 = vld [vmem:[%s5 + $0x60] sm:$0xff]
    %v110 = vld [vmem:[%s5 + $0x68] sm:$0xff]
    %v111 = vld [vmem:[%s5 + $0x70] sm:$0xff]
    %v112 = vld [vmem:[%s5 + $0x78] sm:$0xff]
    %v113 = vld [vmem:[%s6] sm:$0xff]
    %v114 = vld [vmem:[%s6 + $0x8] sm:$0xff]
    %v115 = vld [vmem:[%s6 + $0x10] sm:$0xff]
    %v116 = vld [vmem:[%s6 + $0x18] sm:$0xff]
    %v117 = vld [vmem:[%s6 + $0x20] sm:$0xff]
    %v118 = vld [vmem:[%s6 + $0x28] sm:$0xff]
    %v119 = vld [vmem:[%s6 + $0x30] sm:$0xff]
    %v120 = vld [vmem:[%s6 + $0x38] sm:$0xff]
    %v121 = vld [vmem:[%s6 + $0x40] sm:$0xff]
    %v122 = vld [vmem:[%s6 + $0x48] sm:$0xff]
    %v123 = vld [vmem:[%s6 + $0x50] sm:$0xff]
    %v124 = vld [vmem:[%s6 + $0x58] sm:$0xff]
    %v125 = vld [vmem:[%s6 + $0x60] sm:$0xff]
    %v126 = vld [vmem:[%s6 + $0x68] sm:$0xff]
    %v127 = vld [vmem:[%s6 + $0x70] sm:$0xff]
    %v128 = vld [vmem:[%s6 + $0x78] sm:$0xff]
    %v129 = vld [vmem:[%s6 + $0x80] sm:$0xff]
    %v130 = vld [vmem:[%s6 + $0x88] sm:$0xff]
    %v131 = vld [vmem:[%s6 + $0x90] sm:$0xff]
    %v132 = vld [vmem:[%s6 + $0x98] sm:$0xff]
    %v133 = vld [vmem:[%s6 + $0xa0] sm:$0xff]
    %v134 = vld [vmem:[%s6 + $0xa8] sm:$0xff]
    %v135 = vld [vmem:[%s6 + $0xb0] sm:$0xff]
    %v136 = vld [vmem:[%s6 + $0xb8] sm:$0xff]
    %v137 = vld [vmem:[%s6 + $0xc0] sm:$0xff]
    %v138 = vld [vmem:[%s6 + $0xc8] sm:$0xff]
    %v139 = vld [vmem:[%s6 + $0xd0] sm:$0xff]
    %v140 = vld [vmem:[%s6 + $0xd8] sm:$0xff]
    %v141 = vld [vmem:[%s6 + $0xe0] sm:$0xff]
    %v142 = vld [vmem:[%s6 + $0xe8] sm:$0xff]
    %v143 = vld [vmem:[%s6 + $0xf0] sm:$0xff]
    %v144 = vld [vmem:[%s6 + $0xf8] sm:$0xff]
    %v145 = vld [vmem:[#allocation14] sm:$0xff]
    %v146 = vld [vmem:[#allocation14 + $0x8] sm:$0xff]
    %v147 = vld [vmem:[#allocation14 + $0x10] sm:$0xff]
    %v148 = vld [vmem:[#allocation14 + $0x18] sm:$0xff]
    %v149 = vld [vmem:[#allocation14 + $0x20] sm:$0xff]
    %v150 = vld [vmem:[#allocation14 + $0x28] sm:$0xff]
    %v151 = vld [vmem:[#allocation14 + $0x30] sm:$0xff]
    %v152 = vld [vmem:[#allocation14 + $0x38] sm:$0xff]
    %v153 = vld [vmem:[#allocation14 + $0x40] sm:$0xff]
    %v154 = vld [vmem:[#allocation14 + $0x48] sm:$0xff]
    %v155 = vld [vmem:[#allocation14 + $0x50] sm:$0xff]
    %v156 = vld [vmem:[#allocation14 + $0x58] sm:$0xff]
    %v157 = vld [vmem:[#allocation14 + $0x60] sm:$0xff]
    %v158 = vld [vmem:[#allocation14 + $0x68] sm:$0xff]
    %v159 = vld [vmem:[#allocation14 + $0x70] sm:$0xff]
    %v160 = vld [vmem:[#allocation14 + $0x78] sm:$0xff]
    %v161 = vld [vmem:[%s8] sm:$0xff]
    %v162 = vld [vmem:[%s8 + $0x8] sm:$0xff]
    %v163 = vld [vmem:[%s8 + $0x10] sm:$0xff]
    %v164 = vld [vmem:[%s8 + $0x18] sm:$0xff]
    %v165 = vld [vmem:[%s8 + $0x20] sm:$0xff]
    %v166 = vld [vmem:[%s8 + $0x28] sm:$0xff]
    %v167 = vld [vmem:[%s8 + $0x30] sm:$0xff]
    %v168 = vld [vmem:[%s8 + $0x38] sm:$0xff]
    %v169 = vld [vmem:[%s8 + $0x40] sm:$0xff]
    %v170 = vld [vmem:[%s8 + $0x48] sm:$0xff]
    %v171 = vld [vmem:[%s8 + $0x50] sm:$0xff]
    %v172 = vld [vmem:[%s8 + $0x58] sm:$0xff]
    %v173 = vld [vmem:[%s8 + $0x60] sm:$0xff]
    %v174 = vld [vmem:[%s8 + $0x68] sm:$0xff]
    %v175 = vld [vmem:[%s8 + $0x70] sm:$0xff]
    %v176 = vld [vmem:[%s8 + $0x78] sm:$0xff]
    %v177 = vld [vmem:[%s8 + $0x80] sm:$0xff]
    %v178 = vld [vmem:[%s8 + $0x88] sm:$0xff]
    %v179 = vld [vmem:[%s8 + $0x90] sm:$0xff]
    %v180 = vld [vmem:[%s8 + $0x98] sm:$0xff]
    %v181 = vld [vmem:[%s8 + $0xa0] sm:$0xff]
    %v182 = vld [vmem:[%s8 + $0xa8] sm:$0xff]
    %v183 = vld [vmem:[%s8 + $0xb0] sm:$0xff]
    %v184 = vld [vmem:[%s8 + $0xb8] sm:$0xff]
    %v185 = vld [vmem:[%s8 + $0xc0] sm:$0xff]
    %v186 = vld [vmem:[%s8 + $0xc8] sm:$0xff]
    %v187 = vld [vmem:[%s8 + $0xd0] sm:$0xff]
    %v188 = vld [vmem:[%s8 + $0xd8] sm:$0xff]
    %v189 = vld [vmem:[%s8 + $0xe0] sm:$0xff]
    %v190 = vld [vmem:[%s8 + $0xe8] sm:$0xff]
    %v191 = vld [vmem:[%s8 + $0xf0] sm:$0xff]
    %v192 = vld [vmem:[%s8 + $0xf8] sm:$0xff]
    %v193 = vpack.c.bf16 %v146, %v145
    %v194 = vpack.c.bf16 %v148, %v147
    %v195 = vpack.c.bf16 %v150, %v149
    %v196 = vpack.c.bf16 %v152, %v151
    %v197 = vpack.c.bf16 %v154, %v153
    %v198 = vpack.c.bf16 %v156, %v155
    %v199 = vpack.c.bf16 %v158, %v157
    %v200 = vpack.c.bf16 %v160, %v159
    %v201 = vpack.c.bf16 %v162, %v161
    %v202 = vpack.c.bf16 %v164, %v163
    %v203 = vpack.c.bf16 %v166, %v165
    %v204 = vpack.c.bf16 %v168, %v167
    %v205 = vpack.c.bf16 %v170, %v169
    %v206 = vpack.c.bf16 %v172, %v171
    %v207 = vpack.c.bf16 %v174, %v173
    %v208 = vpack.c.bf16 %v176, %v175
    %v209 = vpack.c.bf16 %v178, %v177
    %v210 = vpack.c.bf16 %v180, %v179
    %v211 = vpack.c.bf16 %v182, %v181
    %v212 = vpack.c.bf16 %v184, %v183
    %v213 = vpack.c.bf16 %v186, %v185
    %v214 = vpack.c.bf16 %v188, %v187
    %v215 = vpack.c.bf16 %v190, %v189
    %v216 = vpack.c.bf16 %v192, %v191
    %v233 = vunpack.c.l.b16 %v78
    %v234 = vunpack.c.h.b16 %v78
    %v235 = vunpack.c.l.b16 %v79
    %v236 = vunpack.c.h.b16 %v79
    %v237 = vunpack.c.l.b16 %v80
    %v238 = vunpack.c.h.b16 %v80
    %v239 = vunpack.c.l.b16 %v81
    %v240 = vunpack.c.h.b16 %v81
    %v241 = vunpack.c.l.b16 %v82
    %v242 = vunpack.c.h.b16 %v82
    %v243 = vunpack.c.l.b16 %v83
    %v244 = vunpack.c.h.b16 %v83
    %v245 = vunpack.c.l.b16 %v84
    %v246 = vunpack.c.h.b16 %v84
    %v247 = vunpack.c.l.b16 %v85
    %v248 = vunpack.c.h.b16 %v85
    %v249 = vunpack.c.l.b16 %v86
    %v250 = vunpack.c.h.b16 %v86
    %v251 = vunpack.c.l.b16 %v87
    %v252 = vunpack.c.h.b16 %v87
    %v253 = vunpack.c.l.b16 %v88
    %v254 = vunpack.c.h.b16 %v88
    %v255 = vunpack.c.l.b16 %v89
    %v256 = vunpack.c.h.b16 %v89
    %v257 = vunpack.c.l.b16 %v90
    %v258 = vunpack.c.h.b16 %v90
    %v259 = vunpack.c.l.b16 %v91
    %v260 = vunpack.c.h.b16 %v91
    %v261 = vunpack.c.l.b16 %v92
    %v262 = vunpack.c.h.b16 %v92
    %v263 = vunpack.c.l.b16 %v93
    %v264 = vunpack.c.h.b16 %v93
    %v265 = vpack.c.b16 %v235, %v233
    %v266 = vpack.c.b16 %v236, %v234
    %v267 = vpack.c.b16 %v239, %v237
    %v268 = vpack.c.b16 %v240, %v238
    %v269 = vpack.c.b16 %v243, %v241
    %v270 = vpack.c.b16 %v244, %v242
    %v271 = vpack.c.b16 %v247, %v245
    %v272 = vpack.c.b16 %v248, %v246
    %v273 = vpack.c.b16 %v251, %v249
    %v274 = vpack.c.b16 %v252, %v250
    %v275 = vpack.c.b16 %v255, %v253
    %v276 = vpack.c.b16 %v256, %v254
    %v277 = vpack.c.b16 %v259, %v257
    %v278 = vpack.c.b16 %v260, %v258
    %v279 = vpack.c.b16 %v263, %v261
    %v280 = vpack.c.b16 %v264, %v262
    %297 = vmatprep.subr.bf16.mxu0 0
    %298 = vmatpush1.bf16.msra.mxu0 %v208
    %299 = vmatprep.subr.bf16.mxu0 0
    %300 = vmatpush1.bf16.msra.mxu0 %v207
    %301 = vmatprep.subr.bf16.mxu0 0
    %302 = vmatpush1.bf16.msra.mxu0 %v206
    %303 = vmatprep.subr.bf16.mxu0 0
    %304 = vmatpush1.bf16.msra.mxu0 %v205
    %305 = vmatprep.subr.bf16.mxu0 0
    %306 = vmatpush1.bf16.msra.mxu0 %v204
    %307 = vmatprep.subr.bf16.mxu0 0
    %308 = vmatpush1.bf16.msra.mxu0 %v203
    %309 = vmatprep.subr.bf16.mxu0 0
    %310 = vmatpush1.bf16.msra.mxu0 %v202
    %311 = vmatprep.subr.bf16.mxu0 0
    %312 = vmatpush1.bf16.msra.mxu0 %v201
    %313 = vmatprep.subr.bf16.mxu0 0
    %314 = vmatpush2.bf16.msra.mxu0 %v216
    %315 = vmatprep.subr.bf16.mxu0 0
    %316 = vmatpush2.bf16.msra.mxu0 %v215
    %317 = vmatprep.subr.bf16.mxu0 0
    %318 = vmatpush2.bf16.msra.mxu0 %v214
    %319 = vmatprep.subr.bf16.mxu0 0
    %320 = vmatpush2.bf16.msra.mxu0 %v213
    %321 = vmatprep.subr.bf16.mxu0 0
    %322 = vmatpush2.bf16.msra.mxu0 %v212
    %323 = vmatprep.subr.bf16.mxu0 0
    %324 = vmatpush2.bf16.msra.mxu0 %v211
    %325 = vmatprep.subr.bf16.mxu0 0
    %326 = vmatpush2.bf16.msra.mxu0 %v210
    %327 = vmatprep.subr.bf16.mxu0 0
    %328 = vmatpush2.bf16.msra.mxu0 %v209
    %329 = vmatprep.mubr.bf16.mxu0 %v266
    %330 = vmatmul.mubr.bf16.gmra.mxu0 %v265
    %v331 = vpop.f32.mrf.mxu0
    %v332 = vadd.f32 0.0, %v331
    %v333 = vpop.f32.mrf.mxu0
    %v334 = vpop.f32.mrf.mxu0
    %v335 = vadd.f32 0.0, %v334
    %v336 = vpop.f32.mrf.mxu0
    %337 = vmatprep.mubr.bf16.mxu0 %v268
    %338 = vmatmul.mubr.bf16.gmra.mxu0 %v267
    %v339 = vpop.f32.mrf.mxu0
    %v340 = vadd.f32 0.0, %v339
    %v341 = vpop.f32.mrf.mxu0
    %v342 = vpop.f32.mrf.mxu0
    %v343 = vadd.f32 0.0, %v342
    %v344 = vpop.f32.mrf.mxu0
    %345 = vmatprep.mubr.bf16.mxu0 %v270
    %346 = vmatmul.mubr.bf16.gmra.mxu0 %v269
    %v347 = vpop.f32.mrf.mxu0
    %v348 = vadd.f32 0.0, %v347
    %v349 = vpop.f32.mrf.mxu0
    %v350 = vpop.f32.mrf.mxu0
    %v351 = vadd.f32 0.0, %v350
    %v352 = vpop.f32.mrf.mxu0
    %353 = vmatprep.mubr.bf16.mxu0 %v272
    %354 = vmatmul.mubr.bf16.gmra.mxu0 %v271
    %v355 = vpop.f32.mrf.mxu0
    %v356 = vadd.f32 0.0, %v355
    %v357 = vpop.f32.mrf.mxu0
    %v358 = vpop.f32.mrf.mxu0
    %v359 = vadd.f32 0.0, %v358
    %v360 = vpop.f32.mrf.mxu0
    %361 = vmatprep.mubr.bf16.mxu0 %v274
    %362 = vmatmul.mubr.bf16.gmra.mxu0 %v273
    %v363 = vpop.f32.mrf.mxu0
    %v364 = vadd.f32 0.0, %v363
    %v365 = vpop.f32.mrf.mxu0
    %v366 = vpop.f32.mrf.mxu0
    %v367 = vadd.f32 0.0, %v366
    %v368 = vpop.f32.mrf.mxu0
    %369 = vmatprep.mubr.bf16.mxu0 %v276
    %370 = vmatmul.mubr.bf16.gmra.mxu0 %v275
    %v371 = vpop.f32.mrf.mxu0
    %v372 = vadd.f32 0.0, %v371
    %v373 = vpop.f32.mrf.mxu0
    %v374 = vpop.f32.mrf.mxu0
    %v375 = vadd.f32 0.0, %v374
    %v376 = vpop.f32.mrf.mxu0
    %377 = vmatprep.mubr.bf16.mxu0 %v278
    %378 = vmatmul.mubr.bf16.gmra.mxu0 %v277
    %v379 = vpop.f32.mrf.mxu0
    %v380 = vadd.f32 0.0, %v379
    %v381 = vpop.f32.mrf.mxu0
    %v382 = vpop.f32.mrf.mxu0
    %v383 = vadd.f32 0.0, %v382
    %v384 = vpop.f32.mrf.mxu0
    %385 = vmatprep.mubr.bf16.mxu0 %v280
    %386 = vmatmul.mubr.bf16.gmra.mxu0 %v279
    %v387 = vpop.f32.mrf.mxu0
    %v388 = vadd.f32 0.0, %v387
    %v389 = vpop.f32.mrf.mxu0
    %v390 = vpop.f32.mrf.mxu0
    %v391 = vadd.f32 0.0, %v390
    %v392 = vpop.f32.mrf.mxu0
    %393 = vdwg.mxu0
    %394 = vxpose.xlu0.c.b16.start [1/8] %v265, 128
    %395 = vxpose.xlu0.c.b16.cont [2/8] %v267, 128
    %396 = vxpose.xlu0.c.b16.cont [3/8] %v269, 128
    %397 = vxpose.xlu0.c.b16.cont [4/8] %v271, 128
    %398 = vxpose.xlu0.c.b16.cont [5/8] %v273, 128
    %399 = vxpose.xlu0.c.b16.cont [6/8] %v275, 128
    %400 = vxpose.xlu0.c.b16.cont [7/8] %v277, 128
    %401 = vxpose.xlu0.c.b16.end [8/8] %v279, 128
    %v402 = vpop.trf.xlu0
    %v403 = vpop.trf.xlu0
    %v404 = vpop.trf.xlu0
    %v405 = vpop.trf.xlu0
    %v406 = vpop.trf.xlu0
    %v407 = vpop.trf.xlu0
    %v408 = vpop.trf.xlu0
    %v409 = vpop.trf.xlu0
    %410 = vxpose.xlu0.c.b16.start [1/8] %v266, 128
    %411 = vxpose.xlu0.c.b16.cont [2/8] %v268, 128
    %412 = vxpose.xlu0.c.b16.cont [3/8] %v270, 128
    %413 = vxpose.xlu0.c.b16.cont [4/8] %v272, 128
    %414 = vxpose.xlu0.c.b16.cont [5/8] %v274, 128
    %415 = vxpose.xlu0.c.b16.cont [6/8] %v276, 128
    %416 = vxpose.xlu0.c.b16.cont [7/8] %v278, 128
    %417 = vxpose.xlu0.c.b16.end [8/8] %v280, 128
    %v418 = vpop.trf.xlu0
    %v419 = vpop.trf.xlu0
    %v420 = vpop.trf.xlu0
    %v421 = vpop.trf.xlu0
    %v422 = vpop.trf.xlu0
    %v423 = vpop.trf.xlu0
    %v424 = vpop.trf.xlu0
    %v425 = vpop.trf.xlu0
    %426 = vmatprep.subr.bf16.mxu0 0
    %427 = vmatpush1.bf16.msra.mxu0 %v200
    %428 = vmatprep.subr.bf16.mxu0 0
    %429 = vmatpush1.bf16.msra.mxu0 %v199
    %430 = vmatprep.subr.bf16.mxu0 0
    %431 = vmatpush1.bf16.msra.mxu0 %v198
    %432 = vmatprep.subr.bf16.mxu0 0
    %433 = vmatpush1.bf16.msra.mxu0 %v197
    %434 = vmatprep.subr.bf16.mxu0 0
    %435 = vmatpush1.bf16.msra.mxu0 %v196
    %436 = vmatprep.subr.bf16.mxu0 0
    %437 = vmatpush1.bf16.msra.mxu0 %v195
    %438 = vmatprep.subr.bf16.mxu0 0
    %439 = vmatpush1.bf16.msra.mxu0 %v194
    %440 = vmatprep.subr.bf16.mxu0 0
    %441 = vmatpush1.bf16.msra.mxu0 %v193
    %442 = vmatprep.subr.bf16.mxu0 0
    %443 = vmatpush2.bf16.msra.mxu0 0
    %444 = vmatprep.subr.bf16.mxu0 0
    %445 = vmatpush2.bf16.msra.mxu0 0
    %446 = vmatprep.subr.bf16.mxu0 0
    %447 = vmatpush2.bf16.msra.mxu0 0
    %448 = vmatprep.subr.bf16.mxu0 0
    %449 = vmatpush2.bf16.msra.mxu0 0
    %450 = vmatprep.subr.bf16.mxu0 0
    %451 = vmatpush2.bf16.msra.mxu0 0
    %452 = vmatprep.subr.bf16.mxu0 0
    %453 = vmatpush2.bf16.msra.mxu0 0
    %454 = vmatprep.subr.bf16.mxu0 0
    %455 = vmatpush2.bf16.msra.mxu0 0
    %456 = vmatprep.subr.bf16.mxu0 0
    %457 = vmatpush2.bf16.msra.mxu0 0
    %458 = vmatprep.mubr.bf16.mxu0 0
    %459 = vmatmul.mubr.bf16.gmra.mxu0 %v402
    %v460 = vpop.f32.mrf.mxu0
    %v461 = vadd.f32 0.0, %v460
    %v462 = vpop.f32.mrf.mxu0
    %v463 = vpop.f32.mrf.mxu0
    %v464 = vadd.f32 0.0, %v463
    %v465 = vpop.f32.mrf.mxu0
    %466 = vmatprep.mubr.bf16.mxu0 0
    %467 = vmatmul.mubr.bf16.gmra.mxu0 %v403
    %v468 = vpop.f32.mrf.mxu0
    %v469 = vadd.f32 0.0, %v468
    %v470 = vpop.f32.mrf.mxu0
    %v471 = vpop.f32.mrf.mxu0
    %v472 = vadd.f32 0.0, %v471
    %v473 = vpop.f32.mrf.mxu0
    %474 = vmatprep.mubr.bf16.mxu0 0
    %475 = vmatmul.mubr.bf16.gmra.mxu0 %v404
    %v476 = vpop.f32.mrf.mxu0
    %v477 = vadd.f32 0.0, %v476
    %v478 = vpop.f32.mrf.mxu0
    %v479 = vpop.f32.mrf.mxu0
    %v480 = vadd.f32 0.0, %v479
    %v481 = vpop.f32.mrf.mxu0
    %482 = vmatprep.mubr.bf16.mxu0 0
    %483 = vmatmul.mubr.bf16.gmra.mxu0 %v405
    %v484 = vpop.f32.mrf.mxu0
    %v485 = vadd.f32 0.0, %v484
    %v486 = vpop.f32.mrf.mxu0
    %v487 = vpop.f32.mrf.mxu0
    %v488 = vadd.f32 0.0, %v487
    %v489 = vpop.f32.mrf.mxu0
    %490 = vmatprep.mubr.bf16.mxu0 0
    %491 = vmatmul.mubr.bf16.gmra.mxu0 %v406
    %v492 = vpop.f32.mrf.mxu0
    %v493 = vadd.f32 0.0, %v492
    %v494 = vpop.f32.mrf.mxu0
    %v495 = vpop.f32.mrf.mxu0
    %v496 = vadd.f32 0.0, %v495
    %v497 = vpop.f32.mrf.mxu0
    %498 = vmatprep.mubr.bf16.mxu0 0
    %499 = vmatmul.mubr.bf16.gmra.mxu0 %v407
    %v500 = vpop.f32.mrf.mxu0
    %v501 = vadd.f32 0.0, %v500
    %v502 = vpop.f32.mrf.mxu0
    %v503 = vpop.f32.mrf.mxu0
    %v504 = vadd.f32 0.0, %v503
    %v505 = vpop.f32.mrf.mxu0
    %506 = vmatprep.mubr.bf16.mxu0 0
    %507 = vmatmul.mubr.bf16.gmra.mxu0 %v408
    %v508 = vpop.f32.mrf.mxu0
    %v509 = vadd.f32 0.0, %v508
    %v510 = vpop.f32.mrf.mxu0
    %v511 = vpop.f32.mrf.mxu0
    %v512 = vadd.f32 0.0, %v511
    %v513 = vpop.f32.mrf.mxu0
    %514 = vmatprep.mubr.bf16.mxu0 0
    %515 = vmatmul.mubr.bf16.gmra.mxu0 %v409
    %v516 = vpop.f32.mrf.mxu0
    %v517 = vadd.f32 0.0, %v516
    %v518 = vpop.f32.mrf.mxu0
    %v519 = vpop.f32.mrf.mxu0
    %v520 = vadd.f32 0.0, %v519
    %v521 = vpop.f32.mrf.mxu0
    %522 = vmatprep.mubr.bf16.mxu0 0
    %523 = vmatmul.mubr.bf16.gmra.mxu0 %v418
    %v524 = vpop.f32.mrf.mxu0
    %v525 = vadd.f32 0.0, %v524
    %v526 = vpop.f32.mrf.mxu0
    %v527 = vpop.f32.mrf.mxu0
    %v528 = vadd.f32 0.0, %v527
    %v529 = vpop.f32.mrf.mxu0
    %530 = vmatprep.mubr.bf16.mxu0 0
    %531 = vmatmul.mubr.bf16.gmra.mxu0 %v419
    %v532 = vpop.f32.mrf.mxu0
    %v533 = vadd.f32 0.0, %v532
    %v534 = vpop.f32.mrf.mxu0
    %v535 = vpop.f32.mrf.mxu0
    %v536 = vadd.f32 0.0, %v535
    %v537 = vpop.f32.mrf.mxu0
    %538 = vmatprep.mubr.bf16.mxu0 0
    %539 = vmatmul.mubr.bf16.gmra.mxu0 %v420
    %v540 = vpop.f32.mrf.mxu0
    %v541 = vadd.f32 0.0, %v540
    %v542 = vpop.f32.mrf.mxu0
    %v543 = vpop.f32.mrf.mxu0
    %v544 = vadd.f32 0.0, %v543
    %v545 = vpop.f32.mrf.mxu0
    %546 = vmatprep.mubr.bf16.mxu0 0
    %547 = vmatmul.mubr.bf16.gmra.mxu0 %v421
    %v548 = vpop.f32.mrf.mxu0
    %v549 = vadd.f32 0.0, %v548
    %v550 = vpop.f32.mrf.mxu0
    %v551 = vpop.f32.mrf.mxu0
    %v552 = vadd.f32 0.0, %v551
    %v553 = vpop.f32.mrf.mxu0
    %554 = vmatprep.mubr.bf16.mxu0 0
    %555 = vmatmul.mubr.bf16.gmra.mxu0 %v422
    %v556 = vpop.f32.mrf.mxu0
    %v557 = vadd.f32 0.0, %v556
    %v558 = vpop.f32.mrf.mxu0
    %v559 = vpop.f32.mrf.mxu0
    %v560 = vadd.f32 0.0, %v559
    %v561 = vpop.f32.mrf.mxu0
    %562 = vmatprep.mubr.bf16.mxu0 0
    %563 = vmatmul.mubr.bf16.gmra.mxu0 %v423
    %v564 = vpop.f32.mrf.mxu0
    %v565 = vadd.f32 0.0, %v564
    %v566 = vpop.f32.mrf.mxu0
    %v567 = vpop.f32.mrf.mxu0
    %v568 = vadd.f32 0.0, %v567
    %v569 = vpop.f32.mrf.mxu0
    %570 = vmatprep.mubr.bf16.mxu0 0
    %571 = vmatmul.mubr.bf16.gmra.mxu0 %v424
    %v572 = vpop.f32.mrf.mxu0
    %v573 = vadd.f32 0.0, %v572
    %v574 = vpop.f32.mrf.mxu0
    %v575 = vpop.f32.mrf.mxu0
    %v576 = vadd.f32 0.0, %v575
    %v577 = vpop.f32.mrf.mxu0
    %578 = vmatprep.mubr.bf16.mxu0 0
    %579 = vmatmul.mubr.bf16.gmra.mxu0 %v425
    %v580 = vpop.f32.mrf.mxu0
    %v581 = vadd.f32 0.0, %v580
    %v582 = vpop.f32.mrf.mxu0
    %v583 = vpop.f32.mrf.mxu0
    %v584 = vadd.f32 0.0, %v583
    %v585 = vpop.f32.mrf.mxu0
    %586 = vdwg.mxu0
    %587 = vmatprep.subr.mxu0 0.0
    %588 = vmatpush1.msra.mxu0 %v176
    %589 = vmatprep.subr.mxu0 0.0
    %590 = vmatpush1.msra.mxu0 %v175
    %591 = vmatprep.subr.mxu0 0.0
    %592 = vmatpush1.msra.mxu0 %v174
    %593 = vmatprep.subr.mxu0 0.0
    %594 = vmatpush1.msra.mxu0 %v173
    %595 = vmatprep.subr.mxu0 0.0
    %596 = vmatpush1.msra.mxu0 %v172
    %597 = vmatprep.subr.mxu0 0.0
    %598 = vmatpush1.msra.mxu0 %v171
    %599 = vmatprep.subr.mxu0 0.0
    %600 = vmatpush1.msra.mxu0 %v170
    %601 = vmatprep.subr.mxu0 0.0
    %602 = vmatpush1.msra.mxu0 %v169
    %603 = vmatprep.subr.mxu0 0.0
    %604 = vmatpush1.msra.mxu0 %v168
    %605 = vmatprep.subr.mxu0 0.0
    %606 = vmatpush1.msra.mxu0 %v167
    %607 = vmatprep.subr.mxu0 0.0
    %608 = vmatpush1.msra.mxu0 %v166
    %609 = vmatprep.subr.mxu0 0.0
    %610 = vmatpush1.msra.mxu0 %v165
    %611 = vmatprep.subr.mxu0 0.0
    %612 = vmatpush1.msra.mxu0 %v164
    %613 = vmatprep.subr.mxu0 0.0
    %614 = vmatpush1.msra.mxu0 %v163
    %615 = vmatprep.subr.mxu0 0.0
    %616 = vmatpush1.msra.mxu0 %v162
    %617 = vmatprep.subr.mxu0 0.0
    %618 = vmatpush1.msra.mxu0 %v161
    %619 = vmatprep.subr.mxu0 0.0
    %620 = vmatpush2.msra.mxu0 %v192
    %621 = vmatprep.subr.mxu0 0.0
    %622 = vmatpush2.msra.mxu0 %v191
    %623 = vmatprep.subr.mxu0 0.0
    %624 = vmatpush2.msra.mxu0 %v190
    %625 = vmatprep.subr.mxu0 0.0
    %626 = vmatpush2.msra.mxu0 %v189
    %627 = vmatprep.subr.mxu0 0.0
    %628 = vmatpush2.msra.mxu0 %v188
    %629 = vmatprep.subr.mxu0 0.0
    %630 = vmatpush2.msra.mxu0 %v187
    %631 = vmatprep.subr.mxu0 0.0
    %632 = vmatpush2.msra.mxu0 %v186
    %633 = vmatprep.subr.mxu0 0.0
    %634 = vmatpush2.msra.mxu0 %v185
    %635 = vmatprep.subr.mxu0 0.0
    %636 = vmatpush2.msra.mxu0 %v184
    %637 = vmatprep.subr.mxu0 0.0
    %638 = vmatpush2.msra.mxu0 %v183
    %639 = vmatprep.subr.mxu0 0.0
    %640 = vmatpush2.msra.mxu0 %v182
    %641 = vmatprep.subr.mxu0 0.0
    %642 = vmatpush2.msra.mxu0 %v181
    %643 = vmatprep.subr.mxu0 0.0
    %644 = vmatpush2.msra.mxu0 %v180
    %645 = vmatprep.subr.mxu0 0.0
    %646 = vmatpush2.msra.mxu0 %v179
    %647 = vmatprep.subr.mxu0 0.0
    %648 = vmatpush2.msra.mxu0 %v178
    %649 = vmatprep.subr.mxu0 0.0
    %650 = vmatpush2.msra.mxu0 %v177
    %651 = vmatprep.mubr.f32.mxu0 %v96
    %652 = vmatmul.mubr.f32.gmra.mxu0 %v95
    %v653 = vpop.f32.mrf.mxu0
    %v654 = vadd.f32 0.0, %v653
    %v655 = vpop.f32.mrf.mxu0
    %656 = vdwg.mxu0
    %vm657 = vcmask 64512
    %v659 = vsel %vm657, %v97, 0
    %v662 = vsel %vm657, %v98, 0
    %v665 = vsel %vm657, %v99, 0
    %v668 = vsel %vm657, %v100, 0
    %v671 = vsel %vm657, %v101, 0
    %v674 = vsel %vm657, %v102, 0
    %v677 = vsel %vm657, %v103, 0
    %v680 = vsel %vm657, %v104, 0
    %v683 = vsel %vm657, %v105, 0
    %v686 = vsel %vm657, %v106, 0
    %v689 = vsel %vm657, %v107, 0
    %v692 = vsel %vm657, %v108, 0
    %v695 = vsel %vm657, %v109, 0
    %v698 = vsel %vm657, %v110, 0
    %v701 = vsel %vm657, %v111, 0
    %v704 = vsel %vm657, %v112, 0
    %706 = vmatprep.subr.mxu0 0.0
    %707 = vmatpush1.msra.mxu0 0.0
    %708 = vmatprep.subr.mxu0 0.0
    %709 = vmatpush1.msra.mxu0 0.0
    %710 = vmatprep.subr.mxu0 0.0
    %711 = vmatpush1.msra.mxu0 0.0
    %712 = vmatprep.subr.mxu0 0.0
    %713 = vmatpush1.msra.mxu0 0.0
    %714 = vmatprep.subr.mxu0 0.0
    %715 = vmatpush1.msra.mxu0 0.0
    %716 = vmatprep.subr.mxu0 0.0
    %717 = vmatpush1.msra.mxu0 0.0
    %718 = vmatprep.subr.mxu0 0.0
    %719 = vmatpush1.msra.mxu0 0.0
    %720 = vmatprep.subr.mxu0 0.0
    %721 = vmatpush1.msra.mxu0 0.0
    %722 = vmatprep.subr.mxu0 0.0
    %723 = vmatpush1.msra.mxu0 0.0
    %724 = vmatprep.subr.mxu0 0.0
    %725 = vmatpush1.msra.mxu0 0.0
    %726 = vmatprep.subr.mxu0 0.0
    %727 = vmatpush1.msra.mxu0 0.0
    %728 = vmatprep.subr.mxu0 0.0
    %729 = vmatpush1.msra.mxu0 0.0
    %730 = vmatprep.subr.mxu0 0.0
    %731 = vmatpush1.msra.mxu0 0.0
    %732 = vmatprep.subr.mxu0 0.0
    %733 = vmatpush1.msra.mxu0 0.0
    %734 = vmatprep.subr.mxu0 0.0
    %735 = vmatpush1.msra.mxu0 0.0
    %736 = vmatprep.subr.mxu0 0.0
    %737 = vmatpush1.msra.mxu0 %v654
    %738 = vmatprep.subr.mxu0 0.0
    %739 = vmatpush2.msra.mxu0 0.0
    %740 = vmatprep.subr.mxu0 0.0
    %741 = vmatpush2.msra.mxu0 0.0
    %742 = vmatprep.subr.mxu0 0.0
    %743 = vmatpush2.msra.mxu0 0.0
    %744 = vmatprep.subr.mxu0 0.0
    %745 = vmatpush2.msra.mxu0 0.0
    %746 = vmatprep.subr.mxu0 0.0
    %747 = vmatpush2.msra.mxu0 0.0
    %748 = vmatprep.subr.mxu0 0.0
    %749 = vmatpush2.msra.mxu0 0.0
    %750 = vmatprep.subr.mxu0 0.0
    %751 = vmatpush2.msra.mxu0 0.0
    %752 = vmatprep.subr.mxu0 0.0
    %753 = vmatpush2.msra.mxu0 0.0
    %754 = vmatprep.subr.mxu0 0.0
    %755 = vmatpush2.msra.mxu0 0.0
    %756 = vmatprep.subr.mxu0 0.0
    %757 = vmatpush2.msra.mxu0 0.0
    %758 = vmatprep.subr.mxu0 0.0
    %759 = vmatpush2.msra.mxu0 0.0
    %760 = vmatprep.subr.mxu0 0.0
    %761 = vmatpush2.msra.mxu0 0.0
    %762 = vmatprep.subr.mxu0 0.0
    %763 = vmatpush2.msra.mxu0 0.0
    %764 = vmatprep.subr.mxu0 0.0
    %765 = vmatpush2.msra.mxu0 0.0
    %766 = vmatprep.subr.mxu0 0.0
    %767 = vmatpush2.msra.mxu0 0.0
    %768 = vmatprep.subr.mxu0 0.0
    %769 = vmatpush2.msra.mxu0 0.0
    %770 = vmatprep.mubr.f32.mxu0 0.0
    %771 = vmatmul.mubr.f32.gmra.mxu0 %v659
    %v772 = vpop.f32.mrf.mxu0
    %v773 = vadd.f32 0.0, %v772
    %v774 = vpop.f32.mrf.mxu0
    %775 = vmatprep.mubr.f32.mxu0 0.0
    %776 = vmatmul.mubr.f32.gmra.mxu0 %v662
    %v777 = vpop.f32.mrf.mxu0
    %v778 = vadd.f32 0.0, %v777
    %v779 = vpop.f32.mrf.mxu0
    %780 = vmatprep.mubr.f32.mxu0 0.0
    %781 = vmatmul.mubr.f32.gmra.mxu0 %v665
    %v782 = vpop.f32.mrf.mxu0
    %v783 = vadd.f32 0.0, %v782
    %v784 = vpop.f32.mrf.mxu0
    %785 = vmatprep.mubr.f32.mxu0 0.0
    %786 = vmatmul.mubr.f32.gmra.mxu0 %v668
    %v787 = vpop.f32.mrf.mxu0
    %v788 = vadd.f32 0.0, %v787
    %v789 = vpop.f32.mrf.mxu0
    %790 = vmatprep.mubr.f32.mxu0 0.0
    %791 = vmatmul.mubr.f32.gmra.mxu0 %v671
    %v792 = vpop.f32.mrf.mxu0
    %v793 = vadd.f32 0.0, %v792
    %v794 = vpop.f32.mrf.mxu0
    %795 = vmatprep.mubr.f32.mxu0 0.0
    %796 = vmatmul.mubr.f32.gmra.mxu0 %v674
    %v797 = vpop.f32.mrf.mxu0
    %v798 = vadd.f32 0.0, %v797
    %v799 = vpop.f32.mrf.mxu0
    %800 = vmatprep.mubr.f32.mxu0 0.0
    %801 = vmatmul.mubr.f32.gmra.mxu0 %v677
    %v802 = vpop.f32.mrf.mxu0
    %v803 = vadd.f32 0.0, %v802
    %v804 = vpop.f32.mrf.mxu0
    %805 = vmatprep.mubr.f32.mxu0 0.0
    %806 = vmatmul.mubr.f32.gmra.mxu0 %v680
    %v807 = vpop.f32.mrf.mxu0
    %v808 = vadd.f32 0.0, %v807
    %v809 = vpop.f32.mrf.mxu0
    %810 = vmatprep.mubr.f32.mxu0 0.0
    %811 = vmatmul.mubr.f32.gmra.mxu0 %v683
    %v812 = vpop.f32.mrf.mxu0
    %v813 = vadd.f32 0.0, %v812
    %v814 = vpop.f32.mrf.mxu0
    %815 = vmatprep.mubr.f32.mxu0 0.0
    %816 = vmatmul.mubr.f32.gmra.mxu0 %v686
    %v817 = vpop.f32.mrf.mxu0
    %v818 = vadd.f32 0.0, %v817
    %v819 = vpop.f32.mrf.mxu0
    %820 = vmatprep.mubr.f32.mxu0 0.0
    %821 = vmatmul.mubr.f32.gmra.mxu0 %v689
    %v822 = vpop.f32.mrf.mxu0
    %v823 = vadd.f32 0.0, %v822
    %v824 = vpop.f32.mrf.mxu0
    %825 = vmatprep.mubr.f32.mxu0 0.0
    %826 = vmatmul.mubr.f32.gmra.mxu0 %v692
    %v827 = vpop.f32.mrf.mxu0
    %v828 = vadd.f32 0.0, %v827
    %v829 = vpop.f32.mrf.mxu0
    %830 = vmatprep.mubr.f32.mxu0 0.0
    %831 = vmatmul.mubr.f32.gmra.mxu0 %v695
    %v832 = vpop.f32.mrf.mxu0
    %v833 = vadd.f32 0.0, %v832
    %v834 = vpop.f32.mrf.mxu0
    %835 = vmatprep.mubr.f32.mxu0 0.0
    %836 = vmatmul.mubr.f32.gmra.mxu0 %v698
    %v837 = vpop.f32.mrf.mxu0
    %v838 = vadd.f32 0.0, %v837
    %v839 = vpop.f32.mrf.mxu0
    %840 = vmatprep.mubr.f32.mxu0 0.0
    %841 = vmatmul.mubr.f32.gmra.mxu0 %v701
    %v842 = vpop.f32.mrf.mxu0
    %v843 = vadd.f32 0.0, %v842
    %v844 = vpop.f32.mrf.mxu0
    %845 = vmatprep.mubr.f32.mxu0 0.0
    %846 = vmatmul.mubr.f32.gmra.mxu0 %v704
    %v847 = vpop.f32.mrf.mxu0
    %v848 = vadd.f32 0.0, %v847
    %v849 = vpop.f32.mrf.mxu0
    %850 = vdwg.mxu0
    %851 = vmatprep.subr.mxu0 0.0
    %852 = vmatpush1.msra.mxu0 %v160
    %853 = vmatprep.subr.mxu0 0.0
    %854 = vmatpush1.msra.mxu0 %v159
    %855 = vmatprep.subr.mxu0 0.0
    %856 = vmatpush1.msra.mxu0 %v158
    %857 = vmatprep.subr.mxu0 0.0
    %858 = vmatpush1.msra.mxu0 %v157
    %859 = vmatprep.subr.mxu0 0.0
    %860 = vmatpush1.msra.mxu0 %v156
    %861 = vmatprep.subr.mxu0 0.0
    %862 = vmatpush1.msra.mxu0 %v155
    %863 = vmatprep.subr.mxu0 0.0
    %864 = vmatpush1.msra.mxu0 %v154
    %865 = vmatprep.subr.mxu0 0.0
    %866 = vmatpush1.msra.mxu0 %v153
    %867 = vmatprep.subr.mxu0 0.0
    %868 = vmatpush1.msra.mxu0 %v152
    %869 = vmatprep.subr.mxu0 0.0
    %870 = vmatpush1.msra.mxu0 %v151
    %871 = vmatprep.subr.mxu0 0.0
    %872 = vmatpush1.msra.mxu0 %v150
    %873 = vmatprep.subr.mxu0 0.0
    %874 = vmatpush1.msra.mxu0 %v149
    %875 = vmatprep.subr.mxu0 0.0
    %876 = vmatpush1.msra.mxu0 %v148
    %877 = vmatprep.subr.mxu0 0.0
    %878 = vmatpush1.msra.mxu0 %v147
    %879 = vmatprep.subr.mxu0 0.0
    %880 = vmatpush1.msra.mxu0 %v146
    %881 = vmatprep.subr.mxu0 0.0
    %882 = vmatpush1.msra.mxu0 %v145
    %883 = vmatprep.subr.mxu0 0.0
    %884 = vmatpush2.msra.mxu0 0.0
    %885 = vmatprep.subr.mxu0 0.0
    %886 = vmatpush2.msra.mxu0 0.0
    %887 = vmatprep.subr.mxu0 0.0
    %888 = vmatpush2.msra.mxu0 0.0
    %889 = vmatprep.subr.mxu0 0.0
    %890 = vmatpush2.msra.mxu0 0.0
    %891 = vmatprep.subr.mxu0 0.0
    %892 = vmatpush2.msra.mxu0 0.0
    %893 = vmatprep.subr.mxu0 0.0
    %894 = vmatpush2.msra.mxu0 0.0
    %895 = vmatprep.subr.mxu0 0.0
    %896 = vmatpush2.msra.mxu0 0.0
    %897 = vmatprep.subr.mxu0 0.0
    %898 = vmatpush2.msra.mxu0 0.0
    %899 = vmatprep.subr.mxu0 0.0
    %900 = vmatpush2.msra.mxu0 0.0
    %901 = vmatprep.subr.mxu0 0.0
    %902 = vmatpush2.msra.mxu0 0.0
    %903 = vmatprep.subr.mxu0 0.0
    %904 = vmatpush2.msra.mxu0 0.0
    %905 = vmatprep.subr.mxu0 0.0
    %906 = vmatpush2.msra.mxu0 0.0
    %907 = vmatprep.subr.mxu0 0.0
    %908 = vmatpush2.msra.mxu0 0.0
    %909 = vmatprep.subr.mxu0 0.0
    %910 = vmatpush2.msra.mxu0 0.0
    %911 = vmatprep.subr.mxu0 0.0
    %912 = vmatpush2.msra.mxu0 0.0
    %913 = vmatprep.subr.mxu0 0.0
    %914 = vmatpush2.msra.mxu0 0.0
    %915 = vmatprep.mubr.f32.mxu0 0.0
    %916 = vmatmul.mubr.f32.gmra.mxu0 %v94
    %v917 = vpop.f32.mrf.mxu0
    %v918 = vadd.f32 0.0, %v917
    %v919 = vpop.f32.mrf.mxu0
    %920 = vdwg.mxu0
    %v922 = vsel %vm657, %v113, 0
    %v925 = vsel %vm657, %v114, 0
    %v928 = vsel %vm657, %v115, 0
    %v931 = vsel %vm657, %v116, 0
    %v934 = vsel %vm657, %v117, 0
    %v937 = vsel %vm657, %v118, 0
    %v940 = vsel %vm657, %v119, 0
    %v943 = vsel %vm657, %v120, 0
    %v946 = vsel %vm657, %v121, 0
    %v949 = vsel %vm657, %v122, 0
    %v952 = vsel %vm657, %v123, 0
    %v955 = vsel %vm657, %v124, 0
    %v958 = vsel %vm657, %v125, 0
    %v961 = vsel %vm657, %v126, 0
    %v964 = vsel %vm657, %v127, 0
    %v967 = vsel %vm657, %v128, 0
    %v970 = vsel %vm657, %v129, 0
    %v973 = vsel %vm657, %v130, 0
    %v976 = vsel %vm657, %v131, 0
    %v979 = vsel %vm657, %v132, 0
    %v982 = vsel %vm657, %v133, 0
    %v985 = vsel %vm657, %v134, 0
    %v988 = vsel %vm657, %v135, 0
    %v991 = vsel %vm657, %v136, 0
    %v994 = vsel %vm657, %v137, 0
    %v997 = vsel %vm657, %v138, 0
    %v1000 = vsel %vm657, %v139, 0
    %v1003 = vsel %vm657, %v140, 0
    %v1006 = vsel %vm657, %v141, 0
    %v1009 = vsel %vm657, %v142, 0
    %v1012 = vsel %vm657, %v143, 0
    %v1015 = vsel %vm657, %v144, 0
    %1017 = vmatprep.subr.mxu0 0.0
    %1018 = vmatpush1.msra.mxu0 0.0
    %1019 = vmatprep.subr.mxu0 0.0
    %1020 = vmatpush1.msra.mxu0 0.0
    %1021 = vmatprep.subr.mxu0 0.0
    %1022 = vmatpush1.msra.mxu0 0.0
    %1023 = vmatprep.subr.mxu0 0.0
    %1024 = vmatpush1.msra.mxu0 0.0
    %1025 = vmatprep.subr.mxu0 0.0
    %1026 = vmatpush1.msra.mxu0 0.0
    %1027 = vmatprep.subr.mxu0 0.0
    %1028 = vmatpush1.msra.mxu0 0.0
    %1029 = vmatprep.subr.mxu0 0.0
    %1030 = vmatpush1.msra.mxu0 0.0
    %1031 = vmatprep.subr.mxu0 0.0
    %1032 = vmatpush1.msra.mxu0 0.0
    %1033 = vmatprep.subr.mxu0 0.0
    %1034 = vmatpush1.msra.mxu0 0.0
    %1035 = vmatprep.subr.mxu0 0.0
    %1036 = vmatpush1.msra.mxu0 0.0
    %1037 = vmatprep.subr.mxu0 0.0
    %1038 = vmatpush1.msra.mxu0 0.0
    %1039 = vmatprep.subr.mxu0 0.0
    %1040 = vmatpush1.msra.mxu0 0.0
    %1041 = vmatprep.subr.mxu0 0.0
    %1042 = vmatpush1.msra.mxu0 0.0
    %1043 = vmatprep.subr.mxu0 0.0
    %1044 = vmatpush1.msra.mxu0 0.0
    %1045 = vmatprep.subr.mxu0 0.0
    %1046 = vmatpush1.msra.mxu0 0.0
    %1047 = vmatprep.subr.mxu0 0.0
    %1048 = vmatpush1.msra.mxu0 %v918
    %1049 = vmatprep.subr.mxu0 0.0
    %1050 = vmatpush2.msra.mxu0 0.0
    %1051 = vmatprep.subr.mxu0 0.0
    %1052 = vmatpush2.msra.mxu0 0.0
    %1053 = vmatprep.subr.mxu0 0.0
    %1054 = vmatpush2.msra.mxu0 0.0
    %1055 = vmatprep.subr.mxu0 0.0
    %1056 = vmatpush2.msra.mxu0 0.0
    %1057 = vmatprep.subr.mxu0 0.0
    %1058 = vmatpush2.msra.mxu0 0.0
    %1059 = vmatprep.subr.mxu0 0.0
    %1060 = vmatpush2.msra.mxu0 0.0
    %1061 = vmatprep.subr.mxu0 0.0
    %1062 = vmatpush2.msra.mxu0 0.0
    %1063 = vmatprep.subr.mxu0 0.0
    %1064 = vmatpush2.msra.mxu0 0.0
    %1065 = vmatprep.subr.mxu0 0.0
    %1066 = vmatpush2.msra.mxu0 0.0
    %1067 = vmatprep.subr.mxu0 0.0
    %1068 = vmatpush2.msra.mxu0 0.0
    %1069 = vmatprep.subr.mxu0 0.0
    %1070 = vmatpush2.msra.mxu0 0.0
    %1071 = vmatprep.subr.mxu0 0.0
    %1072 = vmatpush2.msra.mxu0 0.0
    %1073 = vmatprep.subr.mxu0 0.0
    %1074 = vmatpush2.msra.mxu0 0.0
    %1075 = vmatprep.subr.mxu0 0.0
    %1076 = vmatpush2.msra.mxu0 0.0
    %1077 = vmatprep.subr.mxu0 0.0
    %1078 = vmatpush2.msra.mxu0 0.0
    %1079 = vmatprep.subr.mxu0 0.0
    %1080 = vmatpush2.msra.mxu0 0.0
    %1081 = vmatprep.mubr.f32.mxu0 0.0
    %1082 = vmatmul.mubr.f32.gmra.mxu0 %v922
    %v1083 = vpop.f32.mrf.mxu0
    %v1084 = vadd.f32 0.0, %v1083
    %v1085 = vpop.f32.mrf.mxu0
    %1086 = vmatprep.mubr.f32.mxu0 0.0
    %1087 = vmatmul.mubr.f32.gmra.mxu0 %v925
    %v1088 = vpop.f32.mrf.mxu0
    %v1089 = vadd.f32 0.0, %v1088
    %v1090 = vpop.f32.mrf.mxu0
    %1091 = vmatprep.mubr.f32.mxu0 0.0
    %1092 = vmatmul.mubr.f32.gmra.mxu0 %v928
    %v1093 = vpop.f32.mrf.mxu0
    %v1094 = vadd.f32 0.0, %v1093
    %v1095 = vpop.f32.mrf.mxu0
    %1096 = vmatprep.mubr.f32.mxu0 0.0
    %1097 = vmatmul.mubr.f32.gmra.mxu0 %v931
    %v1098 = vpop.f32.mrf.mxu0
    %v1099 = vadd.f32 0.0, %v1098
    %v1100 = vpop.f32.mrf.mxu0
    %1101 = vmatprep.mubr.f32.mxu0 0.0
    %1102 = vmatmul.mubr.f32.gmra.mxu0 %v934
    %v1103 = vpop.f32.mrf.mxu0
    %v1104 = vadd.f32 0.0, %v1103
    %v1105 = vpop.f32.mrf.mxu0
    %1106 = vmatprep.mubr.f32.mxu0 0.0
    %1107 = vmatmul.mubr.f32.gmra.mxu0 %v937
    %v1108 = vpop.f32.mrf.mxu0
    %v1109 = vadd.f32 0.0, %v1108
    %v1110 = vpop.f32.mrf.mxu0
    %1111 = vmatprep.mubr.f32.mxu0 0.0
    %1112 = vmatmul.mubr.f32.gmra.mxu0 %v940
    %v1113 = vpop.f32.mrf.mxu0
    %v1114 = vadd.f32 0.0, %v1113
    %v1115 = vpop.f32.mrf.mxu0
    %1116 = vmatprep.mubr.f32.mxu0 0.0
    %1117 = vmatmul.mubr.f32.gmra.mxu0 %v943
    %v1118 = vpop.f32.mrf.mxu0
    %v1119 = vadd.f32 0.0, %v1118
    %v1120 = vpop.f32.mrf.mxu0
    %1121 = vmatprep.mubr.f32.mxu0 0.0
    %1122 = vmatmul.mubr.f32.gmra.mxu0 %v946
    %v1123 = vpop.f32.mrf.mxu0
    %v1124 = vadd.f32 0.0, %v1123
    %v1125 = vpop.f32.mrf.mxu0
    %1126 = vmatprep.mubr.f32.mxu0 0.0
    %1127 = vmatmul.mubr.f32.gmra.mxu0 %v949
    %v1128 = vpop.f32.mrf.mxu0
    %v1129 = vadd.f32 0.0, %v1128
    %v1130 = vpop.f32.mrf.mxu0
    %1131 = vmatprep.mubr.f32.mxu0 0.0
    %1132 = vmatmul.mubr.f32.gmra.mxu0 %v952
    %v1133 = vpop.f32.mrf.mxu0
    %v1134 = vadd.f32 0.0, %v1133
    %v1135 = vpop.f32.mrf.mxu0
    %1136 = vmatprep.mubr.f32.mxu0 0.0
    %1137 = vmatmul.mubr.f32.gmra.mxu0 %v955
    %v1138 = vpop.f32.mrf.mxu0
    %v1139 = vadd.f32 0.0, %v1138
    %v1140 = vpop.f32.mrf.mxu0
    %1141 = vmatprep.mubr.f32.mxu0 0.0
    %1142 = vmatmul.mubr.f32.gmra.mxu0 %v958
    %v1143 = vpop.f32.mrf.mxu0
    %v1144 = vadd.f32 0.0, %v1143
    %v1145 = vpop.f32.mrf.mxu0
    %1146 = vmatprep.mubr.f32.mxu0 0.0
    %1147 = vmatmul.mubr.f32.gmra.mxu0 %v961
    %v1148 = vpop.f32.mrf.mxu0
    %v1149 = vadd.f32 0.0, %v1148
    %v1150 = vpop.f32.mrf.mxu0
    %1151 = vmatprep.mubr.f32.mxu0 0.0
    %1152 = vmatmul.mubr.f32.gmra.mxu0 %v964
    %v1153 = vpop.f32.mrf.mxu0
    %v1154 = vadd.f32 0.0, %v1153
    %v1155 = vpop.f32.mrf.mxu0
    %1156 = vmatprep.mubr.f32.mxu0 0.0
    %1157 = vmatmul.mubr.f32.gmra.mxu0 %v967
    %v1158 = vpop.f32.mrf.mxu0
    %v1159 = vadd.f32 0.0, %v1158
    %v1160 = vpop.f32.mrf.mxu0
    %1161 = vmatprep.mubr.f32.mxu0 0.0
    %1162 = vmatmul.mubr.f32.gmra.mxu0 %v970
    %v1163 = vpop.f32.mrf.mxu0
    %v1164 = vadd.f32 0.0, %v1163
    %v1165 = vpop.f32.mrf.mxu0
    %1166 = vmatprep.mubr.f32.mxu0 0.0
    %1167 = vmatmul.mubr.f32.gmra.mxu0 %v973
    %v1168 = vpop.f32.mrf.mxu0
    %v1169 = vadd.f32 0.0, %v1168
    %v1170 = vpop.f32.mrf.mxu0
    %1171 = vmatprep.mubr.f32.mxu0 0.0
    %1172 = vmatmul.mubr.f32.gmra.mxu0 %v976
    %v1173 = vpop.f32.mrf.mxu0
    %v1174 = vadd.f32 0.0, %v1173
    %v1175 = vpop.f32.mrf.mxu0
    %1176 = vmatprep.mubr.f32.mxu0 0.0
    %1177 = vmatmul.mubr.f32.gmra.mxu0 %v979
    %v1178 = vpop.f32.mrf.mxu0
    %v1179 = vadd.f32 0.0, %v1178
    %v1180 = vpop.f32.mrf.mxu0
    %1181 = vmatprep.mubr.f32.mxu0 0.0
    %1182 = vmatmul.mubr.f32.gmra.mxu0 %v982
    %v1183 = vpop.f32.mrf.mxu0
    %v1184 = vadd.f32 0.0, %v1183
    %v1185 = vpop.f32.mrf.mxu0
    %1186 = vmatprep.mubr.f32.mxu0 0.0
    %1187 = vmatmul.mubr.f32.gmra.mxu0 %v985
    %v1188 = vpop.f32.mrf.mxu0
    %v1189 = vadd.f32 0.0, %v1188
    %v1190 = vpop.f32.mrf.mxu0
    %1191 = vmatprep.mubr.f32.mxu0 0.0
    %1192 = vmatmul.mubr.f32.gmra.mxu0 %v988
    %v1193 = vpop.f32.mrf.mxu0
    %v1194 = vadd.f32 0.0, %v1193
    %v1195 = vpop.f32.mrf.mxu0
    %1196 = vmatprep.mubr.f32.mxu0 0.0
    %1197 = vmatmul.mubr.f32.gmra.mxu0 %v991
    %v1198 = vpop.f32.mrf.mxu0
    %v1199 = vadd.f32 0.0, %v1198
    %v1200 = vpop.f32.mrf.mxu0
    %1201 = vmatprep.mubr.f32.mxu0 0.0
    %1202 = vmatmul.mubr.f32.gmra.mxu0 %v994
    %v1203 = vpop.f32.mrf.mxu0
    %v1204 = vadd.f32 0.0, %v1203
    %v1205 = vpop.f32.mrf.mxu0
    %1206 = vmatprep.mubr.f32.mxu0 0.0
    %1207 = vmatmul.mubr.f32.gmra.mxu0 %v997
    %v1208 = vpop.f32.mrf.mxu0
    %v1209 = vadd.f32 0.0, %v1208
    %v1210 = vpop.f32.mrf.mxu0
    %1211 = vmatprep.mubr.f32.mxu0 0.0
    %1212 = vmatmul.mubr.f32.gmra.mxu0 %v1000
    %v1213 = vpop.f32.mrf.mxu0
    %v1214 = vadd.f32 0.0, %v1213
    %v1215 = vpop.f32.mrf.mxu0
    %1216 = vmatprep.mubr.f32.mxu0 0.0
    %1217 = vmatmul.mubr.f32.gmra.mxu0 %v1003
    %v1218 = vpop.f32.mrf.mxu0
    %v1219 = vadd.f32 0.0, %v1218
    %v1220 = vpop.f32.mrf.mxu0
    %1221 = vmatprep.mubr.f32.mxu0 0.0
    %1222 = vmatmul.mubr.f32.gmra.mxu0 %v1006
    %v1223 = vpop.f32.mrf.mxu0
    %v1224 = vadd.f32 0.0, %v1223
    %v1225 = vpop.f32.mrf.mxu0
    %1226 = vmatprep.mubr.f32.mxu0 0.0
    %1227 = vmatmul.mubr.f32.gmra.mxu0 %v1009
    %v1228 = vpop.f32.mrf.mxu0
    %v1229 = vadd.f32 0.0, %v1228
    %v1230 = vpop.f32.mrf.mxu0
    %1231 = vmatprep.mubr.f32.mxu0 0.0
    %1232 = vmatmul.mubr.f32.gmra.mxu0 %v1012
    %v1233 = vpop.f32.mrf.mxu0
    %v1234 = vadd.f32 0.0, %v1233
    %v1235 = vpop.f32.mrf.mxu0
    %1236 = vmatprep.mubr.f32.mxu0 0.0
    %1237 = vmatmul.mubr.f32.gmra.mxu0 %v1015
    %v1238 = vpop.f32.mrf.mxu0
    %v1239 = vadd.f32 0.0, %v1238
    %v1240 = vpop.f32.mrf.mxu0
    %1241 = vdwg.mxu0
    %v1242 = vadd.f32 %v145, %v332
    %v1243 = vadd.f32 %v146, %v335
    %v1244 = vadd.f32 %v147, %v340
    %v1245 = vadd.f32 %v148, %v343
    %v1246 = vadd.f32 %v149, %v348
    %v1247 = vadd.f32 %v150, %v351
    %v1248 = vadd.f32 %v151, %v356
    %v1249 = vadd.f32 %v152, %v359
    %v1250 = vadd.f32 %v153, %v364
    %v1251 = vadd.f32 %v154, %v367
    %v1252 = vadd.f32 %v155, %v372
    %v1253 = vadd.f32 %v156, %v375
    %v1254 = vadd.f32 %v157, %v380
    %v1255 = vadd.f32 %v158, %v383
    %v1256 = vadd.f32 %v159, %v388
    %v1257 = vadd.f32 %v160, %v391
    %v1258 = vadd.f32 %v161, %v461
    %v1259 = vadd.f32 %v162, %v464
    %v1260 = vadd.f32 %v163, %v469
    %v1261 = vadd.f32 %v164, %v472
    %v1262 = vadd.f32 %v165, %v477
    %v1263 = vadd.f32 %v166, %v480
    %v1264 = vadd.f32 %v167, %v485
    %v1265 = vadd.f32 %v168, %v488
    %v1266 = vadd.f32 %v169, %v493
    %v1267 = vadd.f32 %v170, %v496
    %v1268 = vadd.f32 %v171, %v501
    %v1269 = vadd.f32 %v172, %v504
    %v1270 = vadd.f32 %v173, %v509
    %v1271 = vadd.f32 %v174, %v512
    %v1272 = vadd.f32 %v175, %v517
    %v1273 = vadd.f32 %v176, %v520
    %v1274 = vadd.f32 %v177, %v525
    %v1275 = vadd.f32 %v178, %v528
    %v1276 = vadd.f32 %v179, %v533
    %v1277 = vadd.f32 %v180, %v536
    %v1278 = vadd.f32 %v181, %v541
    %v1279 = vadd.f32 %v182, %v544
    %v1280 = vadd.f32 %v183, %v549
    %v1281 = vadd.f32 %v184, %v552
    %v1282 = vadd.f32 %v185, %v557
    %v1283 = vadd.f32 %v186, %v560
    %v1284 = vadd.f32 %v187, %v565
    %v1285 = vadd.f32 %v188, %v568
    %v1286 = vadd.f32 %v189, %v573
    %v1287 = vadd.f32 %v190, %v576
    %v1288 = vadd.f32 %v191, %v581
    %v1289 = vadd.f32 %v192, %v584
    %v1290 = vadd.f32 %v145, %v773
    %v1291 = vadd.f32 %v146, %v778
    %v1292 = vadd.f32 %v147, %v783
    %v1293 = vadd.f32 %v148, %v788
    %v1294 = vadd.f32 %v149, %v793
    %v1295 = vadd.f32 %v150, %v798
    %v1296 = vadd.f32 %v151, %v803
    %v1297 = vadd.f32 %v152, %v808
    %v1298 = vadd.f32 %v153, %v813
    %v1299 = vadd.f32 %v154, %v818
    %v1300 = vadd.f32 %v155, %v823
    %v1301 = vadd.f32 %v156, %v828
    %v1302 = vadd.f32 %v157, %v833
    %v1303 = vadd.f32 %v158, %v838
    %v1304 = vadd.f32 %v159, %v843
    %v1305 = vadd.f32 %v160, %v848
    %v1306 = vadd.f32 %v161, %v1084
    %v1307 = vadd.f32 %v162, %v1089
    %v1308 = vadd.f32 %v163, %v1094
    %v1309 = vadd.f32 %v164, %v1099
    %v1310 = vadd.f32 %v165, %v1104
    %v1311 = vadd.f32 %v166, %v1109
    %v1312 = vadd.f32 %v167, %v1114
    %v1313 = vadd.f32 %v168, %v1119
    %v1314 = vadd.f32 %v169, %v1124
    %v1315 = vadd.f32 %v170, %v1129
    %v1316 = vadd.f32 %v171, %v1134
    %v1317 = vadd.f32 %v172, %v1139
    %v1318 = vadd.f32 %v173, %v1144
    %v1319 = vadd.f32 %v174, %v1149
    %v1320 = vadd.f32 %v175, %v1154
    %v1321 = vadd.f32 %v176, %v1159
    %v1322 = vadd.f32 %v177, %v1164
    %v1323 = vadd.f32 %v178, %v1169
    %v1324 = vadd.f32 %v179, %v1174
    %v1325 = vadd.f32 %v180, %v1179
    %v1326 = vadd.f32 %v181, %v1184
    %v1327 = vadd.f32 %v182, %v1189
    %v1328 = vadd.f32 %v183, %v1194
    %v1329 = vadd.f32 %v184, %v1199
    %v1330 = vadd.f32 %v185, %v1204
    %v1331 = vadd.f32 %v186, %v1209
    %v1332 = vadd.f32 %v187, %v1214
    %v1333 = vadd.f32 %v188, %v1219
    %v1334 = vadd.f32 %v189, %v1224
    %v1335 = vadd.f32 %v190, %v1229
    %v1336 = vadd.f32 %v191, %v1234
    %v1337 = vadd.f32 %v192, %v1239
    %v1338 = vpack.c.bf16 %v335, %v332
    %v1339 = vpack.c.bf16 %v343, %v340
    %v1340 = vpack.c.bf16 %v351, %v348
    %v1341 = vpack.c.bf16 %v359, %v356
    %v1342 = vpack.c.bf16 %v367, %v364
    %v1343 = vpack.c.bf16 %v375, %v372
    %v1344 = vpack.c.bf16 %v383, %v380
    %v1345 = vpack.c.bf16 %v391, %v388
    %v1346 = vpack.c.bf16 %v464, %v461
    %v1347 = vpack.c.bf16 %v472, %v469
    %v1348 = vpack.c.bf16 %v480, %v477
    %v1349 = vpack.c.bf16 %v488, %v485
    %v1350 = vpack.c.bf16 %v496, %v493
    %v1351 = vpack.c.bf16 %v504, %v501
    %v1352 = vpack.c.bf16 %v512, %v509
    %v1353 = vpack.c.bf16 %v520, %v517
    %v1354 = vpack.c.bf16 %v528, %v525
    %v1355 = vpack.c.bf16 %v536, %v533
    %v1356 = vpack.c.bf16 %v544, %v541
    %v1357 = vpack.c.bf16 %v552, %v549
    %v1358 = vpack.c.bf16 %v560, %v557
    %v1359 = vpack.c.bf16 %v568, %v565
    %v1360 = vpack.c.bf16 %v576, %v573
    %v1361 = vpack.c.bf16 %v584, %v581
    %1362 = vmatprep.subr.bf16.mxu0 0
    %1363 = vmatpush1.bf16.msra.mxu0 %v1353
    %1364 = vmatprep.subr.bf16.mxu0 0
    %1365 = vmatpush1.bf16.msra.mxu0 %v1352
    %1366 = vmatprep.subr.bf16.mxu0 0
    %1367 = vmatpush1.bf16.msra.mxu0 %v1351
    %1368 = vmatprep.subr.bf16.mxu0 0
    %1369 = vmatpush1.bf16.msra.mxu0 %v1350
    %1370 = vmatprep.subr.bf16.mxu0 0
    %1371 = vmatpush1.bf16.msra.mxu0 %v1349
    %1372 = vmatprep.subr.bf16.mxu0 0
    %1373 = vmatpush1.bf16.msra.mxu0 %v1348
    %1374 = vmatprep.subr.bf16.mxu0 0
    %1375 = vmatpush1.bf16.msra.mxu0 %v1347
    %1376 = vmatprep.subr.bf16.mxu0 0
    %1377 = vmatpush1.bf16.msra.mxu0 %v1346
    %1378 = vmatprep.subr.bf16.mxu0 0
    %1379 = vmatpush2.bf16.msra.mxu0 %v1361
    %1380 = vmatprep.subr.bf16.mxu0 0
    %1381 = vmatpush2.bf16.msra.mxu0 %v1360
    %1382 = vmatprep.subr.bf16.mxu0 0
    %1383 = vmatpush2.bf16.msra.mxu0 %v1359
    %1384 = vmatprep.subr.bf16.mxu0 0
    %1385 = vmatpush2.bf16.msra.mxu0 %v1358
    %1386 = vmatprep.subr.bf16.mxu0 0
    %1387 = vmatpush2.bf16.msra.mxu0 %v1357
    %1388 = vmatprep.subr.bf16.mxu0 0
    %1389 = vmatpush2.bf16.msra.mxu0 %v1356
    %1390 = vmatprep.subr.bf16.mxu0 0
    %1391 = vmatpush2.bf16.msra.mxu0 %v1355
    %1392 = vmatprep.subr.bf16.mxu0 0
    %1393 = vmatpush2.bf16.msra.mxu0 %v1354
    %1394 = vmatprep.mubr.bf16.mxu0 %v266
    %1395 = vmatmul.mubr.bf16.gmra.mxu0 %v265
    %v1396 = vpop.f32.mrf.mxu0
    %v1397 = vadd.f32 0.0, %v1396
    %v1398 = vpop.f32.mrf.mxu0
    %v1399 = vpop.f32.mrf.mxu0
    %v1400 = vadd.f32 0.0, %v1399
    %v1401 = vpop.f32.mrf.mxu0
    %1402 = vmatprep.mubr.bf16.mxu0 %v268
    %1403 = vmatmul.mubr.bf16.gmra.mxu0 %v267
    %v1404 = vpop.f32.mrf.mxu0
    %v1405 = vadd.f32 0.0, %v1404
    %v1406 = vpop.f32.mrf.mxu0
    %v1407 = vpop.f32.mrf.mxu0
    %v1408 = vadd.f32 0.0, %v1407
    %v1409 = vpop.f32.mrf.mxu0
    %1410 = vmatprep.mubr.bf16.mxu0 %v270
    %1411 = vmatmul.mubr.bf16.gmra.mxu0 %v269
    %v1412 = vpop.f32.mrf.mxu0
    %v1413 = vadd.f32 0.0, %v1412
    %v1414 = vpop.f32.mrf.mxu0
    %v1415 = vpop.f32.mrf.mxu0
    %v1416 = vadd.f32 0.0, %v1415
    %v1417 = vpop.f32.mrf.mxu0
    %1418 = vmatprep.mubr.bf16.mxu0 %v272
    %1419 = vmatmul.mubr.bf16.gmra.mxu0 %v271
    %v1420 = vpop.f32.mrf.mxu0
    %v1421 = vadd.f32 0.0, %v1420
    %v1422 = vpop.f32.mrf.mxu0
    %v1423 = vpop.f32.mrf.mxu0
    %v1424 = vadd.f32 0.0, %v1423
    %v1425 = vpop.f32.mrf.mxu0
    %1426 = vmatprep.mubr.bf16.mxu0 %v274
    %1427 = vmatmul.mubr.bf16.gmra.mxu0 %v273
    %v1428 = vpop.f32.mrf.mxu0
    %v1429 = vadd.f32 0.0, %v1428
    %v1430 = vpop.f32.mrf.mxu0
    %v1431 = vpop.f32.mrf.mxu0
    %v1432 = vadd.f32 0.0, %v1431
    %v1433 = vpop.f32.mrf.mxu0
    %1434 = vmatprep.mubr.bf16.mxu0 %v276
    %1435 = vmatmul.mubr.bf16.gmra.mxu0 %v275
    %v1436 = vpop.f32.mrf.mxu0
    %v1437 = vadd.f32 0.0, %v1436
    %v1438 = vpop.f32.mrf.mxu0
    %v1439 = vpop.f32.mrf.mxu0
    %v1440 = vadd.f32 0.0, %v1439
    %v1441 = vpop.f32.mrf.mxu0
    %1442 = vmatprep.mubr.bf16.mxu0 %v278
    %1443 = vmatmul.mubr.bf16.gmra.mxu0 %v277
    %v1444 = vpop.f32.mrf.mxu0
    %v1445 = vadd.f32 0.0, %v1444
    %v1446 = vpop.f32.mrf.mxu0
    %v1447 = vpop.f32.mrf.mxu0
    %v1448 = vadd.f32 0.0, %v1447
    %v1449 = vpop.f32.mrf.mxu0
    %1450 = vmatprep.mubr.bf16.mxu0 %v280
    %1451 = vmatmul.mubr.bf16.gmra.mxu0 %v279
    %v1452 = vpop.f32.mrf.mxu0
    %v1453 = vadd.f32 0.0, %v1452
    %v1454 = vpop.f32.mrf.mxu0
    %v1455 = vpop.f32.mrf.mxu0
    %v1456 = vadd.f32 0.0, %v1455
    %v1457 = vpop.f32.mrf.mxu0
    %1458 = vdwg.mxu0
    %1459 = vmatprep.subr.bf16.mxu0 0
    %1460 = vmatpush1.bf16.msra.mxu0 %v1345
    %1461 = vmatprep.subr.bf16.mxu0 0
    %1462 = vmatpush1.bf16.msra.mxu0 %v1344
    %1463 = vmatprep.subr.bf16.mxu0 0
    %1464 = vmatpush1.bf16.msra.mxu0 %v1343
    %1465 = vmatprep.subr.bf16.mxu0 0
    %1466 = vmatpush1.bf16.msra.mxu0 %v1342
    %1467 = vmatprep.subr.bf16.mxu0 0
    %1468 = vmatpush1.bf16.msra.mxu0 %v1341
    %1469 = vmatprep.subr.bf16.mxu0 0
    %1470 = vmatpush1.bf16.msra.mxu0 %v1340
    %1471 = vmatprep.subr.bf16.mxu0 0
    %1472 = vmatpush1.bf16.msra.mxu0 %v1339
    %1473 = vmatprep.subr.bf16.mxu0 0
    %1474 = vmatpush1.bf16.msra.mxu0 %v1338
    %1475 = vmatprep.subr.bf16.mxu0 0
    %1476 = vmatpush2.bf16.msra.mxu0 0
    %1477 = vmatprep.subr.bf16.mxu0 0
    %1478 = vmatpush2.bf16.msra.mxu0 0
    %1479 = vmatprep.subr.bf16.mxu0 0
    %1480 = vmatpush2.bf16.msra.mxu0 0
    %1481 = vmatprep.subr.bf16.mxu0 0
    %1482 = vmatpush2.bf16.msra.mxu0 0
    %1483 = vmatprep.subr.bf16.mxu0 0
    %1484 = vmatpush2.bf16.msra.mxu0 0
    %1485 = vmatprep.subr.bf16.mxu0 0
    %1486 = vmatpush2.bf16.msra.mxu0 0
    %1487 = vmatprep.subr.bf16.mxu0 0
    %1488 = vmatpush2.bf16.msra.mxu0 0
    %1489 = vmatprep.subr.bf16.mxu0 0
    %1490 = vmatpush2.bf16.msra.mxu0 0
    %1491 = vmatprep.mubr.bf16.mxu0 0
    %1492 = vmatmul.mubr.bf16.gmra.mxu0 %v402
    %v1493 = vpop.f32.mrf.mxu0
    %v1494 = vadd.f32 0.0, %v1493
    %v1495 = vpop.f32.mrf.mxu0
    %v1496 = vpop.f32.mrf.mxu0
    %v1497 = vadd.f32 0.0, %v1496
    %v1498 = vpop.f32.mrf.mxu0
    %1499 = vmatprep.mubr.bf16.mxu0 0
    %1500 = vmatmul.mubr.bf16.gmra.mxu0 %v403
    %v1501 = vpop.f32.mrf.mxu0
    %v1502 = vadd.f32 0.0, %v1501
    %v1503 = vpop.f32.mrf.mxu0
    %v1504 = vpop.f32.mrf.mxu0
    %v1505 = vadd.f32 0.0, %v1504
    %v1506 = vpop.f32.mrf.mxu0
    %1507 = vmatprep.mubr.bf16.mxu0 0
    %1508 = vmatmul.mubr.bf16.gmra.mxu0 %v404
    %v1509 = vpop.f32.mrf.mxu0
    %v1510 = vadd.f32 0.0, %v1509
    %v1511 = vpop.f32.mrf.mxu0
    %v1512 = vpop.f32.mrf.mxu0
    %v1513 = vadd.f32 0.0, %v1512
    %v1514 = vpop.f32.mrf.mxu0
    %1515 = vmatprep.mubr.bf16.mxu0 0
    %1516 = vmatmul.mubr.bf16.gmra.mxu0 %v405
    %v1517 = vpop.f32.mrf.mxu0
    %v1518 = vadd.f32 0.0, %v1517
    %v1519 = vpop.f32.mrf.mxu0
    %v1520 = vpop.f32.mrf.mxu0
    %v1521 = vadd.f32 0.0, %v1520
    %v1522 = vpop.f32.mrf.mxu0
    %1523 = vmatprep.mubr.bf16.mxu0 0
    %1524 = vmatmul.mubr.bf16.gmra.mxu0 %v406
    %v1525 = vpop.f32.mrf.mxu0
    %v1526 = vadd.f32 0.0, %v1525
    %v1527 = vpop.f32.mrf.mxu0
    %v1528 = vpop.f32.mrf.mxu0
    %v1529 = vadd.f32 0.0, %v1528
    %v1530 = vpop.f32.mrf.mxu0
    %1531 = vmatprep.mubr.bf16.mxu0 0
    %1532 = vmatmul.mubr.bf16.gmra.mxu0 %v407
    %v1533 = vpop.f32.mrf.mxu0
    %v1534 = vadd.f32 0.0, %v1533
    %v1535 = vpop.f32.mrf.mxu0
    %v1536 = vpop.f32.mrf.mxu0
    %v1537 = vadd.f32 0.0, %v1536
    %v1538 = vpop.f32.mrf.mxu0
    %1539 = vmatprep.mubr.bf16.mxu0 0
    %1540 = vmatmul.mubr.bf16.gmra.mxu0 %v408
    %v1541 = vpop.f32.mrf.mxu0
    %v1542 = vadd.f32 0.0, %v1541
    %v1543 = vpop.f32.mrf.mxu0
    %v1544 = vpop.f32.mrf.mxu0
    %v1545 = vadd.f32 0.0, %v1544
    %v1546 = vpop.f32.mrf.mxu0
    %1547 = vmatprep.mubr.bf16.mxu0 0
    %1548 = vmatmul.mubr.bf16.gmra.mxu0 %v409
    %v1549 = vpop.f32.mrf.mxu0
    %v1550 = vadd.f32 0.0, %v1549
    %v1551 = vpop.f32.mrf.mxu0
    %v1552 = vpop.f32.mrf.mxu0
    %v1553 = vadd.f32 0.0, %v1552
    %v1554 = vpop.f32.mrf.mxu0
    %1555 = vmatprep.mubr.bf16.mxu0 0
    %1556 = vmatmul.mubr.bf16.gmra.mxu0 %v418
    %v1557 = vpop.f32.mrf.mxu0
    %v1558 = vadd.f32 0.0, %v1557
    %v1559 = vpop.f32.mrf.mxu0
    %v1560 = vpop.f32.mrf.mxu0
    %v1561 = vadd.f32 0.0, %v1560
    %v1562 = vpop.f32.mrf.mxu0
    %1563 = vmatprep.mubr.bf16.mxu0 0
    %1564 = vmatmul.mubr.bf16.gmra.mxu0 %v419
    %v1565 = vpop.f32.mrf.mxu0
    %v1566 = vadd.f32 0.0, %v1565
    %v1567 = vpop.f32.mrf.mxu0
    %v1568 = vpop.f32.mrf.mxu0
    %v1569 = vadd.f32 0.0, %v1568
    %v1570 = vpop.f32.mrf.mxu0
    %1571 = vmatprep.mubr.bf16.mxu0 0
    %1572 = vmatmul.mubr.bf16.gmra.mxu0 %v420
    %v1573 = vpop.f32.mrf.mxu0
    %v1574 = vadd.f32 0.0, %v1573
    %v1575 = vpop.f32.mrf.mxu0
    %v1576 = vpop.f32.mrf.mxu0
    %v1577 = vadd.f32 0.0, %v1576
    %v1578 = vpop.f32.mrf.mxu0
    %1579 = vmatprep.mubr.bf16.mxu0 0
    %1580 = vmatmul.mubr.bf16.gmra.mxu0 %v421
    %v1581 = vpop.f32.mrf.mxu0
    %v1582 = vadd.f32 0.0, %v1581
    %v1583 = vpop.f32.mrf.mxu0
    %v1584 = vpop.f32.mrf.mxu0
    %v1585 = vadd.f32 0.0, %v1584
    %v1586 = vpop.f32.mrf.mxu0
    %1587 = vmatprep.mubr.bf16.mxu0 0
    %1588 = vmatmul.mubr.bf16.gmra.mxu0 %v422
    %v1589 = vpop.f32.mrf.mxu0
    %v1590 = vadd.f32 0.0, %v1589
    %v1591 = vpop.f32.mrf.mxu0
    %v1592 = vpop.f32.mrf.mxu0
    %v1593 = vadd.f32 0.0, %v1592
    %v1594 = vpop.f32.mrf.mxu0
    %1595 = vmatprep.mubr.bf16.mxu0 0
    %1596 = vmatmul.mubr.bf16.gmra.mxu0 %v423
    %v1597 = vpop.f32.mrf.mxu0
    %v1598 = vadd.f32 0.0, %v1597
    %v1599 = vpop.f32.mrf.mxu0
    %v1600 = vpop.f32.mrf.mxu0
    %v1601 = vadd.f32 0.0, %v1600
    %v1602 = vpop.f32.mrf.mxu0
    %1603 = vmatprep.mubr.bf16.mxu0 0
    %1604 = vmatmul.mubr.bf16.gmra.mxu0 %v424
    %v1605 = vpop.f32.mrf.mxu0
    %v1606 = vadd.f32 0.0, %v1605
    %v1607 = vpop.f32.mrf.mxu0
    %v1608 = vpop.f32.mrf.mxu0
    %v1609 = vadd.f32 0.0, %v1608
    %v1610 = vpop.f32.mrf.mxu0
    %1611 = vmatprep.mubr.bf16.mxu0 0
    %1612 = vmatmul.mubr.bf16.gmra.mxu0 %v425
    %v1613 = vpop.f32.mrf.mxu0
    %v1614 = vadd.f32 0.0, %v1613
    %v1615 = vpop.f32.mrf.mxu0
    %v1616 = vpop.f32.mrf.mxu0
    %v1617 = vadd.f32 0.0, %v1616
    %v1618 = vpop.f32.mrf.mxu0
    %1619 = vdwg.mxu0
    %1620 = vmatprep.subr.mxu0 0.0
    %1621 = vmatpush1.msra.mxu0 %v520
    %1622 = vmatprep.subr.mxu0 0.0
    %1623 = vmatpush1.msra.mxu0 %v517
    %1624 = vmatprep.subr.mxu0 0.0
    %1625 = vmatpush1.msra.mxu0 %v512
    %1626 = vmatprep.subr.mxu0 0.0
    %1627 = vmatpush1.msra.mxu0 %v509
    %1628 = vmatprep.subr.mxu0 0.0
    %1629 = vmatpush1.msra.mxu0 %v504
    %1630 = vmatprep.subr.mxu0 0.0
    %1631 = vmatpush1.msra.mxu0 %v501
    %1632 = vmatprep.subr.mxu0 0.0
    %1633 = vmatpush1.msra.mxu0 %v496
    %1634 = vmatprep.subr.mxu0 0.0
    %1635 = vmatpush1.msra.mxu0 %v493
    %1636 = vmatprep.subr.mxu0 0.0
    %1637 = vmatpush1.msra.mxu0 %v488
    %1638 = vmatprep.subr.mxu0 0.0
    %1639 = vmatpush1.msra.mxu0 %v485
    %1640 = vmatprep.subr.mxu0 0.0
    %1641 = vmatpush1.msra.mxu0 %v480
    %1642 = vmatprep.subr.mxu0 0.0
    %1643 = vmatpush1.msra.mxu0 %v477
    %1644 = vmatprep.subr.mxu0 0.0
    %1645 = vmatpush1.msra.mxu0 %v472
    %1646 = vmatprep.subr.mxu0 0.0
    %1647 = vmatpush1.msra.mxu0 %v469
    %1648 = vmatprep.subr.mxu0 0.0
    %1649 = vmatpush1.msra.mxu0 %v464
    %1650 = vmatprep.subr.mxu0 0.0
    %1651 = vmatpush1.msra.mxu0 %v461
    %1652 = vmatprep.subr.mxu0 0.0
    %1653 = vmatpush2.msra.mxu0 %v584
    %1654 = vmatprep.subr.mxu0 0.0
    %1655 = vmatpush2.msra.mxu0 %v581
    %1656 = vmatprep.subr.mxu0 0.0
    %1657 = vmatpush2.msra.mxu0 %v576
    %1658 = vmatprep.subr.mxu0 0.0
    %1659 = vmatpush2.msra.mxu0 %v573
    %1660 = vmatprep.subr.mxu0 0.0
    %1661 = vmatpush2.msra.mxu0 %v568
    %1662 = vmatprep.subr.mxu0 0.0
    %1663 = vmatpush2.msra.mxu0 %v565
    %1664 = vmatprep.subr.mxu0 0.0
    %1665 = vmatpush2.msra.mxu0 %v560
    %1666 = vmatprep.subr.mxu0 0.0
    %1667 = vmatpush2.msra.mxu0 %v557
    %1668 = vmatprep.subr.mxu0 0.0
    %1669 = vmatpush2.msra.mxu0 %v552
    %1670 = vmatprep.subr.mxu0 0.0
    %1671 = vmatpush2.msra.mxu0 %v549
    %1672 = vmatprep.subr.mxu0 0.0
    %1673 = vmatpush2.msra.mxu0 %v544
    %1674 = vmatprep.subr.mxu0 0.0
    %1675 = vmatpush2.msra.mxu0 %v541
    %1676 = vmatprep.subr.mxu0 0.0
    %1677 = vmatpush2.msra.mxu0 %v536
    %1678 = vmatprep.subr.mxu0 0.0
    %1679 = vmatpush2.msra.mxu0 %v533
    %1680 = vmatprep.subr.mxu0 0.0
    %1681 = vmatpush2.msra.mxu0 %v528
    %1682 = vmatprep.subr.mxu0 0.0
    %1683 = vmatpush2.msra.mxu0 %v525
    %1684 = vmatprep.mubr.f32.mxu0 %v96
    %1685 = vmatmul.mubr.f32.gmra.mxu0 %v95
    %v1686 = vpop.f32.mrf.mxu0
    %v1687 = vadd.f32 0.0, %v1686
    %v1688 = vpop.f32.mrf.mxu0
    %1689 = vdwg.mxu0
    %1690 = vmatprep.subr.mxu0 0.0
    %1691 = vmatpush1.msra.mxu0 0.0
    %1692 = vmatprep.subr.mxu0 0.0
    %1693 = vmatpush1.msra.mxu0 0.0
    %1694 = vmatprep.subr.mxu0 0.0
    %1695 = vmatpush1.msra.mxu0 0.0
    %1696 = vmatprep.subr.mxu0 0.0
    %1697 = vmatpush1.msra.mxu0 0.0
    %1698 = vmatprep.subr.mxu0 0.0
    %1699 = vmatpush1.msra.mxu0 0.0
    %1700 = vmatprep.subr.mxu0 0.0
    %1701 = vmatpush1.msra.mxu0 0.0
    %1702 = vmatprep.subr.mxu0 0.0
    %1703 = vmatpush1.msra.mxu0 0.0
    %1704 = vmatprep.subr.mxu0 0.0
    %1705 = vmatpush1.msra.mxu0 0.0
    %1706 = vmatprep.subr.mxu0 0.0
    %1707 = vmatpush1.msra.mxu0 0.0
    %1708 = vmatprep.subr.mxu0 0.0
    %1709 = vmatpush1.msra.mxu0 0.0
    %1710 = vmatprep.subr.mxu0 0.0
    %1711 = vmatpush1.msra.mxu0 0.0
    %1712 = vmatprep.subr.mxu0 0.0
    %1713 = vmatpush1.msra.mxu0 0.0
    %1714 = vmatprep.subr.mxu0 0.0
    %1715 = vmatpush1.msra.mxu0 0.0
    %1716 = vmatprep.subr.mxu0 0.0
    %1717 = vmatpush1.msra.mxu0 0.0
    %1718 = vmatprep.subr.mxu0 0.0
    %1719 = vmatpush1.msra.mxu0 0.0
    %1720 = vmatprep.subr.mxu0 0.0
    %1721 = vmatpush1.msra.mxu0 %v1687
    %1722 = vmatprep.subr.mxu0 0.0
    %1723 = vmatpush2.msra.mxu0 0.0
    %1724 = vmatprep.subr.mxu0 0.0
    %1725 = vmatpush2.msra.mxu0 0.0
    %1726 = vmatprep.subr.mxu0 0.0
    %1727 = vmatpush2.msra.mxu0 0.0
    %1728 = vmatprep.subr.mxu0 0.0
    %1729 = vmatpush2.msra.mxu0 0.0
    %1730 = vmatprep.subr.mxu0 0.0
    %1731 = vmatpush2.msra.mxu0 0.0
    %1732 = vmatprep.subr.mxu0 0.0
    %1733 = vmatpush2.msra.mxu0 0.0
    %1734 = vmatprep.subr.mxu0 0.0
    %1735 = vmatpush2.msra.mxu0 0.0
    %1736 = vmatprep.subr.mxu0 0.0
    %1737 = vmatpush2.msra.mxu0 0.0
    %1738 = vmatprep.subr.mxu0 0.0
    %1739 = vmatpush2.msra.mxu0 0.0
    %1740 = vmatprep.subr.mxu0 0.0
    %1741 = vmatpush2.msra.mxu0 0.0
    %1742 = vmatprep.subr.mxu0 0.0
    %1743 = vmatpush2.msra.mxu0 0.0
    %1744 = vmatprep.subr.mxu0 0.0
    %1745 = vmatpush2.msra.mxu0 0.0
    %1746 = vmatprep.subr.mxu0 0.0
    %1747 = vmatpush2.msra.mxu0 0.0
    %1748 = vmatprep.subr.mxu0 0.0
    %1749 = vmatpush2.msra.mxu0 0.0
    %1750 = vmatprep.subr.mxu0 0.0
    %1751 = vmatpush2.msra.mxu0 0.0
    %1752 = vmatprep.subr.mxu0 0.0
    %1753 = vmatpush2.msra.mxu0 0.0
    %1754 = vmatprep.mubr.f32.mxu0 0.0
    %1755 = vmatmul.mubr.f32.gmra.mxu0 %v659
    %v1756 = vpop.f32.mrf.mxu0
    %v1757 = vadd.f32 0.0, %v1756
    %v1758 = vpop.f32.mrf.mxu0
    %1759 = vmatprep.mubr.f32.mxu0 0.0
    %1760 = vmatmul.mubr.f32.gmra.mxu0 %v662
    %v1761 = vpop.f32.mrf.mxu0
    %v1762 = vadd.f32 0.0, %v1761
    %v1763 = vpop.f32.mrf.mxu0
    %1764 = vmatprep.mubr.f32.mxu0 0.0
    %1765 = vmatmul.mubr.f32.gmra.mxu0 %v665
    %v1766 = vpop.f32.mrf.mxu0
    %v1767 = vadd.f32 0.0, %v1766
    %v1768 = vpop.f32.mrf.mxu0
    %1769 = vmatprep.mubr.f32.mxu0 0.0
    %1770 = vmatmul.mubr.f32.gmra.mxu0 %v668
    %v1771 = vpop.f32.mrf.mxu0
    %v1772 = vadd.f32 0.0, %v1771
    %v1773 = vpop.f32.mrf.mxu0
    %1774 = vmatprep.mubr.f32.mxu0 0.0
    %1775 = vmatmul.mubr.f32.gmra.mxu0 %v671
    %v1776 = vpop.f32.mrf.mxu0
    %v1777 = vadd.f32 0.0, %v1776
    %v1778 = vpop.f32.mrf.mxu0
    %1779 = vmatprep.mubr.f32.mxu0 0.0
    %1780 = vmatmul.mubr.f32.gmra.mxu0 %v674
    %v1781 = vpop.f32.mrf.mxu0
    %v1782 = vadd.f32 0.0, %v1781
    %v1783 = vpop.f32.mrf.mxu0
    %1784 = vmatprep.mubr.f32.mxu0 0.0
    %1785 = vmatmul.mubr.f32.gmra.mxu0 %v677
    %v1786 = vpop.f32.mrf.mxu0
    %v1787 = vadd.f32 0.0, %v1786
    %v1788 = vpop.f32.mrf.mxu0
    %1789 = vmatprep.mubr.f32.mxu0 0.0
    %1790 = vmatmul.mubr.f32.gmra.mxu0 %v680
    %v1791 = vpop.f32.mrf.mxu0
    %v1792 = vadd.f32 0.0, %v1791
    %v1793 = vpop.f32.mrf.mxu0
    %1794 = vmatprep.mubr.f32.mxu0 0.0
    %1795 = vmatmul.mubr.f32.gmra.mxu0 %v683
    %v1796 = vpop.f32.mrf.mxu0
    %v1797 = vadd.f32 0.0, %v1796
    %v1798 = vpop.f32.mrf.mxu0
    %1799 = vmatprep.mubr.f32.mxu0 0.0
    %1800 = vmatmul.mubr.f32.gmra.mxu0 %v686
    %v1801 = vpop.f32.mrf.mxu0
    %v1802 = vadd.f32 0.0, %v1801
    %v1803 = vpop.f32.mrf.mxu0
    %1804 = vmatprep.mubr.f32.mxu0 0.0
    %1805 = vmatmul.mubr.f32.gmra.mxu0 %v689
    %v1806 = vpop.f32.mrf.mxu0
    %v1807 = vadd.f32 0.0, %v1806
    %v1808 = vpop.f32.mrf.mxu0
    %1809 = vmatprep.mubr.f32.mxu0 0.0
    %1810 = vmatmul.mubr.f32.gmra.mxu0 %v692
    %v1811 = vpop.f32.mrf.mxu0
    %v1812 = vadd.f32 0.0, %v1811
    %v1813 = vpop.f32.mrf.mxu0
    %1814 = vmatprep.mubr.f32.mxu0 0.0
    %1815 = vmatmul.mubr.f32.gmra.mxu0 %v695
    %v1816 = vpop.f32.mrf.mxu0
    %v1817 = vadd.f32 0.0, %v1816
    %v1818 = vpop.f32.mrf.mxu0
    %1819 = vmatprep.mubr.f32.mxu0 0.0
    %1820 = vmatmul.mubr.f32.gmra.mxu0 %v698
    %v1821 = vpop.f32.mrf.mxu0
    %v1822 = vadd.f32 0.0, %v1821
    %v1823 = vpop.f32.mrf.mxu0
    %1824 = vmatprep.mubr.f32.mxu0 0.0
    %1825 = vmatmul.mubr.f32.gmra.mxu0 %v701
    %v1826 = vpop.f32.mrf.mxu0
    %v1827 = vadd.f32 0.0, %v1826
    %v1828 = vpop.f32.mrf.mxu0
    %1829 = vmatprep.mubr.f32.mxu0 0.0
    %1830 = vmatmul.mubr.f32.gmra.mxu0 %v704
    %v1831 = vpop.f32.mrf.mxu0
    %v1832 = vadd.f32 0.0, %v1831
    %v1833 = vpop.f32.mrf.mxu0
    %1834 = vdwg.mxu0
    %1835 = vmatprep.subr.mxu0 0.0
    %1836 = vmatpush1.msra.mxu0 %v391
    %1837 = vmatprep.subr.mxu0 0.0
    %1838 = vmatpush1.msra.mxu0 %v388
    %1839 = vmatprep.subr.mxu0 0.0
    %1840 = vmatpush1.msra.mxu0 %v383
    %1841 = vmatprep.subr.mxu0 0.0
    %1842 = vmatpush1.msra.mxu0 %v380
    %1843 = vmatprep.subr.mxu0 0.0
    %1844 = vmatpush1.msra.mxu0 %v375
    %1845 = vmatprep.subr.mxu0 0.0
    %1846 = vmatpush1.msra.mxu0 %v372
    %1847 = vmatprep.subr.mxu0 0.0
    %1848 = vmatpush1.msra.mxu0 %v367
    %1849 = vmatprep.subr.mxu0 0.0
    %1850 = vmatpush1.msra.mxu0 %v364
    %1851 = vmatprep.subr.mxu0 0.0
    %1852 = vmatpush1.msra.mxu0 %v359
    %1853 = vmatprep.subr.mxu0 0.0
    %1854 = vmatpush1.msra.mxu0 %v356
    %1855 = vmatprep.subr.mxu0 0.0
    %1856 = vmatpush1.msra.mxu0 %v351
    %1857 = vmatprep.subr.mxu0 0.0
    %1858 = vmatpush1.msra.mxu0 %v348
    %1859 = vmatprep.subr.mxu0 0.0
    %1860 = vmatpush1.msra.mxu0 %v343
    %1861 = vmatprep.subr.mxu0 0.0
    %1862 = vmatpush1.msra.mxu0 %v340
    %1863 = vmatprep.subr.mxu0 0.0
    %1864 = vmatpush1.msra.mxu0 %v335
    %1865 = vmatprep.subr.mxu0 0.0
    %1866 = vmatpush1.msra.mxu0 %v332
    %1867 = vmatprep.subr.mxu0 0.0
    %1868 = vmatpush2.msra.mxu0 0.0
    %1869 = vmatprep.subr.mxu0 0.0
    %1870 = vmatpush2.msra.mxu0 0.0
    %1871 = vmatprep.subr.mxu0 0.0
    %1872 = vmatpush2.msra.mxu0 0.0
    %1873 = vmatprep.subr.mxu0 0.0
    %1874 = vmatpush2.msra.mxu0 0.0
    %1875 = vmatprep.subr.mxu0 0.0
    %1876 = vmatpush2.msra.mxu0 0.0
    %1877 = vmatprep.subr.mxu0 0.0
    %1878 = vmatpush2.msra.mxu0 0.0
    %1879 = vmatprep.subr.mxu0 0.0
    %1880 = vmatpush2.msra.mxu0 0.0
    %1881 = vmatprep.subr.mxu0 0.0
    %1882 = vmatpush2.msra.mxu0 0.0
    %1883 = vmatprep.subr.mxu0 0.0
    %1884 = vmatpush2.msra.mxu0 0.0
    %1885 = vmatprep.subr.mxu0 0.0
    %1886 = vmatpush2.msra.mxu0 0.0
    %1887 = vmatprep.subr.mxu0 0.0
    %1888 = vmatpush2.msra.mxu0 0.0
    %1889 = vmatprep.subr.mxu0 0.0
    %1890 = vmatpush2.msra.mxu0 0.0
    %1891 = vmatprep.subr.mxu0 0.0
    %1892 = vmatpush2.msra.mxu0 0.0
    %1893 = vmatprep.subr.mxu0 0.0
    %1894 = vmatpush2.msra.mxu0 0.0
    %1895 = vmatprep.subr.mxu0 0.0
    %1896 = vmatpush2.msra.mxu0 0.0
    %1897 = vmatprep.subr.mxu0 0.0
    %1898 = vmatpush2.msra.mxu0 0.0
    %1899 = vmatprep.mubr.f32.mxu0 0.0
    %1900 = vmatmul.mubr.f32.gmra.mxu0 %v94
    %v1901 = vpop.f32.mrf.mxu0
    %v1902 = vadd.f32 0.0, %v1901
    %v1903 = vpop.f32.mrf.mxu0
    %1904 = vdwg.mxu0
    %1905 = vmatprep.subr.mxu0 0.0
    %1906 = vmatpush1.msra.mxu0 0.0
    %1907 = vmatprep.subr.mxu0 0.0
    %1908 = vmatpush1.msra.mxu0 0.0
    %1909 = vmatprep.subr.mxu0 0.0
    %1910 = vmatpush1.msra.mxu0 0.0
    %1911 = vmatprep.subr.mxu0 0.0
    %1912 = vmatpush1.msra.mxu0 0.0
    %1913 = vmatprep.subr.mxu0 0.0
    %1914 = vmatpush1.msra.mxu0 0.0
    %1915 = vmatprep.subr.mxu0 0.0
    %1916 = vmatpush1.msra.mxu0 0.0
    %1917 = vmatprep.subr.mxu0 0.0
    %1918 = vmatpush1.msra.mxu0 0.0
    %1919 = vmatprep.subr.mxu0 0.0
    %1920 = vmatpush1.msra.mxu0 0.0
    %1921 = vmatprep.subr.mxu0 0.0
    %1922 = vmatpush1.msra.mxu0 0.0
    %1923 = vmatprep.subr.mxu0 0.0
    %1924 = vmatpush1.msra.mxu0 0.0
    %1925 = vmatprep.subr.mxu0 0.0
    %1926 = vmatpush1.msra.mxu0 0.0
    %1927 = vmatprep.subr.mxu0 0.0
    %1928 = vmatpush1.msra.mxu0 0.0
    %1929 = vmatprep.subr.mxu0 0.0
    %1930 = vmatpush1.msra.mxu0 0.0
    %1931 = vmatprep.subr.mxu0 0.0
    %1932 = vmatpush1.msra.mxu0 0.0
    %1933 = vmatprep.subr.mxu0 0.0
    %1934 = vmatpush1.msra.mxu0 0.0
    %1935 = vmatprep.subr.mxu0 0.0
    %1936 = vmatpush1.msra.mxu0 %v1902
    %1937 = vmatprep.subr.mxu0 0.0
    %1938 = vmatpush2.msra.mxu0 0.0
    %1939 = vmatprep.subr.mxu0 0.0
    %1940 = vmatpush2.msra.mxu0 0.0
    %1941 = vmatprep.subr.mxu0 0.0
    %1942 = vmatpush2.msra.mxu0 0.0
    %1943 = vmatprep.subr.mxu0 0.0
    %1944 = vmatpush2.msra.mxu0 0.0
    %1945 = vmatprep.subr.mxu0 0.0
    %1946 = vmatpush2.msra.mxu0 0.0
    %1947 = vmatprep.subr.mxu0 0.0
    %1948 = vmatpush2.msra.mxu0 0.0
    %1949 = vmatprep.subr.mxu0 0.0
    %1950 = vmatpush2.msra.mxu0 0.0
    %1951 = vmatprep.subr.mxu0 0.0
    %1952 = vmatpush2.msra.mxu0 0.0
    %1953 = vmatprep.subr.mxu0 0.0
    %1954 = vmatpush2.msra.mxu0 0.0
    %1955 = vmatprep.subr.mxu0 0.0
    %1956 = vmatpush2.msra.mxu0 0.0
    %1957 = vmatprep.subr.mxu0 0.0
    %1958 = vmatpush2.msra.mxu0 0.0
    %1959 = vmatprep.subr.mxu0 0.0
    %1960 = vmatpush2.msra.mxu0 0.0
    %1961 = vmatprep.subr.mxu0 0.0
    %1962 = vmatpush2.msra.mxu0 0.0
    %1963 = vmatprep.subr.mxu0 0.0
    %1964 = vmatpush2.msra.mxu0 0.0
    %1965 = vmatprep.subr.mxu0 0.0
    %1966 = vmatpush2.msra.mxu0 0.0
    %1967 = vmatprep.subr.mxu0 0.0
    %1968 = vmatpush2.msra.mxu0 0.0
    %1969 = vmatprep.mubr.f32.mxu0 0.0
    %1970 = vmatmul.mubr.f32.gmra.mxu0 %v922
    %v1971 = vpop.f32.mrf.mxu0
    %v1972 = vadd.f32 0.0, %v1971
    %v1973 = vpop.f32.mrf.mxu0
    %1974 = vmatprep.mubr.f32.mxu0 0.0
    %1975 = vmatmul.mubr.f32.gmra.mxu0 %v925
    %v1976 = vpop.f32.mrf.mxu0
    %v1977 = vadd.f32 0.0, %v1976
    %v1978 = vpop.f32.mrf.mxu0
    %1979 = vmatprep.mubr.f32.mxu0 0.0
    %1980 = vmatmul.mubr.f32.gmra.mxu0 %v928
    %v1981 = vpop.f32.mrf.mxu0
    %v1982 = vadd.f32 0.0, %v1981
    %v1983 = vpop.f32.mrf.mxu0
    %1984 = vmatprep.mubr.f32.mxu0 0.0
    %1985 = vmatmul.mubr.f32.gmra.mxu0 %v931
    %v1986 = vpop.f32.mrf.mxu0
    %v1987 = vadd.f32 0.0, %v1986
    %v1988 = vpop.f32.mrf.mxu0
    %1989 = vmatprep.mubr.f32.mxu0 0.0
    %1990 = vmatmul.mubr.f32.gmra.mxu0 %v934
    %v1991 = vpop.f32.mrf.mxu0
    %v1992 = vadd.f32 0.0, %v1991
    %v1993 = vpop.f32.mrf.mxu0
    %1994 = vmatprep.mubr.f32.mxu0 0.0
    %1995 = vmatmul.mubr.f32.gmra.mxu0 %v937
    %v1996 = vpop.f32.mrf.mxu0
    %v1997 = vadd.f32 0.0, %v1996
    %v1998 = vpop.f32.mrf.mxu0
    %1999 = vmatprep.mubr.f32.mxu0 0.0
    %2000 = vmatmul.mubr.f32.gmra.mxu0 %v940
    %v2001 = vpop.f32.mrf.mxu0
    %v2002 = vadd.f32 0.0, %v2001
    %v2003 = vpop.f32.mrf.mxu0
    %2004 = vmatprep.mubr.f32.mxu0 0.0
    %2005 = vmatmul.mubr.f32.gmra.mxu0 %v943
    %v2006 = vpop.f32.mrf.mxu0
    %v2007 = vadd.f32 0.0, %v2006
    %v2008 = vpop.f32.mrf.mxu0
    %2009 = vmatprep.mubr.f32.mxu0 0.0
    %2010 = vmatmul.mubr.f32.gmra.mxu0 %v946
    %v2011 = vpop.f32.mrf.mxu0
    %v2012 = vadd.f32 0.0, %v2011
    %v2013 = vpop.f32.mrf.mxu0
    %2014 = vmatprep.mubr.f32.mxu0 0.0
    %2015 = vmatmul.mubr.f32.gmra.mxu0 %v949
    %v2016 = vpop.f32.mrf.mxu0
    %v2017 = vadd.f32 0.0, %v2016
    %v2018 = vpop.f32.mrf.mxu0
    %2019 = vmatprep.mubr.f32.mxu0 0.0
    %2020 = vmatmul.mubr.f32.gmra.mxu0 %v952
    %v2021 = vpop.f32.mrf.mxu0
    %v2022 = vadd.f32 0.0, %v2021
    %v2023 = vpop.f32.mrf.mxu0
    %2024 = vmatprep.mubr.f32.mxu0 0.0
    %2025 = vmatmul.mubr.f32.gmra.mxu0 %v955
    %v2026 = vpop.f32.mrf.mxu0
    %v2027 = vadd.f32 0.0, %v2026
    %v2028 = vpop.f32.mrf.mxu0
    %2029 = vmatprep.mubr.f32.mxu0 0.0
    %2030 = vmatmul.mubr.f32.gmra.mxu0 %v958
    %v2031 = vpop.f32.mrf.mxu0
    %v2032 = vadd.f32 0.0, %v2031
    %v2033 = vpop.f32.mrf.mxu0
    %2034 = vmatprep.mubr.f32.mxu0 0.0
    %2035 = vmatmul.mubr.f32.gmra.mxu0 %v961
    %v2036 = vpop.f32.mrf.mxu0
    %v2037 = vadd.f32 0.0, %v2036
    %v2038 = vpop.f32.mrf.mxu0
    %2039 = vmatprep.mubr.f32.mxu0 0.0
    %2040 = vmatmul.mubr.f32.gmra.mxu0 %v964
    %v2041 = vpop.f32.mrf.mxu0
    %v2042 = vadd.f32 0.0, %v2041
    %v2043 = vpop.f32.mrf.mxu0
    %2044 = vmatprep.mubr.f32.mxu0 0.0
    %2045 = vmatmul.mubr.f32.gmra.mxu0 %v967
    %v2046 = vpop.f32.mrf.mxu0
    %v2047 = vadd.f32 0.0, %v2046
    %v2048 = vpop.f32.mrf.mxu0
    %2049 = vmatprep.mubr.f32.mxu0 0.0
    %2050 = vmatmul.mubr.f32.gmra.mxu0 %v970
    %v2051 = vpop.f32.mrf.mxu0
    %v2052 = vadd.f32 0.0, %v2051
    %v2053 = vpop.f32.mrf.mxu0
    %2054 = vmatprep.mubr.f32.mxu0 0.0
    %2055 = vmatmul.mubr.f32.gmra.mxu0 %v973
    %v2056 = vpop.f32.mrf.mxu0
    %v2057 = vadd.f32 0.0, %v2056
    %v2058 = vpop.f32.mrf.mxu0
    %2059 = vmatprep.mubr.f32.mxu0 0.0
    %2060 = vmatmul.mubr.f32.gmra.mxu0 %v976
    %v2061 = vpop.f32.mrf.mxu0
    %v2062 = vadd.f32 0.0, %v2061
    %v2063 = vpop.f32.mrf.mxu0
    %2064 = vmatprep.mubr.f32.mxu0 0.0
    %2065 = vmatmul.mubr.f32.gmra.mxu0 %v979
    %v2066 = vpop.f32.mrf.mxu0
    %v2067 = vadd.f32 0.0, %v2066
    %v2068 = vpop.f32.mrf.mxu0
    %2069 = vmatprep.mubr.f32.mxu0 0.0
    %2070 = vmatmul.mubr.f32.gmra.mxu0 %v982
    %v2071 = vpop.f32.mrf.mxu0
    %v2072 = vadd.f32 0.0, %v2071
    %v2073 = vpop.f32.mrf.mxu0
    %2074 = vmatprep.mubr.f32.mxu0 0.0
    %2075 = vmatmul.mubr.f32.gmra.mxu0 %v985
    %v2076 = vpop.f32.mrf.mxu0
    %v2077 = vadd.f32 0.0, %v2076
    %v2078 = vpop.f32.mrf.mxu0
    %2079 = vmatprep.mubr.f32.mxu0 0.0
    %2080 = vmatmul.mubr.f32.gmra.mxu0 %v988
    %v2081 = vpop.f32.mrf.mxu0
    %v2082 = vadd.f32 0.0, %v2081
    %v2083 = vpop.f32.mrf.mxu0
    %2084 = vmatprep.mubr.f32.mxu0 0.0
    %2085 = vmatmul.mubr.f32.gmra.mxu0 %v991
    %v2086 = vpop.f32.mrf.mxu0
    %v2087 = vadd.f32 0.0, %v2086
    %v2088 = vpop.f32.mrf.mxu0
    %2089 = vmatprep.mubr.f32.mxu0 0.0
    %2090 = vmatmul.mubr.f32.gmra.mxu0 %v994
    %v2091 = vpop.f32.mrf.mxu0
    %v2092 = vadd.f32 0.0, %v2091
    %v2093 = vpop.f32.mrf.mxu0
    %2094 = vmatprep.mubr.f32.mxu0 0.0
    %2095 = vmatmul.mubr.f32.gmra.mxu0 %v997
    %v2096 = vpop.f32.mrf.mxu0
    %v2097 = vadd.f32 0.0, %v2096
    %v2098 = vpop.f32.mrf.mxu0
    %2099 = vmatprep.mubr.f32.mxu0 0.0
    %2100 = vmatmul.mubr.f32.gmra.mxu0 %v1000
    %v2101 = vpop.f32.mrf.mxu0
    %v2102 = vadd.f32 0.0, %v2101
    %v2103 = vpop.f32.mrf.mxu0
    %2104 = vmatprep.mubr.f32.mxu0 0.0
    %2105 = vmatmul.mubr.f32.gmra.mxu0 %v1003
    %v2106 = vpop.f32.mrf.mxu0
    %v2107 = vadd.f32 0.0, %v2106
    %v2108 = vpop.f32.mrf.mxu0
    %2109 = vmatprep.mubr.f32.mxu0 0.0
    %2110 = vmatmul.mubr.f32.gmra.mxu0 %v1006
    %v2111 = vpop.f32.mrf.mxu0
    %v2112 = vadd.f32 0.0, %v2111
    %v2113 = vpop.f32.mrf.mxu0
    %2114 = vmatprep.mubr.f32.mxu0 0.0
    %2115 = vmatmul.mubr.f32.gmra.mxu0 %v1009
    %v2116 = vpop.f32.mrf.mxu0
    %v2117 = vadd.f32 0.0, %v2116
    %v2118 = vpop.f32.mrf.mxu0
    %2119 = vmatprep.mubr.f32.mxu0 0.0
    %2120 = vmatmul.mubr.f32.gmra.mxu0 %v1012
    %v2121 = vpop.f32.mrf.mxu0
    %v2122 = vadd.f32 0.0, %v2121
    %v2123 = vpop.f32.mrf.mxu0
    %2124 = vmatprep.mubr.f32.mxu0 0.0
    %2125 = vmatmul.mubr.f32.gmra.mxu0 %v1015
    %v2126 = vpop.f32.mrf.mxu0
    %v2127 = vadd.f32 0.0, %v2126
    %v2128 = vpop.f32.mrf.mxu0
    %2129 = vdwg.mxu0
    %v2130 = vadd.f32 %v1242, %v1397
    %v2131 = vadd.f32 %v1243, %v1400
    %v2132 = vadd.f32 %v1244, %v1405
    %v2133 = vadd.f32 %v1245, %v1408
    %v2134 = vadd.f32 %v1246, %v1413
    %v2135 = vadd.f32 %v1247, %v1416
    %v2136 = vadd.f32 %v1248, %v1421
    %v2137 = vadd.f32 %v1249, %v1424
    %v2138 = vadd.f32 %v1250, %v1429
    %v2139 = vadd.f32 %v1251, %v1432
    %v2140 = vadd.f32 %v1252, %v1437
    %v2141 = vadd.f32 %v1253, %v1440
    %v2142 = vadd.f32 %v1254, %v1445
    %v2143 = vadd.f32 %v1255, %v1448
    %v2144 = vadd.f32 %v1256, %v1453
    %v2145 = vadd.f32 %v1257, %v1456
    %v2146 = vadd.f32 %v1258, %v1494
    %v2147 = vadd.f32 %v1259, %v1497
    %v2148 = vadd.f32 %v1260, %v1502
    %v2149 = vadd.f32 %v1261, %v1505
    %v2150 = vadd.f32 %v1262, %v1510
    %v2151 = vadd.f32 %v1263, %v1513
    %v2152 = vadd.f32 %v1264, %v1518
    %v2153 = vadd.f32 %v1265, %v1521
    %v2154 = vadd.f32 %v1266, %v1526
    %v2155 = vadd.f32 %v1267, %v1529
    %v2156 = vadd.f32 %v1268, %v1534
    %v2157 = vadd.f32 %v1269, %v1537
    %v2158 = vadd.f32 %v1270, %v1542
    %v2159 = vadd.f32 %v1271, %v1545
    %v2160 = vadd.f32 %v1272, %v1550
    %v2161 = vadd.f32 %v1273, %v1553
    %v2162 = vadd.f32 %v1274, %v1558
    %v2163 = vadd.f32 %v1275, %v1561
    %v2164 = vadd.f32 %v1276, %v1566
    %v2165 = vadd.f32 %v1277, %v1569
    %v2166 = vadd.f32 %v1278, %v1574
    %v2167 = vadd.f32 %v1279, %v1577
    %v2168 = vadd.f32 %v1280, %v1582
    %v2169 = vadd.f32 %v1281, %v1585
    %v2170 = vadd.f32 %v1282, %v1590
    %v2171 = vadd.f32 %v1283, %v1593
    %v2172 = vadd.f32 %v1284, %v1598
    %v2173 = vadd.f32 %v1285, %v1601
    %v2174 = vadd.f32 %v1286, %v1606
    %v2175 = vadd.f32 %v1287, %v1609
    %v2176 = vadd.f32 %v1288, %v1614
    %v2177 = vadd.f32 %v1289, %v1617
    %v2178 = vadd.f32 %v1290, %v1757
    %v2179 = vadd.f32 %v1291, %v1762
    %v2180 = vadd.f32 %v1292, %v1767
    %v2181 = vadd.f32 %v1293, %v1772
    %v2182 = vadd.f32 %v1294, %v1777
    %v2183 = vadd.f32 %v1295, %v1782
    %v2184 = vadd.f32 %v1296, %v1787
    %v2185 = vadd.f32 %v1297, %v1792
    %v2186 = vadd.f32 %v1298, %v1797
    %v2187 = vadd.f32 %v1299, %v1802
    %v2188 = vadd.f32 %v1300, %v1807
    %v2189 = vadd.f32 %v1301, %v1812
    %v2190 = vadd.f32 %v1302, %v1817
    %v2191 = vadd.f32 %v1303, %v1822
    %v2192 = vadd.f32 %v1304, %v1827
    %v2193 = vadd.f32 %v1305, %v1832
    %v2194 = vadd.f32 %v1306, %v1972
    %v2195 = vadd.f32 %v1307, %v1977
    %v2196 = vadd.f32 %v1308, %v1982
    %v2197 = vadd.f32 %v1309, %v1987
    %v2198 = vadd.f32 %v1310, %v1992
    %v2199 = vadd.f32 %v1311, %v1997
    %v2200 = vadd.f32 %v1312, %v2002
    %v2201 = vadd.f32 %v1313, %v2007
    %v2202 = vadd.f32 %v1314, %v2012
    %v2203 = vadd.f32 %v1315, %v2017
    %v2204 = vadd.f32 %v1316, %v2022
    %v2205 = vadd.f32 %v1317, %v2027
    %v2206 = vadd.f32 %v1318, %v2032
    %v2207 = vadd.f32 %v1319, %v2037
    %v2208 = vadd.f32 %v1320, %v2042
    %v2209 = vadd.f32 %v1321, %v2047
    %v2210 = vadd.f32 %v1322, %v2052
    %v2211 = vadd.f32 %v1323, %v2057
    %v2212 = vadd.f32 %v1324, %v2062
    %v2213 = vadd.f32 %v1325, %v2067
    %v2214 = vadd.f32 %v1326, %v2072
    %v2215 = vadd.f32 %v1327, %v2077
    %v2216 = vadd.f32 %v1328, %v2082
    %v2217 = vadd.f32 %v1329, %v2087
    %v2218 = vadd.f32 %v1330, %v2092
    %v2219 = vadd.f32 %v1331, %v2097
    %v2220 = vadd.f32 %v1332, %v2102
    %v2221 = vadd.f32 %v1333, %v2107
    %v2222 = vadd.f32 %v1334, %v2112
    %v2223 = vadd.f32 %v1335, %v2117
    %v2224 = vadd.f32 %v1336, %v2122
    %v2225 = vadd.f32 %v1337, %v2127
    %2226 = vst [vmem:[%s9] sm:$0xff] %v2130
    %2227 = vst [vmem:[%s9 + $0x8] sm:$0xff] %v2131
    %2228 = vst [vmem:[%s9 + $0x10] sm:$0xff] %v2132
    %2229 = vst [vmem:[%s9 + $0x18] sm:$0xff] %v2133
    %2230 = vst [vmem:[%s9 + $0x20] sm:$0xff] %v2134
    %2231 = vst [vmem:[%s9 + $0x28] sm:$0xff] %v2135
    %2232 = vst [vmem:[%s9 + $0x30] sm:$0xff] %v2136
    %2233 = vst [vmem:[%s9 + $0x38] sm:$0xff] %v2137
    %2234 = vst [vmem:[%s9 + $0x40] sm:$0xff] %v2138
    %2235 = vst [vmem:[%s9 + $0x48] sm:$0xff] %v2139
    %2236 = vst [vmem:[%s9 + $0x50] sm:$0xff] %v2140
    %2237 = vst [vmem:[%s9 + $0x58] sm:$0xff] %v2141
    %2238 = vst [vmem:[%s9 + $0x60] sm:$0xff] %v2142
    %2239 = vst [vmem:[%s9 + $0x68] sm:$0xff] %v2143
    %2240 = vst [vmem:[%s9 + $0x70] sm:$0xff] %v2144
    %2241 = vst [vmem:[%s9 + $0x78] sm:$0xff] %v2145
    %2242 = vst [vmem:[%s10] sm:$0xff] %v2146
    %2243 = vst [vmem:[%s10 + $0x8] sm:$0xff] %v2147
    %2244 = vst [vmem:[%s10 + $0x10] sm:$0xff] %v2148
    %2245 = vst [vmem:[%s10 + $0x18] sm:$0xff] %v2149
    %2246 = vst [vmem:[%s10 + $0x20] sm:$0xff] %v2150
    %2247 = vst [vmem:[%s10 + $0x28] sm:$0xff] %v2151
    %2248 = vst [vmem:[%s10 + $0x30] sm:$0xff] %v2152
    %2249 = vst [vmem:[%s10 + $0x38] sm:$0xff] %v2153
    %2250 = vst [vmem:[%s10 + $0x40] sm:$0xff] %v2154
    %2251 = vst [vmem:[%s10 + $0x48] sm:$0xff] %v2155
    %2252 = vst [vmem:[%s10 + $0x50] sm:$0xff] %v2156
    %2253 = vst [vmem:[%s10 + $0x58] sm:$0xff] %v2157
    %2254 = vst [vmem:[%s10 + $0x60] sm:$0xff] %v2158
    %2255 = vst [vmem:[%s10 + $0x68] sm:$0xff] %v2159
    %2256 = vst [vmem:[%s10 + $0x70] sm:$0xff] %v2160
    %2257 = vst [vmem:[%s10 + $0x78] sm:$0xff] %v2161
    %2258 = vst [vmem:[%s10 + $0x80] sm:$0xff] %v2162
    %2259 = vst [vmem:[%s10 + $0x88] sm:$0xff] %v2163
    %2260 = vst [vmem:[%s10 + $0x90] sm:$0xff] %v2164
    %2261 = vst [vmem:[%s10 + $0x98] sm:$0xff] %v2165
    %2262 = vst [vmem:[%s10 + $0xa0] sm:$0xff] %v2166
    %2263 = vst [vmem:[%s10 + $0xa8] sm:$0xff] %v2167
    %2264 = vst [vmem:[%s10 + $0xb0] sm:$0xff] %v2168
    %2265 = vst [vmem:[%s10 + $0xb8] sm:$0xff] %v2169
    %2266 = vst [vmem:[%s10 + $0xc0] sm:$0xff] %v2170
    %2267 = vst [vmem:[%s10 + $0xc8] sm:$0xff] %v2171
    %2268 = vst [vmem:[%s10 + $0xd0] sm:$0xff] %v2172
    %2269 = vst [vmem:[%s10 + $0xd8] sm:$0xff] %v2173
    %2270 = vst [vmem:[%s10 + $0xe0] sm:$0xff] %v2174
    %2271 = vst [vmem:[%s10 + $0xe8] sm:$0xff] %v2175
    %2272 = vst [vmem:[%s10 + $0xf0] sm:$0xff] %v2176
    %2273 = vst [vmem:[%s10 + $0xf8] sm:$0xff] %v2177
    %2274 = vst [vmem:[#allocation2] sm:$0xff] %v2178
    %2275 = vst [vmem:[#allocation2 + $0x8] sm:$0xff] %v2179
    %2276 = vst [vmem:[#allocation2 + $0x10] sm:$0xff] %v2180
    %2277 = vst [vmem:[#allocation2 + $0x18] sm:$0xff] %v2181
    %2278 = vst [vmem:[#allocation2 + $0x20] sm:$0xff] %v2182
    %2279 = vst [vmem:[#allocation2 + $0x28] sm:$0xff] %v2183
    %2280 = vst [vmem:[#allocation2 + $0x30] sm:$0xff] %v2184
    %2281 = vst [vmem:[#allocation2 + $0x38] sm:$0xff] %v2185
    %2282 = vst [vmem:[#allocation2 + $0x40] sm:$0xff] %v2186
    %2283 = vst [vmem:[#allocation2 + $0x48] sm:$0xff] %v2187
    %2284 = vst [vmem:[#allocation2 + $0x50] sm:$0xff] %v2188
    %2285 = vst [vmem:[#allocation2 + $0x58] sm:$0xff] %v2189
    %2286 = vst [vmem:[#allocation2 + $0x60] sm:$0xff] %v2190
    %2287 = vst [vmem:[#allocation2 + $0x68] sm:$0xff] %v2191
    %2288 = vst [vmem:[#allocation2 + $0x70] sm:$0xff] %v2192
    %2289 = vst [vmem:[#allocation2 + $0x78] sm:$0xff] %v2193
    %2290 = vst [vmem:[#allocation3] sm:$0xff] %v2194
    %2291 = vst [vmem:[#allocation3 + $0x8] sm:$0xff] %v2195
    %2292 = vst [vmem:[#allocation3 + $0x10] sm:$0xff] %v2196
    %2293 = vst [vmem:[#allocation3 + $0x18] sm:$0xff] %v2197
    %2294 = vst [vmem:[#allocation3 + $0x20] sm:$0xff] %v2198
    %2295 = vst [vmem:[#allocation3 + $0x28] sm:$0xff] %v2199
    %2296 = vst [vmem:[#allocation3 + $0x30] sm:$0xff] %v2200
    %2297 = vst [vmem:[#allocation3 + $0x38] sm:$0xff] %v2201
    %2298 = vst [vmem:[#allocation3 + $0x40] sm:$0xff] %v2202
    %2299 = vst [vmem:[#allocation3 + $0x48] sm:$0xff] %v2203
    %2300 = vst [vmem:[#allocation3 + $0x50] sm:$0xff] %v2204
    %2301 = vst [vmem:[#allocation3 + $0x58] sm:$0xff] %v2205
    %2302 = vst [vmem:[#allocation3 + $0x60] sm:$0xff] %v2206
    %2303 = vst [vmem:[#allocation3 + $0x68] sm:$0xff] %v2207
    %2304 = vst [vmem:[#allocation3 + $0x70] sm:$0xff] %v2208
    %2305 = vst [vmem:[#allocation3 + $0x78] sm:$0xff] %v2209
    %2306 = vst [vmem:[#allocation3 + $0x80] sm:$0xff] %v2210
    %2307 = vst [vmem:[#allocation3 + $0x88] sm:$0xff] %v2211
    %2308 = vst [vmem:[#allocation3 + $0x90] sm:$0xff] %v2212
    %2309 = vst [vmem:[#allocation3 + $0x98] sm:$0xff] %v2213
    %2310 = vst [vmem:[#allocation3 + $0xa0] sm:$0xff] %v2214
    %2311 = vst [vmem:[#allocation3 + $0xa8] sm:$0xff] %v2215
    %2312 = vst [vmem:[#allocation3 + $0xb0] sm:$0xff] %v2216
    %2313 = vst [vmem:[#allocation3 + $0xb8] sm:$0xff] %v2217
    %2314 = vst [vmem:[#allocation3 + $0xc0] sm:$0xff] %v2218
    %2315 = vst [vmem:[#allocation3 + $0xc8] sm:$0xff] %v2219
    %2316 = vst [vmem:[#allocation3 + $0xd0] sm:$0xff] %v2220
    %2317 = vst [vmem:[#allocation3 + $0xd8] sm:$0xff] %v2221
    %2318 = vst [vmem:[#allocation3 + $0xe0] sm:$0xff] %v2222
    %2319 = vst [vmem:[#allocation3 + $0xe8] sm:$0xff] %v2223
    %2320 = vst [vmem:[#allocation3 + $0xf0] sm:$0xff] %v2224
    %2321 = vst [vmem:[#allocation3 + $0xf8] sm:$0xff] %v2225
    %s2322 = sld [smem:[#allocation8]]
    %s2323 = scalar_lea.vmem [#allocation2], %s2322
    %v2324 = vld [vmem:[%s2323] sm:$0x1]
    %2325 = vst [vmem:[#allocation4] sm:$0x1] %v2324
    %s2326 = scalar_lea.vmem %s9, %s2322
    %v2327 = vld [vmem:[%s2326] sm:$0x1]
    %2328 = vst [vmem:[#allocation5] sm:$0x1] %v2327
    %s2329 = sld [smem:[#allocation8 + $0x1]]
    %s2330 = scalar_lea.vmem [#allocation2], %s2329
    %v2331 = vld [vmem:[%s2330] sm:$0x1]
    %2332 = vst [vmem:[#allocation4 + $0x1] sm:$0x1] %v2331
    %s2333 = scalar_lea.vmem %s9, %s2329
    %v2334 = vld [vmem:[%s2333] sm:$0x1]
    %2335 = vst [vmem:[#allocation5 + $0x1] sm:$0x1] %v2334
    %s2336 = sld [smem:[#allocation8 + $0x2]]
    %s2337 = scalar_lea.vmem [#allocation2], %s2336
    %v2338 = vld [vmem:[%s2337] sm:$0x1]
    %2339 = vst [vmem:[#allocation4 + $0x2] sm:$0x1] %v2338
    %s2340 = scalar_lea.vmem %s9, %s2336
    %v2341 = vld [vmem:[%s2340] sm:$0x1]
    %2342 = vst [vmem:[#allocation5 + $0x2] sm:$0x1] %v2341
    %s2343 = sld [smem:[#allocation8 + $0x3]]
    %s2344 = scalar_lea.vmem [#allocation2], %s2343
    %v2345 = vld [vmem:[%s2344] sm:$0x1]
    %2346 = vst [vmem:[#allocation4 + $0x3] sm:$0x1] %v2345
    %s2347 = scalar_lea.vmem %s9, %s2343
    %v2348 = vld [vmem:[%s2347] sm:$0x1]
    %2349 = vst [vmem:[#allocation5 + $0x3] sm:$0x1] %v2348
    %s2350 = sld [smem:[#allocation8 + $0x4]]
    %s2351 = scalar_lea.vmem [#allocation2], %s2350
    %v2352 = vld [vmem:[%s2351] sm:$0x1]
    %2353 = vst [vmem:[#allocation4 + $0x4] sm:$0x1] %v2352
    %s2354 = scalar_lea.vmem %s9, %s2350
    %v2355 = vld [vmem:[%s2354] sm:$0x1]
    %2356 = vst [vmem:[#allocation5 + $0x4] sm:$0x1] %v2355
    %s2357 = sld [smem:[#allocation8 + $0x5]]
    %s2358 = scalar_lea.vmem [#allocation2], %s2357
    %v2359 = vld [vmem:[%s2358] sm:$0x1]
    %2360 = vst [vmem:[#allocation4 + $0x5] sm:$0x1] %v2359
    %s2361 = scalar_lea.vmem %s9, %s2357
    %v2362 = vld [vmem:[%s2361] sm:$0x1]
    %2363 = vst [vmem:[#allocation5 + $0x5] sm:$0x1] %v2362
    %s2364 = sld [smem:[#allocation8 + $0x6]]
    %s2365 = scalar_lea.vmem [#allocation2], %s2364
    %v2366 = vld [vmem:[%s2365] sm:$0x1]
    %2367 = vst [vmem:[#allocation4 + $0x6] sm:$0x1] %v2366
    %s2368 = scalar_lea.vmem %s9, %s2364
    %v2369 = vld [vmem:[%s2368] sm:$0x1]
    %2370 = vst [vmem:[#allocation5 + $0x6] sm:$0x1] %v2369
    %s2371 = sld [smem:[#allocation8 + $0x7]]
    %s2372 = scalar_lea.vmem [#allocation2], %s2371
    %v2373 = vld [vmem:[%s2372] sm:$0x1]
    %2374 = vst [vmem:[#allocation4 + $0x7] sm:$0x1] %v2373
    %s2375 = scalar_lea.vmem %s9, %s2371
    %v2376 = vld [vmem:[%s2375] sm:$0x1]
    %2377 = vst [vmem:[#allocation5 + $0x7] sm:$0x1] %v2376
    %s2378 = sld [smem:[#allocation8 + $0x8]]
    %s2379 = scalar_lea.vmem [#allocation2], %s2378
    %v2380 = vld [vmem:[%s2379] sm:$0x1]
    %2381 = vst [vmem:[#allocation4 + $0x8] sm:$0x1] %v2380
    %s2382 = scalar_lea.vmem %s9, %s2378
    %v2383 = vld [vmem:[%s2382] sm:$0x1]
    %2384 = vst [vmem:[#allocation5 + $0x8] sm:$0x1] %v2383
    %s2385 = sld [smem:[#allocation8 + $0x9]]
    %s2386 = scalar_lea.vmem [#allocation2], %s2385
    %v2387 = vld [vmem:[%s2386] sm:$0x1]
    %2388 = vst [vmem:[#allocation4 + $0x9] sm:$0x1] %v2387
    %s2389 = scalar_lea.vmem %s9, %s2385
    %v2390 = vld [vmem:[%s2389] sm:$0x1]
    %2391 = vst [vmem:[#allocation5 + $0x9] sm:$0x1] %v2390
    %s2392 = sld [smem:[#allocation8 + $0xa]]
    %s2393 = scalar_lea.vmem [#allocation2], %s2392
    %v2394 = vld [vmem:[%s2393] sm:$0x1]
    %2395 = vst [vmem:[#allocation4 + $0xa] sm:$0x1] %v2394
    %s2396 = scalar_lea.vmem %s9, %s2392
    %v2397 = vld [vmem:[%s2396] sm:$0x1]
    %2398 = vst [vmem:[#allocation5 + $0xa] sm:$0x1] %v2397
    %s2399 = sld [smem:[#allocation8 + $0xb]]
    %s2400 = scalar_lea.vmem [#allocation2], %s2399
    %v2401 = vld [vmem:[%s2400] sm:$0x1]
    %2402 = vst [vmem:[#allocation4 + $0xb] sm:$0x1] %v2401
    %s2403 = scalar_lea.vmem %s9, %s2399
    %v2404 = vld [vmem:[%s2403] sm:$0x1]
    %2405 = vst [vmem:[#allocation5 + $0xb] sm:$0x1] %v2404
    %s2406 = sld [smem:[#allocation8 + $0xc]]
    %s2407 = scalar_lea.vmem [#allocation2], %s2406
    %v2408 = vld [vmem:[%s2407] sm:$0x1]
    %2409 = vst [vmem:[#allocation4 + $0xc] sm:$0x1] %v2408
    %s2410 = scalar_lea.vmem %s9, %s2406
    %v2411 = vld [vmem:[%s2410] sm:$0x1]
    %2412 = vst [vmem:[#allocation5 + $0xc] sm:$0x1] %v2411
    %s2413 = sld [smem:[#allocation8 + $0xd]]
    %s2414 = scalar_lea.vmem [#allocation2], %s2413
    %v2415 = vld [vmem:[%s2414] sm:$0x1]
    %2416 = vst [vmem:[#allocation4 + $0xd] sm:$0x1] %v2415
    %s2417 = scalar_lea.vmem %s9, %s2413
    %v2418 = vld [vmem:[%s2417] sm:$0x1]
    %2419 = vst [vmem:[#allocation5 + $0xd] sm:$0x1] %v2418
    %s2420 = sld [smem:[#allocation8 + $0xe]]
    %s2421 = scalar_lea.vmem [#allocation2], %s2420
    %v2422 = vld [vmem:[%s2421] sm:$0x1]
    %2423 = vst [vmem:[#allocation4 + $0xe] sm:$0x1] %v2422
    %s2424 = scalar_lea.vmem %s9, %s2420
    %v2425 = vld [vmem:[%s2424] sm:$0x1]
    %2426 = vst [vmem:[#allocation5 + $0xe] sm:$0x1] %v2425
    %s2427 = sld [smem:[#allocation8 + $0xf]]
    %s2428 = scalar_lea.vmem [#allocation2], %s2427
    %v2429 = vld [vmem:[%s2428] sm:$0x1]
    %2430 = vst [vmem:[#allocation4 + $0xf] sm:$0x1] %v2429
    %s2431 = scalar_lea.vmem %s9, %s2427
    %v2432 = vld [vmem:[%s2431] sm:$0x1]
    %2433 = vst [vmem:[#allocation5 + $0xf] sm:$0x1] %v2432
    %s2434 = sld [smem:[#allocation12]]
    %s2435 = scalar_lea.vmem [#allocation3], %s2434
    %v2436 = vld [vmem:[%s2435] sm:$0x1]
    %2437 = vst [vmem:[#allocation6] sm:$0x1] %v2436
    %s2438 = scalar_lea.vmem %s10, %s2434
    %v2439 = vld [vmem:[%s2438] sm:$0x1]
    %2440 = vst [vmem:[#allocation7] sm:$0x1] %v2439
    %s2441 = sld [smem:[#allocation12 + $0x1]]
    %s2442 = scalar_lea.vmem [#allocation3], %s2441
    %v2443 = vld [vmem:[%s2442] sm:$0x1]
    %2444 = vst [vmem:[#allocation6 + $0x1] sm:$0x1] %v2443
    %s2445 = scalar_lea.vmem %s10, %s2441
    %v2446 = vld [vmem:[%s2445] sm:$0x1]
    %2447 = vst [vmem:[#allocation7 + $0x1] sm:$0x1] %v2446
    %s2448 = sld [smem:[#allocation12 + $0x2]]
    %s2449 = scalar_lea.vmem [#allocation3], %s2448
    %v2450 = vld [vmem:[%s2449] sm:$0x1]
    %2451 = vst [vmem:[#allocation6 + $0x2] sm:$0x1] %v2450
    %s2452 = scalar_lea.vmem %s10, %s2448
    %v2453 = vld [vmem:[%s2452] sm:$0x1]
    %2454 = vst [vmem:[#allocation7 + $0x2] sm:$0x1] %v2453
    %s2455 = sld [smem:[#allocation12 + $0x3]]
    %s2456 = scalar_lea.vmem [#allocation3], %s2455
    %v2457 = vld [vmem:[%s2456] sm:$0x1]
    %2458 = vst [vmem:[#allocation6 + $0x3] sm:$0x1] %v2457
    %s2459 = scalar_lea.vmem %s10, %s2455
    %v2460 = vld [vmem:[%s2459] sm:$0x1]
    %2461 = vst [vmem:[#allocation7 + $0x3] sm:$0x1] %v2460
    %s2462 = sld [smem:[#allocation12 + $0x4]]
    %s2463 = scalar_lea.vmem [#allocation3], %s2462
    %v2464 = vld [vmem:[%s2463] sm:$0x1]
    %2465 = vst [vmem:[#allocation6 + $0x4] sm:$0x1] %v2464
    %s2466 = scalar_lea.vmem %s10, %s2462
    %v2467 = vld [vmem:[%s2466] sm:$0x1]
    %2468 = vst [vmem:[#allocation7 + $0x4] sm:$0x1] %v2467
    %s2469 = sld [smem:[#allocation12 + $0x5]]
    %s2470 = scalar_lea.vmem [#allocation3], %s2469
    %v2471 = vld [vmem:[%s2470] sm:$0x1]
    %2472 = vst [vmem:[#allocation6 + $0x5] sm:$0x1] %v2471
    %s2473 = scalar_lea.vmem %s10, %s2469
    %v2474 = vld [vmem:[%s2473] sm:$0x1]
    %2475 = vst [vmem:[#allocation7 + $0x5] sm:$0x1] %v2474
    %s2476 = sld [smem:[#allocation12 + $0x6]]
    %s2477 = scalar_lea.vmem [#allocation3], %s2476
    %v2478 = vld [vmem:[%s2477] sm:$0x1]
    %2479 = vst [vmem:[#allocation6 + $0x6] sm:$0x1] %v2478
    %s2480 = scalar_lea.vmem %s10, %s2476
    %v2481 = vld [vmem:[%s2480] sm:$0x1]
    %2482 = vst [vmem:[#allocation7 + $0x6] sm:$0x1] %v2481
    %s2483 = sld [smem:[#allocation12 + $0x7]]
    %s2484 = scalar_lea.vmem [#allocation3], %s2483
    %v2485 = vld [vmem:[%s2484] sm:$0x1]
    %2486 = vst [vmem:[#allocation6 + $0x7] sm:$0x1] %v2485
    %s2487 = scalar_lea.vmem %s10, %s2483
    %v2488 = vld [vmem:[%s2487] sm:$0x1]
    %2489 = vst [vmem:[#allocation7 + $0x7] sm:$0x1] %v2488
    %s2490 = sld [smem:[#allocation12 + $0x8]]
    %s2491 = scalar_lea.vmem [#allocation3], %s2490
    %v2492 = vld [vmem:[%s2491] sm:$0x1]
    %2493 = vst [vmem:[#allocation6 + $0x8] sm:$0x1] %v2492
    %s2494 = scalar_lea.vmem %s10, %s2490
    %v2495 = vld [vmem:[%s2494] sm:$0x1]
    %2496 = vst [vmem:[#allocation7 + $0x8] sm:$0x1] %v2495
    %s2497 = sld [smem:[#allocation12 + $0x9]]
    %s2498 = scalar_lea.vmem [#allocation3], %s2497
    %v2499 = vld [vmem:[%s2498] sm:$0x1]
    %2500 = vst [vmem:[#allocation6 + $0x9] sm:$0x1] %v2499
    %s2501 = scalar_lea.vmem %s10, %s2497
    %v2502 = vld [vmem:[%s2501] sm:$0x1]
    %2503 = vst [vmem:[#allocation7 + $0x9] sm:$0x1] %v2502
    %s2504 = sld [smem:[#allocation12 + $0xa]]
    %s2505 = scalar_lea.vmem [#allocation3], %s2504
    %v2506 = vld [vmem:[%s2505] sm:$0x1]
    %2507 = vst [vmem:[#allocation6 + $0xa] sm:$0x1] %v2506
    %s2508 = scalar_lea.vmem %s10, %s2504
    %v2509 = vld [vmem:[%s2508] sm:$0x1]
    %2510 = vst [vmem:[#allocation7 + $0xa] sm:$0x1] %v2509
    %s2511 = sld [smem:[#allocation12 + $0xb]]
    %s2512 = scalar_lea.vmem [#allocation3], %s2511
    %v2513 = vld [vmem:[%s2512] sm:$0x1]
    %2514 = vst [vmem:[#allocation6 + $0xb] sm:$0x1] %v2513
    %s2515 = scalar_lea.vmem %s10, %s2511
    %v2516 = vld [vmem:[%s2515] sm:$0x1]
    %2517 = vst [vmem:[#allocation7 + $0xb] sm:$0x1] %v2516
    %s2518 = sld [smem:[#allocation12 + $0xc]]
    %s2519 = scalar_lea.vmem [#allocation3], %s2518
    %v2520 = vld [vmem:[%s2519] sm:$0x1]
    %2521 = vst [vmem:[#allocation6 + $0xc] sm:$0x1] %v2520
    %s2522 = scalar_lea.vmem %s10, %s2518
    %v2523 = vld [vmem:[%s2522] sm:$0x1]
    %2524 = vst [vmem:[#allocation7 + $0xc] sm:$0x1] %v2523
    %s2525 = sld [smem:[#allocation12 + $0xd]]
    %s2526 = scalar_lea.vmem [#allocation3], %s2525
    %v2527 = vld [vmem:[%s2526] sm:$0x1]
    %2528 = vst [vmem:[#allocation6 + $0xd] sm:$0x1] %v2527
    %s2529 = scalar_lea.vmem %s10, %s2525
    %v2530 = vld [vmem:[%s2529] sm:$0x1]
    %2531 = vst [vmem:[#allocation7 + $0xd] sm:$0x1] %v2530
    %s2532 = sld [smem:[#allocation12 + $0xe]]
    %s2533 = scalar_lea.vmem [#allocation3], %s2532
    %v2534 = vld [vmem:[%s2533] sm:$0x1]
    %2535 = vst [vmem:[#allocation6 + $0xe] sm:$0x1] %v2534
    %s2536 = scalar_lea.vmem %s10, %s2532
    %v2537 = vld [vmem:[%s2536] sm:$0x1]
    %2538 = vst [vmem:[#allocation7 + $0xe] sm:$0x1] %v2537
    %s2539 = sld [smem:[#allocation12 + $0xf]]
    %s2540 = scalar_lea.vmem [#allocation3], %s2539
    %v2541 = vld [vmem:[%s2540] sm:$0x1]
    %2542 = vst [vmem:[#allocation6 + $0xf] sm:$0x1] %v2541
    %s2543 = scalar_lea.vmem %s10, %s2539
    %v2544 = vld [vmem:[%s2543] sm:$0x1]
    %2545 = vst [vmem:[#allocation7 + $0xf] sm:$0x1] %v2544
    %s2546 = sld [smem:[#allocation12 + $0x10]]
    %s2547 = scalar_lea.vmem [#allocation3], %s2546
    %v2548 = vld [vmem:[%s2547] sm:$0x1]
    %2549 = vst [vmem:[#allocation6 + $0x10] sm:$0x1] %v2548
    %s2550 = scalar_lea.vmem %s10, %s2546
    %v2551 = vld [vmem:[%s2550] sm:$0x1]
    %2552 = vst [vmem:[#allocation7 + $0x10] sm:$0x1] %v2551
    %s2553 = sld [smem:[#allocation12 + $0x11]]
    %s2554 = scalar_lea.vmem [#allocation3], %s2553
    %v2555 = vld [vmem:[%s2554] sm:$0x1]
    %2556 = vst [vmem:[#allocation6 + $0x11] sm:$0x1] %v2555
    %s2557 = scalar_lea.vmem %s10, %s2553
    %v2558 = vld [vmem:[%s2557] sm:$0x1]
    %2559 = vst [vmem:[#allocation7 + $0x11] sm:$0x1] %v2558
    %s2560 = sld [smem:[#allocation12 + $0x12]]
    %s2561 = scalar_lea.vmem [#allocation3], %s2560
    %v2562 = vld [vmem:[%s2561] sm:$0x1]
    %2563 = vst [vmem:[#allocation6 + $0x12] sm:$0x1] %v2562
    %s2564 = scalar_lea.vmem %s10, %s2560
    %v2565 = vld [vmem:[%s2564] sm:$0x1]
    %2566 = vst [vmem:[#allocation7 + $0x12] sm:$0x1] %v2565
    %s2567 = sld [smem:[#allocation12 + $0x13]]
    %s2568 = scalar_lea.vmem [#allocation3], %s2567
    %v2569 = vld [vmem:[%s2568] sm:$0x1]
    %2570 = vst [vmem:[#allocation6 + $0x13] sm:$0x1] %v2569
    %s2571 = scalar_lea.vmem %s10, %s2567
    %v2572 = vld [vmem:[%s2571] sm:$0x1]
    %2573 = vst [vmem:[#allocation7 + $0x13] sm:$0x1] %v2572
    %s2574 = sld [smem:[#allocation12 + $0x14]]
    %s2575 = scalar_lea.vmem [#allocation3], %s2574
    %v2576 = vld [vmem:[%s2575] sm:$0x1]
    %2577 = vst [vmem:[#allocation6 + $0x14] sm:$0x1] %v2576
    %s2578 = scalar_lea.vmem %s10, %s2574
    %v2579 = vld [vmem:[%s2578] sm:$0x1]
    %2580 = vst [vmem:[#allocation7 + $0x14] sm:$0x1] %v2579
    %s2581 = sld [smem:[#allocation12 + $0x15]]
    %s2582 = scalar_lea.vmem [#allocation3], %s2581
    %v2583 = vld [vmem:[%s2582] sm:$0x1]
    %2584 = vst [vmem:[#allocation6 + $0x15] sm:$0x1] %v2583
    %s2585 = scalar_lea.vmem %s10, %s2581
    %v2586 = vld [vmem:[%s2585] sm:$0x1]
    %2587 = vst [vmem:[#allocation7 + $0x15] sm:$0x1] %v2586
    %s2588 = sld [smem:[#allocation12 + $0x16]]
    %s2589 = scalar_lea.vmem [#allocation3], %s2588
    %v2590 = vld [vmem:[%s2589] sm:$0x1]
    %2591 = vst [vmem:[#allocation6 + $0x16] sm:$0x1] %v2590
    %s2592 = scalar_lea.vmem %s10, %s2588
    %v2593 = vld [vmem:[%s2592] sm:$0x1]
    %2594 = vst [vmem:[#allocation7 + $0x16] sm:$0x1] %v2593
    %s2595 = sld [smem:[#allocation12 + $0x17]]
    %s2596 = scalar_lea.vmem [#allocation3], %s2595
    %v2597 = vld [vmem:[%s2596] sm:$0x1]
    %2598 = vst [vmem:[#allocation6 + $0x17] sm:$0x1] %v2597
    %s2599 = scalar_lea.vmem %s10, %s2595
    %v2600 = vld [vmem:[%s2599] sm:$0x1]
    %2601 = vst [vmem:[#allocation7 + $0x17] sm:$0x1] %v2600
    %s2602 = sld [smem:[#allocation12 + $0x18]]
    %s2603 = scalar_lea.vmem [#allocation3], %s2602
    %v2604 = vld [vmem:[%s2603] sm:$0x1]
    %2605 = vst [vmem:[#allocation6 + $0x18] sm:$0x1] %v2604
    %s2606 = scalar_lea.vmem %s10, %s2602
    %v2607 = vld [vmem:[%s2606] sm:$0x1]
    %2608 = vst [vmem:[#allocation7 + $0x18] sm:$0x1] %v2607
    %s2609 = sld [smem:[#allocation12 + $0x19]]
    %s2610 = scalar_lea.vmem [#allocation3], %s2609
    %v2611 = vld [vmem:[%s2610] sm:$0x1]
    %2612 = vst [vmem:[#allocation6 + $0x19] sm:$0x1] %v2611
    %s2613 = scalar_lea.vmem %s10, %s2609
    %v2614 = vld [vmem:[%s2613] sm:$0x1]
    %2615 = vst [vmem:[#allocation7 + $0x19] sm:$0x1] %v2614
    %s2616 = sld [smem:[#allocation12 + $0x1a]]
    %s2617 = scalar_lea.vmem [#allocation3], %s2616
    %v2618 = vld [vmem:[%s2617] sm:$0x1]
    %2619 = vst [vmem:[#allocation6 + $0x1a] sm:$0x1] %v2618
    %s2620 = scalar_lea.vmem %s10, %s2616
    %v2621 = vld [vmem:[%s2620] sm:$0x1]
    %2622 = vst [vmem:[#allocation7 + $0x1a] sm:$0x1] %v2621
    %s2623 = sld [smem:[#allocation12 + $0x1b]]
    %s2624 = scalar_lea.vmem [#allocation3], %s2623
    %v2625 = vld [vmem:[%s2624] sm:$0x1]
    %2626 = vst [vmem:[#allocation6 + $0x1b] sm:$0x1] %v2625
    %s2627 = scalar_lea.vmem %s10, %s2623
    %v2628 = vld [vmem:[%s2627] sm:$0x1]
    %2629 = vst [vmem:[#allocation7 + $0x1b] sm:$0x1] %v2628
    %s2630 = sld [smem:[#allocation12 + $0x1c]]
    %s2631 = scalar_lea.vmem [#allocation3], %s2630
    %v2632 = vld [vmem:[%s2631] sm:$0x1]
    %2633 = vst [vmem:[#allocation6 + $0x1c] sm:$0x1] %v2632
    %s2634 = scalar_lea.vmem %s10, %s2630
    %v2635 = vld [vmem:[%s2634] sm:$0x1]
    %2636 = vst [vmem:[#allocation7 + $0x1c] sm:$0x1] %v2635
    %s2637 = sld [smem:[#allocation12 + $0x1d]]
    %s2638 = scalar_lea.vmem [#allocation3], %s2637
    %v2639 = vld [vmem:[%s2638] sm:$0x1]
    %2640 = vst [vmem:[#allocation6 + $0x1d] sm:$0x1] %v2639
    %s2641 = scalar_lea.vmem %s10, %s2637
    %v2642 = vld [vmem:[%s2641] sm:$0x1]
    %2643 = vst [vmem:[#allocation7 + $0x1d] sm:$0x1] %v2642
    %s2644 = sld [smem:[#allocation12 + $0x1e]]
    %s2645 = scalar_lea.vmem [#allocation3], %s2644
    %v2646 = vld [vmem:[%s2645] sm:$0x1]
    %2647 = vst [vmem:[#allocation6 + $0x1e] sm:$0x1] %v2646
    %s2648 = scalar_lea.vmem %s10, %s2644
    %v2649 = vld [vmem:[%s2648] sm:$0x1]
    %2650 = vst [vmem:[#allocation7 + $0x1e] sm:$0x1] %v2649
    %s2651 = sld [smem:[#allocation12 + $0x1f]]
    %s2652 = scalar_lea.vmem [#allocation3], %s2651
    %v2653 = vld [vmem:[%s2652] sm:$0x1]
    %2654 = vst [vmem:[#allocation6 + $0x1f] sm:$0x1] %v2653
    %s2655 = scalar_lea.vmem %s10, %s2651
    %v2656 = vld [vmem:[%s2655] sm:$0x1]
    %2657 = vst [vmem:[#allocation7 + $0x1f] sm:$0x1] %v2656
    %v2658 = vld [vmem:[#allocation4] sm:$0xff]
    %v2659 = vld [vmem:[#allocation4 + $0x8] sm:$0xff]
    %v2660 = vld [vmem:[#allocation5] sm:$0xff]
    %v2661 = vld [vmem:[#allocation5 + $0x8] sm:$0xff]
    %v2662 = vld [vmem:[#allocation6] sm:$0xff]
    %v2663 = vld [vmem:[#allocation6 + $0x8] sm:$0xff]
    %v2664 = vld [vmem:[#allocation6 + $0x10] sm:$0xff]
    %v2665 = vld [vmem:[#allocation6 + $0x18] sm:$0xff]
    %v2666 = vld [vmem:[#allocation7] sm:$0xff]
    %v2667 = vld [vmem:[#allocation7 + $0x8] sm:$0xff]
    %v2668 = vld [vmem:[#allocation7 + $0x10] sm:$0xff]
    %v2669 = vld [vmem:[#allocation7 + $0x18] sm:$0xff]
    %v2670 = vmul.f32 %v2658, 5.0
    %v2671 = vmul.f32 %v2659, 5.0
    %2672 = vmatprep.subr.mxu0 0.0
    %2673 = vmatpush1.xpose.msra.mxu0 %v2145
    %2674 = vmatprep.subr.mxu0 0.0
    %2675 = vmatpush1.xpose.msra.mxu0 %v2144
    %2676 = vmatprep.subr.mxu0 0.0
    %2677 = vmatpush1.xpose.msra.mxu0 %v2143
    %2678 = vmatprep.subr.mxu0 0.0
    %2679 = vmatpush1.xpose.msra.mxu0 %v2142
    %2680 = vmatprep.subr.mxu0 0.0
    %2681 = vmatpush1.xpose.msra.mxu0 %v2141
    %2682 = vmatprep.subr.mxu0 0.0
    %2683 = vmatpush1.xpose.msra.mxu0 %v2140
    %2684 = vmatprep.subr.mxu0 0.0
    %2685 = vmatpush1.xpose.msra.mxu0 %v2139
    %2686 = vmatprep.subr.mxu0 0.0
    %2687 = vmatpush1.xpose.msra.mxu0 %v2138
    %2688 = vmatprep.subr.mxu0 0.0
    %2689 = vmatpush1.xpose.msra.mxu0 %v2137
    %2690 = vmatprep.subr.mxu0 0.0
    %2691 = vmatpush1.xpose.msra.mxu0 %v2136
    %2692 = vmatprep.subr.mxu0 0.0
    %2693 = vmatpush1.xpose.msra.mxu0 %v2135
    %2694 = vmatprep.subr.mxu0 0.0
    %2695 = vmatpush1.xpose.msra.mxu0 %v2134
    %2696 = vmatprep.subr.mxu0 0.0
    %2697 = vmatpush1.xpose.msra.mxu0 %v2133
    %2698 = vmatprep.subr.mxu0 0.0
    %2699 = vmatpush1.xpose.msra.mxu0 %v2132
    %2700 = vmatprep.subr.mxu0 0.0
    %2701 = vmatpush1.xpose.msra.mxu0 %v2131
    %2702 = vmatprep.subr.mxu0 0.0
    %2703 = vmatpush1.xpose.msra.mxu0 %v2130
    %2704 = vmatprep.subr.mxu0 0.0
    %2705 = vmatpush2.xpose.msra.mxu0 0.0
    %2706 = vmatprep.subr.mxu0 0.0
    %2707 = vmatpush2.xpose.msra.mxu0 0.0
    %2708 = vmatprep.subr.mxu0 0.0
    %2709 = vmatpush2.xpose.msra.mxu0 0.0
    %2710 = vmatprep.subr.mxu0 0.0
    %2711 = vmatpush2.xpose.msra.mxu0 0.0
    %2712 = vmatprep.subr.mxu0 0.0
    %2713 = vmatpush2.xpose.msra.mxu0 0.0
    %2714 = vmatprep.subr.mxu0 0.0
    %2715 = vmatpush2.xpose.msra.mxu0 0.0
    %2716 = vmatprep.subr.mxu0 0.0
    %2717 = vmatpush2.xpose.msra.mxu0 0.0
    %2718 = vmatprep.subr.mxu0 0.0
    %2719 = vmatpush2.xpose.msra.mxu0 0.0
    %2720 = vmatprep.subr.mxu0 0.0
    %2721 = vmatpush2.xpose.msra.mxu0 0.0
    %2722 = vmatprep.subr.mxu0 0.0
    %2723 = vmatpush2.xpose.msra.mxu0 0.0
    %2724 = vmatprep.subr.mxu0 0.0
    %2725 = vmatpush2.xpose.msra.mxu0 0.0
    %2726 = vmatprep.subr.mxu0 0.0
    %2727 = vmatpush2.xpose.msra.mxu0 0.0
    %2728 = vmatprep.subr.mxu0 0.0
    %2729 = vmatpush2.xpose.msra.mxu0 0.0
    %2730 = vmatprep.subr.mxu0 0.0
    %2731 = vmatpush2.xpose.msra.mxu0 0.0
    %2732 = vmatprep.subr.mxu0 0.0
    %2733 = vmatpush2.xpose.msra.mxu0 0.0
    %2734 = vmatprep.subr.mxu0 0.0
    %2735 = vmatpush2.xpose.msra.mxu0 0.0
    %2736 = vmatprep.mubr.f32.mxu0 0.0
    %2737 = vmatmul.mubr.f32.gmra.mxu0 %v2670
    %v2738 = vpop.f32.mrf.mxu0
    %v2739 = vadd.f32 0.0, %v2738
    %v2740 = vpop.f32.mrf.mxu0
    %2741 = vmatprep.mubr.f32.mxu0 0.0
    %2742 = vmatmul.mubr.f32.gmra.mxu0 %v2671
    %v2743 = vpop.f32.mrf.mxu0
    %v2744 = vadd.f32 0.0, %v2743
    %v2745 = vpop.f32.mrf.mxu0
    %2746 = vdwg.mxu0
    %2747 = vmax.xlane.f32.xlu0 %v2739
    %v2748 = vpop.xlane.xlu0 %2747
    %2749 = vmax.xlane.f32.xlu0 %v2744
    %v2750 = vpop.xlane.xlu0 %2749
    %v2751 = vsub.f32 %v2739, %v2748
    %v2752 = vsub.f32 %v2744, %v2750
    %v2753 = vmul.f32 %v2751, 1.442695
    %v2754 = vpow.pop %v2753
    %v2755 = vmul.f32 %v2752, 1.442695
    %v2756 = vpow.pop %v2755
    %2757 = vadd.xlane.f32.xlu0 %v2754
    %v2758 = vpop.xlane.xlu0 %2757
    %2759 = vadd.xlane.f32.xlu0 %v2756
    %v2760 = vpop.xlane.xlu0 %2759
    %v2761 = vlog2.pop %v2758
    %v2762 = vmul.f32 %v2761, 0.6931472
    %v2763 = vlog2.pop %v2760
    %v2764 = vmul.f32 %v2763, 0.6931472
    %v2765 = vadd.f32 %v2748, %v2762
    %v2766 = vadd.f32 %v2750, %v2764
    %v2767 = vmax.f32 %v2765, -18.420681
    %v2768 = vmax.f32 %v2766, -18.420681
    %v2769 = vsub.f32 %v2765, -18.420681
    %v2770 = vsub.f32 %v2766, -18.420681
    %v2771 = vand.u32 2147483647, %v2769
    %v2772 = vand.u32 2147483647, %v2770
    %v2773 = vsub.f32 0.0, %v2771
    %v2774 = vsub.f32 0.0, %v2772
    %v2775 = vmul.f32 %v2773, 1.442695
    %v2776 = vpow.pop %v2775
    %v2777 = vmul.f32 %v2774, 1.442695
    %v2778 = vpow.pop %v2777
    %v2779 = vadd.f32 %v2776, 1.0
    %v2780 = vadd.f32 %v2778, 1.0
    %v2781 = vlog2.pop %v2779
    %v2782 = vmul.f32 %v2781, 0.6931472
    %v2783 = vlog2.pop %v2780
    %v2784 = vmul.f32 %v2783, 0.6931472
    %v2785 = vadd.f32 %v2767, %v2782
    %v2786 = vadd.f32 %v2768, %v2784
    %v2787 = vmul.f32 %v2670, %v2660
    %v2788 = vmul.f32 %v2671, %v2661
    %2789 = vadd.xlane.f32.xlu0 %v2787
    %v2790 = vpop.xlane.xlu0 %2789
    %2791 = vadd.xlane.f32.xlu0 %v2788
    %v2792 = vpop.xlane.xlu0 %2791
    %v2793 = vmax.f32 %v2790, -5.0
    %v2794 = vmax.f32 %v2792, -5.0
    %v2795 = vmin.f32 %v2793, 5.0
    %v2796 = vmin.f32 %v2794, 5.0
    %v2797 = vadd.f32 %v2785, %v2786
    %v2798 = vrot.slane %v2797, 4
    %v2799 = vadd.f32 %v2797, %v2798
    %v2800 = vrot.slane %v2799, 2
    %v2801 = vadd.f32 %v2799, %v2800
    %v2802 = vrot.slane %v2801, 1
    %v2803 = vadd.f32 %v2801, %v2802
    %v2804 = vmul.f32 %v2803, 0.0625
    %v2805 = vadd.f32 %v2795, %v2796
    %v2806 = vrot.slane %v2805, 4
    %v2807 = vadd.f32 %v2805, %v2806
    %v2808 = vrot.slane %v2807, 2
    %v2809 = vadd.f32 %v2807, %v2808
    %v2810 = vrot.slane %v2809, 1
    %v2811 = vadd.f32 %v2809, %v2810
    %v2812 = vmul.f32 %v2811, 0.0625
    %v2813 = vmul.f32 %v2662, 5.0
    %v2814 = vmul.f32 %v2663, 5.0
    %v2815 = vmul.f32 %v2664, 5.0
    %v2816 = vmul.f32 %v2665, 5.0
    %2817 = vmatprep.subr.mxu0 0.0
    %2818 = vmatpush1.xpose.msra.mxu0 %v2161
    %2819 = vmatprep.subr.mxu0 0.0
    %2820 = vmatpush1.xpose.msra.mxu0 %v2160
    %2821 = vmatprep.subr.mxu0 0.0
    %2822 = vmatpush1.xpose.msra.mxu0 %v2159
    %2823 = vmatprep.subr.mxu0 0.0
    %2824 = vmatpush1.xpose.msra.mxu0 %v2158
    %2825 = vmatprep.subr.mxu0 0.0
    %2826 = vmatpush1.xpose.msra.mxu0 %v2157
    %2827 = vmatprep.subr.mxu0 0.0
    %2828 = vmatpush1.xpose.msra.mxu0 %v2156
    %2829 = vmatprep.subr.mxu0 0.0
    %2830 = vmatpush1.xpose.msra.mxu0 %v2155
    %2831 = vmatprep.subr.mxu0 0.0
    %2832 = vmatpush1.xpose.msra.mxu0 %v2154
    %2833 = vmatprep.subr.mxu0 0.0
    %2834 = vmatpush1.xpose.msra.mxu0 %v2153
    %2835 = vmatprep.subr.mxu0 0.0
    %2836 = vmatpush1.xpose.msra.mxu0 %v2152
    %2837 = vmatprep.subr.mxu0 0.0
    %2838 = vmatpush1.xpose.msra.mxu0 %v2151
    %2839 = vmatprep.subr.mxu0 0.0
    %2840 = vmatpush1.xpose.msra.mxu0 %v2150
    %2841 = vmatprep.subr.mxu0 0.0
    %2842 = vmatpush1.xpose.msra.mxu0 %v2149
    %2843 = vmatprep.subr.mxu0 0.0
    %2844 = vmatpush1.xpose.msra.mxu0 %v2148
    %2845 = vmatprep.subr.mxu0 0.0
    %2846 = vmatpush1.xpose.msra.mxu0 %v2147
    %2847 = vmatprep.subr.mxu0 0.0
    %2848 = vmatpush1.xpose.msra.mxu0 %v2146
    %2849 = vmatprep.subr.mxu0 0.0
    %2850 = vmatpush2.xpose.msra.mxu0 %v2177
    %2851 = vmatprep.subr.mxu0 0.0
    %2852 = vmatpush2.xpose.msra.mxu0 %v2176
    %2853 = vmatprep.subr.mxu0 0.0
    %2854 = vmatpush2.xpose.msra.mxu0 %v2175
    %2855 = vmatprep.subr.mxu0 0.0
    %2856 = vmatpush2.xpose.msra.mxu0 %v2174
    %2857 = vmatprep.subr.mxu0 0.0
    %2858 = vmatpush2.xpose.msra.mxu0 %v2173
    %2859 = vmatprep.subr.mxu0 0.0
    %2860 = vmatpush2.xpose.msra.mxu0 %v2172
    %2861 = vmatprep.subr.mxu0 0.0
    %2862 = vmatpush2.xpose.msra.mxu0 %v2171
    %2863 = vmatprep.subr.mxu0 0.0
    %2864 = vmatpush2.xpose.msra.mxu0 %v2170
    %2865 = vmatprep.subr.mxu0 0.0
    %2866 = vmatpush2.xpose.msra.mxu0 %v2169
    %2867 = vmatprep.subr.mxu0 0.0
    %2868 = vmatpush2.xpose.msra.mxu0 %v2168
    %2869 = vmatprep.subr.mxu0 0.0
    %2870 = vmatpush2.xpose.msra.mxu0 %v2167
    %2871 = vmatprep.subr.mxu0 0.0
    %2872 = vmatpush2.xpose.msra.mxu0 %v2166
    %2873 = vmatprep.subr.mxu0 0.0
    %2874 = vmatpush2.xpose.msra.mxu0 %v2165
    %2875 = vmatprep.subr.mxu0 0.0
    %2876 = vmatpush2.xpose.msra.mxu0 %v2164
    %2877 = vmatprep.subr.mxu0 0.0
    %2878 = vmatpush2.xpose.msra.mxu0 %v2163
    %2879 = vmatprep.subr.mxu0 0.0
    %2880 = vmatpush2.xpose.msra.mxu0 %v2162
    %2881 = vmatprep.mubr.f32.mxu0 0.0
    %2882 = vmatmul.mubr.f32.gmra.mxu0 %v2813
    %v2883 = vpop.f32.mrf.mxu0
    %v2884 = vadd.f32 0.0, %v2883
    %v2885 = vpop.f32.mrf.mxu0
    %v2886 = vadd.f32 0.0, %v2885
    %2887 = vmatprep.mubr.f32.mxu0 0.0
    %2888 = vmatmul.mubr.f32.gmra.mxu0 %v2814
    %v2889 = vpop.f32.mrf.mxu0
    %v2890 = vadd.f32 0.0, %v2889
    %v2891 = vpop.f32.mrf.mxu0
    %v2892 = vadd.f32 0.0, %v2891
    %2893 = vmatprep.mubr.f32.mxu0 0.0
    %2894 = vmatmul.mubr.f32.gmra.mxu0 %v2815
    %v2895 = vpop.f32.mrf.mxu0
    %v2896 = vadd.f32 0.0, %v2895
    %v2897 = vpop.f32.mrf.mxu0
    %v2898 = vadd.f32 0.0, %v2897
    %2899 = vmatprep.mubr.f32.mxu0 0.0
    %2900 = vmatmul.mubr.f32.gmra.mxu0 %v2816
    %v2901 = vpop.f32.mrf.mxu0
    %v2902 = vadd.f32 0.0, %v2901
    %v2903 = vpop.f32.mrf.mxu0
    %v2904 = vadd.f32 0.0, %v2903
    %2905 = vdwg.mxu0
    %v2906 = vmax.f32 %v2884, %v2886
    %2907 = vmax.xlane.f32.xlu0 %v2906
    %v2908 = vpop.xlane.xlu0 %2907
    %v2909 = vmax.f32 %v2890, %v2892
    %2910 = vmax.xlane.f32.xlu0 %v2909
    %v2911 = vpop.xlane.xlu0 %2910
    %v2912 = vmax.f32 %v2896, %v2898
    %2913 = vmax.xlane.f32.xlu0 %v2912
    %v2914 = vpop.xlane.xlu0 %2913
    %v2915 = vmax.f32 %v2902, %v2904
    %2916 = vmax.xlane.f32.xlu0 %v2915
    %v2917 = vpop.xlane.xlu0 %2916
    %v2918 = vsub.f32 %v2884, %v2908
    %v2919 = vsub.f32 %v2886, %v2908
    %v2920 = vsub.f32 %v2890, %v2911
    %v2921 = vsub.f32 %v2892, %v2911
    %v2922 = vsub.f32 %v2896, %v2914
    %v2923 = vsub.f32 %v2898, %v2914
    %v2924 = vsub.f32 %v2902, %v2917
    %v2925 = vsub.f32 %v2904, %v2917
    %v2926 = vmul.f32 %v2918, 1.442695
    %v2927 = vpow.pop %v2926
    %v2928 = vmul.f32 %v2919, 1.442695
    %v2929 = vpow.pop %v2928
    %v2930 = vmul.f32 %v2920, 1.442695
    %v2931 = vpow.pop %v2930
    %v2932 = vmul.f32 %v2921, 1.442695
    %v2933 = vpow.pop %v2932
    %v2934 = vmul.f32 %v2922, 1.442695
    %v2935 = vpow.pop %v2934
    %v2936 = vmul.f32 %v2923, 1.442695
    %v2937 = vpow.pop %v2936
    %v2938 = vmul.f32 %v2924, 1.442695
    %v2939 = vpow.pop %v2938
    %v2940 = vmul.f32 %v2925, 1.442695
    %v2941 = vpow.pop %v2940
    %v2942 = vadd.f32 %v2927, %v2929
    %2943 = vadd.xlane.f32.xlu0 %v2942
    %v2944 = vpop.xlane.xlu0 %2943
    %v2945 = vadd.f32 %v2931, %v2933
    %2946 = vadd.xlane.f32.xlu0 %v2945
    %v2947 = vpop.xlane.xlu0 %2946
    %v2948 = vadd.f32 %v2935, %v2937
    %2949 = vadd.xlane.f32.xlu0 %v2948
    %v2950 = vpop.xlane.xlu0 %2949
    %v2951 = vadd.f32 %v2939, %v2941
    %2952 = vadd.xlane.f32.xlu0 %v2951
    %v2953 = vpop.xlane.xlu0 %2952
    %v2954 = vlog2.pop %v2944
    %v2955 = vmul.f32 %v2954, 0.6931472
    %v2956 = vlog2.pop %v2947
    %v2957 = vmul.f32 %v2956, 0.6931472
    %v2958 = vlog2.pop %v2950
    %v2959 = vmul.f32 %v2958, 0.6931472
    %v2960 = vlog2.pop %v2953
    %v2961 = vmul.f32 %v2960, 0.6931472
    %v2962 = vadd.f32 %v2908, %v2955
    %v2963 = vadd.f32 %v2911, %v2957
    %v2964 = vadd.f32 %v2914, %v2959
    %v2965 = vadd.f32 %v2917, %v2961
    %v2966 = vmax.f32 %v2962, -18.420681
    %v2967 = vmax.f32 %v2963, -18.420681
    %v2968 = vmax.f32 %v2964, -18.420681
    %v2969 = vmax.f32 %v2965, -18.420681
    %v2970 = vsub.f32 %v2962, -18.420681
    %v2971 = vsub.f32 %v2963, -18.420681
    %v2972 = vsub.f32 %v2964, -18.420681
    %v2973 = vsub.f32 %v2965, -18.420681
    %v2974 = vand.u32 2147483647, %v2970
    %v2975 = vand.u32 2147483647, %v2971
    %v2976 = vand.u32 2147483647, %v2972
    %v2977 = vand.u32 2147483647, %v2973
    %v2978 = vsub.f32 0.0, %v2974
    %v2979 = vsub.f32 0.0, %v2975
    %v2980 = vsub.f32 0.0, %v2976
    %v2981 = vsub.f32 0.0, %v2977
    %v2982 = vmul.f32 %v2978, 1.442695
    %v2983 = vpow.pop %v2982
    %v2984 = vmul.f32 %v2979, 1.442695
    %v2985 = vpow.pop %v2984
    %v2986 = vmul.f32 %v2980, 1.442695
    %v2987 = vpow.pop %v2986
    %v2988 = vmul.f32 %v2981, 1.442695
    %v2989 = vpow.pop %v2988
    %v2990 = vadd.f32 %v2983, 1.0
    %v2991 = vadd.f32 %v2985, 1.0
    %v2992 = vadd.f32 %v2987, 1.0
    %v2993 = vadd.f32 %v2989, 1.0
    %v2994 = vlog2.pop %v2990
    %v2995 = vmul.f32 %v2994, 0.6931472
    %v2996 = vlog2.pop %v2991
    %v2997 = vmul.f32 %v2996, 0.6931472
    %v2998 = vlog2.pop %v2992
    %v2999 = vmul.f32 %v2998, 0.6931472
    %v3000 = vlog2.pop %v2993
    %v3001 = vmul.f32 %v3000, 0.6931472
    %v3002 = vadd.f32 %v2966, %v2995
    %v3003 = vadd.f32 %v2967, %v2997
    %v3004 = vadd.f32 %v2968, %v2999
    %v3005 = vadd.f32 %v2969, %v3001
    %v3006 = vmul.f32 %v2813, %v2666
    %v3007 = vmul.f32 %v2814, %v2667
    %v3008 = vmul.f32 %v2815, %v2668
    %v3009 = vmul.f32 %v2816, %v2669
    %3010 = vadd.xlane.f32.xlu0 %v3006
    %v3011 = vpop.xlane.xlu0 %3010
    %3012 = vadd.xlane.f32.xlu0 %v3007
    %v3013 = vpop.xlane.xlu0 %3012
    %3014 = vadd.xlane.f32.xlu0 %v3008
    %v3015 = vpop.xlane.xlu0 %3014
    %3016 = vadd.xlane.f32.xlu0 %v3009
    %v3017 = vpop.xlane.xlu0 %3016
    %v3018 = vmax.f32 %v3011, -5.0
    %v3019 = vmax.f32 %v3013, -5.0
    %v3020 = vmax.f32 %v3015, -5.0
    %v3021 = vmax.f32 %v3017, -5.0
    %v3022 = vmin.f32 %v3018, 5.0
    %v3023 = vmin.f32 %v3019, 5.0
    %v3024 = vmin.f32 %v3020, 5.0
    %v3025 = vmin.f32 %v3021, 5.0
    %v3026 = vadd.f32 %v3002, %v3003
    %v3027 = vadd.f32 %v3026, %v3004
    %v3028 = vadd.f32 %v3027, %v3005
    %v3029 = vrot.slane %v3028, 4
    %v3030 = vadd.f32 %v3028, %v3029
    %v3031 = vrot.slane %v3030, 2
    %v3032 = vadd.f32 %v3030, %v3031
    %v3033 = vrot.slane %v3032, 1
    %v3034 = vadd.f32 %v3032, %v3033
    %v3035 = vmul.f32 %v3034, 0.03125
    %v3036 = vadd.f32 %v3022, %v3023
    %v3037 = vadd.f32 %v3036, %v3024
    %v3038 = vadd.f32 %v3037, %v3025
    %v3039 = vrot.slane %v3038, 4
    %v3040 = vadd.f32 %v3038, %v3039
    %v3041 = vrot.slane %v3040, 2
    %v3042 = vadd.f32 %v3040, %v3041
    %v3043 = vrot.slane %v3042, 1
    %v3044 = vadd.f32 %v3042, %v3043
    %v3045 = vmul.f32 %v3044, 0.03125
    %v3046 = vadd.f32 %v2804, %v3035
    %v3047 = vadd.f32 %v2812, %v3045
    %v3048 = vsub.f32 %v3046, %v3047
    %vm3049 = vcmask 0
    %3050 = vst.msk [vmem:[#allocation15] sm:$0x1] %vm3049, %v3048
    %v3051 = vmul.f32 %v2660, %v2666
    %v3052 = vmul.f32 %v2661, %v2667
    %3053 = vadd.xlane.f32.xlu0 %v3051
    %v3054 = vpop.xlane.xlu0 %3053
    %3055 = vadd.xlane.f32.xlu0 %v3052
    %v3056 = vpop.xlane.xlu0 %3055
    %v3057 = vmul.f32 %v2660, %v2668
    %v3058 = vmul.f32 %v2661, %v2669
    %3059 = vadd.xlane.f32.xlu0 %v3057
    %v3060 = vpop.xlane.xlu0 %3059
    %3061 = vadd.xlane.f32.xlu0 %v3058
    %v3062 = vpop.xlane.xlu0 %3061
    %v3063 = vsub.f32 %v3060, %v3054
    %v3064 = vsub.f32 %v3062, %v3056
    %v3065 = vmax.f32 %v3063, 0.0
    %v3066 = vmax.f32 %v3064, 0.0
    %v3067 = vand.u32 2147483647, %v3063
    %v3068 = vand.u32 2147483647, %v3064
    %v3069 = vsub.f32 0.0, %v3067
    %v3070 = vsub.f32 0.0, %v3068
    %v3071 = vmul.f32 %v3069, 1.442695
    %v3072 = vpow.pop %v3071
    %v3073 = vmul.f32 %v3070, 1.442695
    %v3074 = vpow.pop %v3073
    %v3075 = vadd.f32 %v3072, 1.0
    %v3076 = vadd.f32 %v3074, 1.0
    %v3077 = vlog2.pop %v3075
    %v3078 = vmul.f32 %v3077, 0.6931472
    %v3079 = vlog2.pop %v3076
    %v3080 = vmul.f32 %v3079, 0.6931472
    %v3081 = vadd.f32 %v3065, %v3078
    %v3082 = vadd.f32 %v3066, %v3080
    %v3083 = vadd.f32 %v3081, %v3082
    %v3084 = vrot.slane %v3083, 4
    %v3085 = vadd.f32 %v3083, %v3084
    %v3086 = vrot.slane %v3085, 2
    %v3087 = vadd.f32 %v3085, %v3086
    %v3088 = vrot.slane %v3087, 1
    %v3089 = vadd.f32 %v3087, %v3088
    %v3090 = vmul.f32 %v3089, 0.0625
    %3091 = vst.msk [vmem:[#allocation16] sm:$0x1] %vm3049, %v3090
    // Predicated region
    $region50: #{lightgcl_forward.1} parent=1 // pred_check
      _
    $region51: #{lightgcl_forward.1} parent=1 // pred_check_branch
      %3093 = sbr.rel (0) target = $region53
    $region52: #{lightgcl_forward.1} parent=1 // pred_region
      _
    $region53: #{lightgcl_forward.1} parent=1 // pred_fallthru
      _
    // Predicated region
    $region54: #{lightgcl_forward.1} parent=1 // pred_check
      _
    $region55: #{lightgcl_forward.1} parent=1 // pred_check_branch
      %3095 = sbr.rel (0) target = $region57
    $region56: #{lightgcl_forward.1} parent=1 // pred_region
      _
    $region57: #{lightgcl_forward.1} parent=1 // pred_fallthru
      _
    // Predicated region
    $region58: #{lightgcl_forward.1} parent=1 // pred_check
      _
    $region59: #{lightgcl_forward.1} parent=1 // pred_check_branch
      %3097 = sbr.rel (0) target = $region61
    $region60: #{lightgcl_forward.1} parent=1 // pred_region
      %s3099 = ssub.s32 16, 16
      %3100 = vsyncadd [#allocation10], %s3099
      %s3102 = sshll.u32 [#allocation15], 4
      %s3103 = int_to_ptr.vmem [resolvable:$true] %s3102
      %3105 = dma.vmem_to_hbm [thread:$0]  %s3103, 16, %s11, [#allocation10]
    $region61: #{lightgcl_forward.1} parent=1 // pred_fallthru
      _
    // Predicated region
    $region62: #{lightgcl_forward.1} parent=1 // pred_check
      _
    $region63: #{lightgcl_forward.1} parent=1 // pred_check_branch
      %3107 = sbr.rel (0) target = $region65
    $region64: #{lightgcl_forward.1} parent=1 // pred_region
      %s3109 = ssub.s32 16, 16
      %3110 = vsyncadd [#allocation17], %s3109
      %s3112 = sshll.u32 [#allocation16], 4
      %s3113 = int_to_ptr.vmem [resolvable:$true] %s3112
      %3115 = dma.vmem_to_hbm [thread:$0]  %s3113, 16, %s12, [#allocation17]
    $region65: #{lightgcl_forward.1} parent=1 // pred_fallthru
      _
    // Predicated region
    $region66: #{lightgcl_forward.1} parent=1 // pred_check
      _
    $region67: #{lightgcl_forward.1} parent=1 // pred_check_branch
      %3117 = sbr.rel (0) target = $region69
    $region68: #{lightgcl_forward.1} parent=1 // pred_region
      _
    $region69: #{lightgcl_forward.1} parent=1 // pred_fallthru
      _
    // Predicated region
    $region70: #{lightgcl_forward.1} parent=1 // pred_check
      _
    $region71: #{lightgcl_forward.1} parent=1 // pred_check_branch
      %3119 = sbr.rel (0) target = $region73
    $region72: #{lightgcl_forward.1} parent=1 // pred_region
      _
    $region73: #{lightgcl_forward.1} parent=1 // pred_fallthru
      _
    // Predicated region
    $region74: #{lightgcl_forward.1} parent=1 // pred_check
      _
    $region75: #{lightgcl_forward.1} parent=1 // pred_check_branch
      %3121 = sbr.rel (0) target = $region77
    $region76: #{lightgcl_forward.1} parent=1 // pred_region
      %3122 = dma.done [#allocation10], 16
    $region77: #{lightgcl_forward.1} parent=1 // pred_fallthru
      _
    // Predicated region
    $region78: #{lightgcl_forward.1} parent=1 // pred_check
      _
    $region79: #{lightgcl_forward.1} parent=1 // pred_check_branch
      %3124 = sbr.rel (0) target = $region81
    $region80: #{lightgcl_forward.1} parent=1 // pred_region
      %3125 = dma.done [#allocation17], 16
    $region81: #{lightgcl_forward.1} parent=1 // pred_fallthru
      _
    %3126 = vsyncpa [#allocation9], 1
    %3127 = vsyncpa [#allocation10], 1
    %3128 = vsyncpa [#allocation17], 1
    %3129 = vsyncpa [#allocation11], 1
    %3130 = vsyncpa [#allocation13], 1

</llo_original>
